<compile_context>
chip_gen: v7x
topology: tpu7x:2x2x1
jax: 0.10.0
libtpu: 0.0.40
codegen_flags: <defaults>
</compile_context>

<pallas_src>
import functools

import jax
import jax.numpy as jnp
import numpy as np
from jax import lax
from jax.experimental import pallas as pl
from jax.experimental.pallas import tpu as pltpu


# ConvTranspose2d(k=4, s=2, p=1), decomposed by output parity along each
# spatial axis:  out[2m + p] = sum_{(k, s) in _TAPS[p]} x_padded[m + s] @ W[k]
# where x_padded is the stage-1 output zero-padded by 1.  Entries: (tap, offset).
_TAPS = {0: ((1, 1), (3, 0)),
         1: ((0, 2), (2, 1))}


# ------------------------------ fused kernel --------------------------------

def _decoder_block_kernel(*refs, has_skip, in_dtype):
    """1x1 conv+BN+ReLU -> deconv(k4,s2,p1)+BN+ReLU -> 1x1 conv+BN+ReLU (+skip).
    All intermediates stay in VMEM; output is parity-separated NHWC."""
    if has_skip:
        (x_ref, xt_ref, xb_ref, skip_ref, w1_ref, w2_ref, w3_ref,
         s1_ref, b1_ref, s2_ref, b2_ref, s3_ref, b3_ref,
         o_ref, y1p_ref) = refs
    else:
        (x_ref, xt_ref, xb_ref, w1_ref, w2_ref, w3_ref,
         s1_ref, b1_ref, s2_ref, b2_ref, s3_ref, b3_ref,
         o_ref, y1p_ref) = refs
        skip_ref = None

    t = pl.program_id(1)
    nt = pl.num_programs(1)
    _, th, w, cin = x_ref.shape
    cmid = w1_ref.shape[1]
    cout = w3_ref.shape[1]
    m = th * w

    def stage1(x2d):  # (rows, Cin) -> (rows, Cmid), f32 epilogue
        y = jnp.dot(x2d.astype(in_dtype), w1_ref[...],
                    preferred_element_type=jnp.float32)
        return jnp.maximum(y * s1_ref[...] + b1_ref[...], 0.0)

    # Clear the padded stage-1 scratch: provides the deconv zero padding
    # (left/right columns and, at the image borders, the top/bottom halo rows).
    y1p_ref[...] = jnp.zeros_like(y1p_ref)

    # stage 1 for this tile's own rows
    y1p_ref[1:th + 1, 1:w + 1, :] = stage1(
        x_ref[0].reshape(m, cin)).reshape(th, w, cmid)

    # stage 1 for the 1-row halos (recomputed from x; skipped at image borders)
    @pl.when(t > 0)
    def _():
        y1p_ref[0:1, 1:w + 1, :] = stage1(
            xt_ref[0].reshape(w, cin)).reshape(1, w, cmid)

    @pl.when(t < nt - 1)
    def _():
        y1p_ref[th + 1:th + 2, 1:w + 1, :] = stage1(
            xb_ref[0].reshape(w, cin)).reshape(1, w, cmid)

    # deconv (one K-concatenated matmul per output parity) + BN + ReLU,
    # then stage-3 1x1 conv + BN + ReLU (+ skip), stored parity-separated.
    for py in (0, 1):
        for px in (0, 1):
            lhs = jnp.concatenate(
                [y1p_ref[sy:sy + th, sx:sx + w, :].reshape(m, cmid)
                 for _, sy in _TAPS[py] for _, sx in _TAPS[px]],
                axis=1)                                          # (M, 4*Cmid)
            z = jnp.dot(lhs.astype(in_dtype), w2_ref[py, px],
                        preferred_element_type=jnp.float32)
            y2 = jnp.maximum(z * s2_ref[...] + b2_ref[...], 0.0)
            y3 = jnp.dot(y2.astype(in_dtype), w3_ref[...],
                         preferred_element_type=jnp.float32)
            y3 = jnp.maximum(y3 * s3_ref[...] + b3_ref[...], 0.0)
            y3 = y3.reshape(th, w, cout)
            if has_skip:
                y3 = y3 + skip_ref[0, 2 * py + px]
            o_ref[0, 2 * py + px] = y3


# ------------------------------ wrapper glue ---------------------------------

def _fold_bn(gamma, beta, mean, var, eps=1e-5):
    scale = gamma / jnp.sqrt(var + eps)
    bias = beta - mean * scale
    return scale[None, :].astype(jnp.float32), bias[None, :].astype(jnp.float32)


def _tile_bytes(th, w, cin, cmid, cout):
    """Rough per-grid-step VMEM working set (double-buffered I/O + scratch)."""
    x_t = (th + 2) * w * cin * 4              # tile rows + 2 halo rows
    skip_t = 4 * th * w * cout * 4
    out_t = 4 * th * w * cout * 4
    scratch = (th + 2) * (w + 2) * cmid * 4
    tmp = th * w * 4 * cmid * 4               # K-concatenated LHS value
    return 2 * (x_t + skip_t + out_t) + scratch + tmp


def _choose_row_tile(h, w, cin, cmid, cout, budget=10 * 1024 * 1024):
    """Largest divisor of H whose per-tile working set fits the VMEM budget."""
    best = 1
    for th in range(1, h + 1):
        if h % th == 0 and _tile_bytes(th, w, cin, cmid, cout) <= budget:
            best = th
    return best


def _const_index(nd, *_):
    return (0,) * nd


def decoder_block_forward(x_nchw, skip_nchw, p, *, use_bf16=False, row_tile=None):
    """DecoderBlock forward.  x: (N, Cin, H, W); skip: (N, Cout, 2H, 2W) or None.
    Returns (N, Cout, 2H, 2W)."""
    n, cin, h, w = x_nchw.shape
    cmid = cin // 4
    cout = p["w3"].shape[1]
    in_dtype = jnp.bfloat16 if use_bf16 else jnp.float32

    # Boundary layout glue (required by the PyTorch NCHW contract):
    # x -> NHWC; skip -> parity-separated NHWC (N, 4, H, W, Cout).
    x = jnp.transpose(x_nchw, (0, 2, 3, 1)).astype(jnp.float32)

    s1, b1 = _fold_bn(p["g1"], p["b1"], p["m1"], p["v1"])
    s2, b2 = _fold_bn(p["g2"], p["b2"], p["m2"], p["v2"])
    s3, b3 = _fold_bn(p["g3"], p["b3"], p["m3"], p["v3"])
    w1 = p["w1"].astype(in_dtype)
    w3 = p["w3"].astype(in_dtype)
    wt = p["wt"]                                                  # (Cmid, Cmid, 4, 4)
    # K-concatenated deconv taps: one (4*Cmid, Cmid) matrix per output parity.
    w2cat = jnp.stack([
        jnp.concatenate([wt[:, :, ky, kx]
                         for ky, _ in _TAPS[py] for kx, _ in _TAPS[px]], axis=0)
        for py in (0, 1) for px in (0, 1)], axis=0)
    w2cat = w2cat.reshape(2, 2, 4 * cmid, cmid).astype(in_dtype)

    th = row_tile if row_tile is not None else _choose_row_tile(h, w, cin, cmid, cout)
    assert h % th == 0, "row_tile must divide H"
    nt = h // th
    grid = (n, nt)

    in_specs = [
        pl.BlockSpec((1, th, w, cin), lambda bi, ti: (bi, ti, 0, 0)),
        pl.BlockSpec((1, 1, w, cin),
                     lambda bi, ti: (bi, jnp.maximum(ti * th - 1, 0), 0, 0)),
        pl.BlockSpec((1, 1, w, cin),
                     lambda bi, ti: (bi, jnp.minimum(ti * th + th, h - 1), 0, 0)),
    ]
    operands = [x, x, x]

    has_skip = skip_nchw is not None
    if has_skip:
        skip_par = jnp.transpose(
            skip_nchw.astype(jnp.float32).reshape(n, cout, h, 2, w, 2),
            (0, 3, 5, 2, 4, 1)).reshape(n, 4, h, w, cout)
        in_specs.append(pl.BlockSpec((1, 4, th, w, cout),
                                     lambda bi, ti: (bi, 0, ti, 0, 0)))
        operands.append(skip_par)

    # Weights / folded-BN affines: resident in VMEM (constant index maps).
    for arr in (w1, w2cat, w3, s1, b1, s2, b2, s3, b3):
        in_specs.append(pl.BlockSpec(arr.shape,
                                     functools.partial(_const_index, arr.ndim)))
        operands.append(arr)

    est = _tile_bytes(th, w, cin, cmid, cout)
    vmem_limit = 64 * 1024 * 1024 if est > 12 * 1024 * 1024 else None

    kernel = functools.partial(_decoder_block_kernel,
                               has_skip=has_skip, in_dtype=in_dtype)

    out_par = pl.pallas_call(
        kernel,
        out_shape=jax.ShapeDtypeStruct((n, 4, h, w, cout), jnp.float32),
        grid=grid,
        in_specs=in_specs,
        out_specs=pl.BlockSpec((1, 4, th, w, cout),
                               lambda bi, ti: (bi, 0, ti, 0, 0)),
        scratch_shapes=[pltpu.VMEM((th + 2, w + 2, cmid), jnp.float32)],
        compiler_params=pltpu.CompilerParams(
            dimension_semantics=("parallel", "parallel"),
            vmem_limit_bytes=vmem_limit),
    )(*operands)

    # Parity interleave is folded into the single NCHW boundary transpose.
    out = jnp.transpose(out_par.reshape(n, 2, 2, h, w, cout),
                        (0, 5, 3, 1, 4, 2)).reshape(n, cout, 2 * h, 2 * w)
    return out


# ------------------------- pure-JAX reference (check) ------------------------

def decoder_block_reference(x_nchw, skip_nchw, p, eps=1e-5):
    def bn(y, g, b, mu, var):
        s = g / jnp.sqrt(var + eps)
        return y * s[None, :, None, None] + (b - mu * s)[None, :, None, None]

    y = jnp.einsum("nchw,cd->ndhw", x_nchw, p["w1"])
    y = jax.nn.relu(bn(y, p["g1"], p["b1"], p["m1"], p["v1"]))

    # ConvTranspose2d == conv with input dilation 2, padding k-1-p=2, flipped kernel.
    wconv = jnp.transpose(jnp.flip(p["wt"], axis=(2, 3)), (1, 0, 2, 3))
    y = lax.conv_general_dilated(y, wconv, window_strides=(1, 1),
                                 padding=((2, 2), (2, 2)), lhs_dilation=(2, 2),
                                 dimension_numbers=("NCHW", "OIHW", "NCHW"))
    y = jax.nn.relu(bn(y, p["g2"], p["b2"], p["m2"], p["v2"]))

    y = jnp.einsum("nchw,cd->ndhw", y, p["w3"])
    y = jax.nn.relu(bn(y, p["g3"], p["b3"], p["m3"], p["v3"]))
    if skip_nchw is not None:
        y = y + skip_nchw
    return y


# --------------------------------- params ------------------------------------

def init_params(key, in_ch, out_ch):
    cmid = in_ch // 4
    ks = jax.random.split(key, 16)
    p = {
        "w1": 0.1 * jax.random.normal(ks[0], (in_ch, cmid), jnp.float32),
        "wt": 0.1 * jax.random.normal(ks[1], (cmid, cmid, 4, 4), jnp.float32),
        "w3": 0.1 * jax.random.normal(ks[2], (cmid, out_ch), jnp.float32),
    }
    for i, c, k0 in ((1, cmid, 3), (2, cmid, 7), (3, out_ch, 11)):
        p[f"g{i}"] = 1.0 + 0.1 * jax.random.normal(ks[k0], (c,), jnp.float32)
        p[f"b{i}"] = 0.1 * jax.random.normal(ks[k0 + 1], (c,), jnp.float32)
        p[f"m{i}"] = 0.1 * jax.random.normal(ks[k0 + 2], (c,), jnp.float32)
        p[f"v{i}"] = jax.random.uniform(ks[k0 + 3], (c,), jnp.float32, 0.5, 1.5)
    return p


# ----------------------------------- main -------------------------------------

if __name__ == "__main__":
    N, IN_CH, OUT_CH, H, W = 2, 32, 16, 8, 8

    key = jax.random.PRNGKey(0)
    kx, ks, kp = jax.random.split(key, 3)
    x = jax.random.normal(kx, (N, IN_CH, H, W), jnp.float32)            # NCHW
    skip = jax.random.normal(ks, (N, OUT_CH, 2 * H, 2 * W), jnp.float32)
    params = init_params(kp, IN_CH, OUT_CH)

    ref = jax.block_until_ready(decoder_block_reference(x, skip, params))

    # default tiling (single row tile at this size)
    out = jax.block_until_ready(decoder_block_forward(x, skip, params))
    assert out.shape == (N, OUT_CH, 2 * H, 2 * W), out.shape
    np.testing.assert_allclose(np.asarray(out), np.asarray(ref), rtol=2e-3, atol=2e-3)

    # forced multi-tile grid: exercises the halo (row-tiled) path of the kernel
    out_tiled = jax.block_until_ready(
        decoder_block_forward(x, skip, params, row_tile=4))
    np.testing.assert_allclose(np.asarray(out_tiled), np.asarray(ref),
                               rtol=2e-3, atol=2e-3)

    # skip=None path
    out_noskip = jax.block_until_ready(decoder_block_forward(x, None, params))
    ref_noskip = jax.block_until_ready(decoder_block_reference(x, None, params))
    np.testing.assert_allclose(np.asarray(out_noskip), np.asarray(ref_noskip),
                               rtol=2e-3, atol=2e-3)

    print("KERNEL_OK")
</pallas_src>

<mosaic_0001>
module attributes {stable_mosaic.version = 11 : i64} {
  func.func @_decoder_block_kernel(%arg0: i32, %arg1: i32, %arg2: memref<1x8x8x32xf32, #tpu.memory_space<vmem>>, %arg3: memref<1x1x8x32xf32, #tpu.memory_space<vmem>>, %arg4: memref<1x1x8x32xf32, #tpu.memory_space<vmem>>, %arg5: memref<1x4x8x8x16xf32, #tpu.memory_space<vmem>>, %arg6: memref<32x8xf32, #tpu.memory_space<vmem>>, %arg7: memref<2x2x32x8xf32, #tpu.memory_space<vmem>>, %arg8: memref<8x16xf32, #tpu.memory_space<vmem>>, %arg9: memref<1x8xf32, #tpu.memory_space<vmem>>, %arg10: memref<1x8xf32, #tpu.memory_space<vmem>>, %arg11: memref<1x8xf32, #tpu.memory_space<vmem>>, %arg12: memref<1x8xf32, #tpu.memory_space<vmem>>, %arg13: memref<1x16xf32, #tpu.memory_space<vmem>>, %arg14: memref<1x16xf32, #tpu.memory_space<vmem>>, %arg15: memref<1x4x8x8x16xf32, #tpu.memory_space<vmem>>, %arg16: memref<10x10x8xf32, #tpu.memory_space<vmem>>) attributes {dimension_semantics = [#tpu.dimension_semantics<parallel>, #tpu.dimension_semantics<parallel>], iteration_bounds = array<i64: 2, 1>, scalar_prefetch = 0 : i64, scratch_operands = 1 : i64, tpu.core_type = #tpu.core_type<tc>, window_params = [{transform_indices = @transform_0, window_bounds = array<i64: 1, 8, 8, 32>}, {transform_indices = @transform_1, window_bounds = array<i64: 1, 1, 8, 32>}, {transform_indices = @transform_2, window_bounds = array<i64: 1, 1, 8, 32>}, {transform_indices = @transform_3, window_bounds = array<i64: 1, 4, 8, 8, 16>}, {pipeline_mode = #tpu.pipeline_mode<synchronous>, transform_indices = @transform_4, window_bounds = array<i64: 32, 8>}, {pipeline_mode = #tpu.pipeline_mode<synchronous>, transform_indices = @transform_5, window_bounds = array<i64: 2, 2, 32, 8>}, {pipeline_mode = #tpu.pipeline_mode<synchronous>, transform_indices = @transform_6, window_bounds = array<i64: 8, 16>}, {pipeline_mode = #tpu.pipeline_mode<synchronous>, transform_indices = @transform_7, window_bounds = array<i64: 1, 8>}, {pipeline_mode = #tpu.pipeline_mode<synchronous>, transform_indices = @transform_8, window_bounds = array<i64: 1, 8>}, {pipeline_mode = #tpu.pipeline_mode<synchronous>, transform_indices = @transform_9, window_bounds = array<i64: 1, 8>}, {pipeline_mode = #tpu.pipeline_mode<synchronous>, transform_indices = @transform_10, window_bounds = array<i64: 1, 8>}, {pipeline_mode = #tpu.pipeline_mode<synchronous>, transform_indices = @transform_11, window_bounds = array<i64: 1, 16>}, {pipeline_mode = #tpu.pipeline_mode<synchronous>, transform_indices = @transform_12, window_bounds = array<i64: 1, 16>}, {transform_indices = @transform_13, window_bounds = array<i64: 1, 4, 8, 8, 16>}]} {
    %cst = arith.constant 0.000000e+00 : f32
    %0 = vector.broadcast %cst : f32 to vector<10x10x8xf32>
    %c0 = arith.constant 0 : index
    %c0_0 = arith.constant 0 : index
    %c0_1 = arith.constant 0 : index
    %1 = vector.load %arg16[%c0, %c0_0, %c0_1] : memref<10x10x8xf32, #tpu.memory_space<vmem>>, vector<10x10x8xf32>
    tpu.vector_store %arg16[%c0, %c0_0, %c0_1], %0 {strides = array<i32>} : memref<10x10x8xf32, #tpu.memory_space<vmem>>, vector<10x10x8xf32>,
    %c0_2 = arith.constant 0 : index
    %c0_3 = arith.constant 0 : index
    %c0_4 = arith.constant 0 : index
    %c0_5 = arith.constant 0 : index
    %2 = vector.load %arg2[%c0_2, %c0_3, %c0_4, %c0_5] : memref<1x8x8x32xf32, #tpu.memory_space<vmem>>, vector<1x8x8x32xf32>
    %3 = vector.shape_cast %2 : vector<1x8x8x32xf32> to vector<8x8x32xf32>
    %4 = vector.shape_cast %3 : vector<8x8x32xf32> to vector<64x32xf32>
    %c0_6 = arith.constant 0 : index
    %c0_7 = arith.constant 0 : index
    %5 = vector.load %arg6[%c0_6, %c0_7] : memref<32x8xf32, #tpu.memory_space<vmem>>, vector<32x8xf32>
    %cst_8 = arith.constant dense<0.000000e+00> : vector<64x8xf32>
    %6 = tpu.matmul %4, %5, %cst_8 {dimension_numbers = #tpu.dot_dimension_numbers<[1], [0], [0], [1], [0, 0, 1, 1], [], []>} : vector<64x32xf32>, vector<32x8xf32>, vector<64x8xf32> -> vector<64x8xf32>
    %c0_9 = arith.constant 0 : index
    %c0_10 = arith.constant 0 : index
    %7 = vector.load %arg9[%c0_9, %c0_10] : memref<1x8xf32, #tpu.memory_space<vmem>>, vector<1x8xf32>
    %8 = vector.broadcast %7 : vector<1x8xf32> to vector<64x8xf32>
    %9 = arith.mulf %6, %8 : vector<64x8xf32>
    %c0_11 = arith.constant 0 : index
    %c0_12 = arith.constant 0 : index
    %10 = vector.load %arg10[%c0_11, %c0_12] : memref<1x8xf32, #tpu.memory_space<vmem>>, vector<1x8xf32>
    %11 = vector.broadcast %10 : vector<1x8xf32> to vector<64x8xf32>
    %12 = arith.addf %9, %11 : vector<64x8xf32>
    %cst_13 = arith.constant 0.000000e+00 : f32
    %13 = vector.broadcast %cst_13 : f32 to vector<64x8xf32>
    %14 = arith.maximumf %12, %13 : vector<64x8xf32>
    %15 = vector.shape_cast %14 : vector<64x8xf32> to vector<8x8x8xf32>
    %c1 = arith.constant 1 : index
    %c1_14 = arith.constant 1 : index
    %c0_15 = arith.constant 0 : index
    %16 = vector.load %arg16[%c1, %c1_14, %c0_15] : memref<10x10x8xf32, #tpu.memory_space<vmem>>, vector<8x8x8xf32>
    tpu.vector_store %arg16[%c1, %c1_14, %c0_15], %15 {strides = array<i32>} : memref<10x10x8xf32, #tpu.memory_space<vmem>>, vector<8x8x8xf32>,
    %c0_i32 = arith.constant 0 : i32
    %17 = arith.cmpi sgt, %arg1, %c0_i32 : i32
    %18 = arith.extui %17 : i1 to i32
    %c0_i32_16 = arith.constant 0 : i32
    %19 = arith.cmpi ne, %18, %c0_i32_16 : i32
    scf.if %19 {
      %c0_177 = arith.constant 0 : index
      %c0_178 = arith.constant 0 : index
      %c0_179 = arith.constant 0 : index
      %c0_180 = arith.constant 0 : index
      %171 = vector.load %arg3[%c0_177, %c0_178, %c0_179, %c0_180] : memref<1x1x8x32xf32, #tpu.memory_space<vmem>>, vector<1x1x8x32xf32>
      %172 = vector.shape_cast %171 : vector<1x1x8x32xf32> to vector<1x8x32xf32>
      %173 = vector.shape_cast %172 : vector<1x8x32xf32> to vector<8x32xf32>
      %c0_181 = arith.constant 0 : index
      %c0_182 = arith.constant 0 : index
      %174 = vector.load %arg6[%c0_181, %c0_182] : memref<32x8xf32, #tpu.memory_space<vmem>>, vector<32x8xf32>
      %cst_183 = arith.constant dense<0.000000e+00> : vector<8x8xf32>
      %175 = tpu.matmul %173, %174, %cst_183 {dimension_numbers = #tpu.dot_dimension_numbers<[1], [0], [0], [1], [0, 0, 1, 1], [], []>} : vector<8x32xf32>, vector<32x8xf32>, vector<8x8xf32> -> vector<8x8xf32>
      %c0_184 = arith.constant 0 : index
      %c0_185 = arith.constant 0 : index
      %176 = vector.load %arg9[%c0_184, %c0_185] : memref<1x8xf32, #tpu.memory_space<vmem>>, vector<1x8xf32>
      %177 = vector.broadcast %176 : vector<1x8xf32> to vector<8x8xf32>
      %178 = arith.mulf %175, %177 : vector<8x8xf32>
      %c0_186 = arith.constant 0 : index
      %c0_187 = arith.constant 0 : index
      %179 = vector.load %arg10[%c0_186, %c0_187] : memref<1x8xf32, #tpu.memory_space<vmem>>, vector<1x8xf32>
      %180 = vector.broadcast %179 : vector<1x8xf32> to vector<8x8xf32>
      %181 = arith.addf %178, %180 : vector<8x8xf32>
      %cst_188 = arith.constant 0.000000e+00 : f32
      %182 = vector.broadcast %cst_188 : f32 to vector<8x8xf32>
      %183 = arith.maximumf %181, %182 : vector<8x8xf32>
      %184 = vector.shape_cast %183 : vector<8x8xf32> to vector<1x8x8xf32>
      %c0_189 = arith.constant 0 : index
      %c1_190 = arith.constant 1 : index
      %c0_191 = arith.constant 0 : index
      %185 = vector.load %arg16[%c0_189, %c1_190, %c0_191] : memref<10x10x8xf32, #tpu.memory_space<vmem>>, vector<1x8x8xf32>
      tpu.vector_store %arg16[%c0_189, %c1_190, %c0_191], %184 {strides = array<i32>} : memref<10x10x8xf32, #tpu.memory_space<vmem>>, vector<1x8x8xf32>,
    } else {
    }
    %c0_i32_17 = arith.constant 0 : i32
    %20 = arith.cmpi slt, %arg1, %c0_i32_17 : i32
    %21 = arith.extui %20 : i1 to i32
    %c0_i32_18 = arith.constant 0 : i32
    %22 = arith.cmpi ne, %21, %c0_i32_18 : i32
    scf.if %22 {
      %c0_177 = arith.constant 0 : index
      %c0_178 = arith.constant 0 : index
      %c0_179 = arith.constant 0 : index
      %c0_180 = arith.constant 0 : index
      %171 = vector.load %arg4[%c0_177, %c0_178, %c0_179, %c0_180] : memref<1x1x8x32xf32, #tpu.memory_space<vmem>>, vector<1x1x8x32xf32>
      %172 = vector.shape_cast %171 : vector<1x1x8x32xf32> to vector<1x8x32xf32>
      %173 = vector.shape_cast %172 : vector<1x8x32xf32> to vector<8x32xf32>
      %c0_181 = arith.constant 0 : index
      %c0_182 = arith.constant 0 : index
      %174 = vector.load %arg6[%c0_181, %c0_182] : memref<32x8xf32, #tpu.memory_space<vmem>>, vector<32x8xf32>
      %cst_183 = arith.constant dense<0.000000e+00> : vector<8x8xf32>
      %175 = tpu.matmul %173, %174, %cst_183 {dimension_numbers = #tpu.dot_dimension_numbers<[1], [0], [0], [1], [0, 0, 1, 1], [], []>} : vector<8x32xf32>, vector<32x8xf32>, vector<8x8xf32> -> vector<8x8xf32>
      %c0_184 = arith.constant 0 : index
      %c0_185 = arith.constant 0 : index
      %176 = vector.load %arg9[%c0_184, %c0_185] : memref<1x8xf32, #tpu.memory_space<vmem>>, vector<1x8xf32>
      %177 = vector.broadcast %176 : vector<1x8xf32> to vector<8x8xf32>
      %178 = arith.mulf %175, %177 : vector<8x8xf32>
      %c0_186 = arith.constant 0 : index
      %c0_187 = arith.constant 0 : index
      %179 = vector.load %arg10[%c0_186, %c0_187] : memref<1x8xf32, #tpu.memory_space<vmem>>, vector<1x8xf32>
      %180 = vector.broadcast %179 : vector<1x8xf32> to vector<8x8xf32>
      %181 = arith.addf %178, %180 : vector<8x8xf32>
      %cst_188 = arith.constant 0.000000e+00 : f32
      %182 = vector.broadcast %cst_188 : f32 to vector<8x8xf32>
      %183 = arith.maximumf %181, %182 : vector<8x8xf32>
      %184 = vector.shape_cast %183 : vector<8x8xf32> to vector<1x8x8xf32>
      %c9 = arith.constant 9 : index
      %c1_189 = arith.constant 1 : index
      %c0_190 = arith.constant 0 : index
      %185 = vector.load %arg16[%c9, %c1_189, %c0_190] : memref<10x10x8xf32, #tpu.memory_space<vmem>>, vector<1x8x8xf32>
      tpu.vector_store %arg16[%c9, %c1_189, %c0_190], %184 {strides = array<i32>} : memref<10x10x8xf32, #tpu.memory_space<vmem>>, vector<1x8x8xf32>,
    } else {
    }
    %c1_19 = arith.constant 1 : index
    %c1_20 = arith.constant 1 : index
    %c0_21 = arith.constant 0 : index
    %23 = vector.load %arg16[%c1_19, %c1_20, %c0_21] : memref<10x10x8xf32, #tpu.memory_space<vmem>>, vector<8x8x8xf32>
    %24 = vector.shape_cast %23 : vector<8x8x8xf32> to vector<64x8xf32>
    %c1_22 = arith.constant 1 : index
    %c0_23 = arith.constant 0 : index
    %c0_24 = arith.constant 0 : index
    %25 = vector.load %arg16[%c1_22, %c0_23, %c0_24] : memref<10x10x8xf32, #tpu.memory_space<vmem>>, vector<8x8x8xf32>
    %26 = vector.shape_cast %25 : vector<8x8x8xf32> to vector<64x8xf32>
    %c0_25 = arith.constant 0 : index
    %c1_26 = arith.constant 1 : index
    %c0_27 = arith.constant 0 : index
    %27 = vector.load %arg16[%c0_25, %c1_26, %c0_27] : memref<10x10x8xf32, #tpu.memory_space<vmem>>, vector<8x8x8xf32>
    %28 = vector.shape_cast %27 : vector<8x8x8xf32> to vector<64x8xf32>
    %c0_28 = arith.constant 0 : index
    %c0_29 = arith.constant 0 : index
    %c0_30 = arith.constant 0 : index
    %29 = vector.load %arg16[%c0_28, %c0_29, %c0_30] : memref<10x10x8xf32, #tpu.memory_space<vmem>>, vector<8x8x8xf32>
    %30 = vector.shape_cast %29 : vector<8x8x8xf32> to vector<64x8xf32>
    %31 = tpu.concatenate %24, %26, %28, %30 in 1 : vector<64x8xf32>, vector<64x8xf32>, vector<64x8xf32>, vector<64x8xf32> -> vector<64x32xf32>
    %c0_31 = arith.constant 0 : index
    %c0_32 = arith.constant 0 : index
    %c0_33 = arith.constant 0 : index
    %c0_34 = arith.constant 0 : index
    %32 = vector.load %arg7[%c0_31, %c0_32, %c0_33, %c0_34] : memref<2x2x32x8xf32, #tpu.memory_space<vmem>>, vector<1x1x32x8xf32>
    %33 = vector.shape_cast %32 : vector<1x1x32x8xf32> to vector<32x8xf32>
    %cst_35 = arith.constant dense<0.000000e+00> : vector<64x8xf32>
    %34 = tpu.matmul %31, %33, %cst_35 {dimension_numbers = #tpu.dot_dimension_numbers<[1], [0], [0], [1], [0, 0, 1, 1], [], []>} : vector<64x32xf32>, vector<32x8xf32>, vector<64x8xf32> -> vector<64x8xf32>
    %c0_36 = arith.constant 0 : index
    %c0_37 = arith.constant 0 : index
    %35 = vector.load %arg11[%c0_36, %c0_37] : memref<1x8xf32, #tpu.memory_space<vmem>>, vector<1x8xf32>
    %36 = vector.broadcast %35 : vector<1x8xf32> to vector<64x8xf32>
    %37 = arith.mulf %34, %36 : vector<64x8xf32>
    %c0_38 = arith.constant 0 : index
    %c0_39 = arith.constant 0 : index
    %38 = vector.load %arg12[%c0_38, %c0_39] : memref<1x8xf32, #tpu.memory_space<vmem>>, vector<1x8xf32>
    %39 = vector.broadcast %38 : vector<1x8xf32> to vector<64x8xf32>
    %40 = arith.addf %37, %39 : vector<64x8xf32>
    %cst_40 = arith.constant 0.000000e+00 : f32
    %41 = vector.broadcast %cst_40 : f32 to vector<64x8xf32>
    %42 = arith.maximumf %40, %41 : vector<64x8xf32>
    %c0_41 = arith.constant 0 : index
    %c0_42 = arith.constant 0 : index
    %43 = vector.load %arg8[%c0_41, %c0_42] : memref<8x16xf32, #tpu.memory_space<vmem>>, vector<8x16xf32>
    %cst_43 = arith.constant dense<0.000000e+00> : vector<64x16xf32>
    %44 = tpu.matmul %42, %43, %cst_43 {dimension_numbers = #tpu.dot_dimension_numbers<[1], [0], [0], [1], [0, 0, 1, 1], [], []>} : vector<64x8xf32>, vector<8x16xf32>, vector<64x16xf32> -> vector<64x16xf32>
    %c0_44 = arith.constant 0 : index
    %c0_45 = arith.constant 0 : index
    %45 = vector.load %arg13[%c0_44, %c0_45] : memref<1x16xf32, #tpu.memory_space<vmem>>, vector<1x16xf32>
    %46 = vector.broadcast %45 : vector<1x16xf32> to vector<64x16xf32>
    %47 = arith.mulf %44, %46 : vector<64x16xf32>
    %c0_46 = arith.constant 0 : index
    %c0_47 = arith.constant 0 : index
    %48 = vector.load %arg14[%c0_46, %c0_47] : memref<1x16xf32, #tpu.memory_space<vmem>>, vector<1x16xf32>
    %49 = vector.broadcast %48 : vector<1x16xf32> to vector<64x16xf32>
    %50 = arith.addf %47, %49 : vector<64x16xf32>
    %cst_48 = arith.constant 0.000000e+00 : f32
    %51 = vector.broadcast %cst_48 : f32 to vector<64x16xf32>
    %52 = arith.maximumf %50, %51 : vector<64x16xf32>
    %53 = vector.shape_cast %52 : vector<64x16xf32> to vector<8x8x16xf32>
    %c0_49 = arith.constant 0 : index
    %c0_50 = arith.constant 0 : index
    %c0_51 = arith.constant 0 : index
    %c0_52 = arith.constant 0 : index
    %c0_53 = arith.constant 0 : index
    %54 = vector.load %arg5[%c0_49, %c0_50, %c0_51, %c0_52, %c0_53] : memref<1x4x8x8x16xf32, #tpu.memory_space<vmem>>, vector<1x1x8x8x16xf32>
    %55 = vector.shape_cast %54 : vector<1x1x8x8x16xf32> to vector<8x8x16xf32>
    %56 = arith.addf %53, %55 : vector<8x8x16xf32>
    %c0_54 = arith.constant 0 : index
    %c0_55 = arith.constant 0 : index
    %c0_56 = arith.constant 0 : index
    %c0_57 = arith.constant 0 : index
    %c0_58 = arith.constant 0 : index
    %57 = vector.load %arg15[%c0_54, %c0_55, %c0_56, %c0_57, %c0_58] : memref<1x4x8x8x16xf32, #tpu.memory_space<vmem>>, vector<1x1x8x8x16xf32>
    %58 = vector.shape_cast %57 : vector<1x1x8x8x16xf32> to vector<8x8x16xf32>
    %59 = vector.shape_cast %56 : vector<8x8x16xf32> to vector<1x1x8x8x16xf32>
    tpu.vector_store %arg15[%c0_54, %c0_55, %c0_56, %c0_57, %c0_58], %59 {strides = array<i32>} : memref<1x4x8x8x16xf32, #tpu.memory_space<vmem>>, vector<1x1x8x8x16xf32>,
    %c1_59 = arith.constant 1 : index
    %c2 = arith.constant 2 : index
    %c0_60 = arith.constant 0 : index
    %60 = vector.load %arg16[%c1_59, %c2, %c0_60] : memref<10x10x8xf32, #tpu.memory_space<vmem>>, vector<8x8x8xf32>
    %61 = vector.shape_cast %60 : vector<8x8x8xf32> to vector<64x8xf32>
    %c1_61 = arith.constant 1 : index
    %c1_62 = arith.constant 1 : index
    %c0_63 = arith.constant 0 : index
    %62 = vector.load %arg16[%c1_61, %c1_62, %c0_63] : memref<10x10x8xf32, #tpu.memory_space<vmem>>, vector<8x8x8xf32>
    %63 = vector.shape_cast %62 : vector<8x8x8xf32> to vector<64x8xf32>
    %c0_64 = arith.constant 0 : index
    %c2_65 = arith.constant 2 : index
    %c0_66 = arith.constant 0 : index
    %64 = vector.load %arg16[%c0_64, %c2_65, %c0_66] : memref<10x10x8xf32, #tpu.memory_space<vmem>>, vector<8x8x8xf32>
    %65 = vector.shape_cast %64 : vector<8x8x8xf32> to vector<64x8xf32>
    %c0_67 = arith.constant 0 : index
    %c1_68 = arith.constant 1 : index
    %c0_69 = arith.constant 0 : index
    %66 = vector.load %arg16[%c0_67, %c1_68, %c0_69] : memref<10x10x8xf32, #tpu.memory_space<vmem>>, vector<8x8x8xf32>
    %67 = vector.shape_cast %66 : vector<8x8x8xf32> to vector<64x8xf32>
    %68 = tpu.concatenate %61, %63, %65, %67 in 1 : vector<64x8xf32>, vector<64x8xf32>, vector<64x8xf32>, vector<64x8xf32> -> vector<64x32xf32>
    %c0_70 = arith.constant 0 : index
    %c1_71 = arith.constant 1 : index
    %c0_72 = arith.constant 0 : index
    %c0_73 = arith.constant 0 : index
    %69 = vector.load %arg7[%c0_70, %c1_71, %c0_72, %c0_73] : memref<2x2x32x8xf32, #tpu.memory_space<vmem>>, vector<1x1x32x8xf32>
    %70 = vector.shape_cast %69 : vector<1x1x32x8xf32> to vector<32x8xf32>
    %cst_74 = arith.constant dense<0.000000e+00> : vector<64x8xf32>
    %71 = tpu.matmul %68, %70, %cst_74 {dimension_numbers = #tpu.dot_dimension_numbers<[1], [0], [0], [1], [0, 0, 1, 1], [], []>} : vector<64x32xf32>, vector<32x8xf32>, vector<64x8xf32> -> vector<64x8xf32>
    %c0_75 = arith.constant 0 : index
    %c0_76 = arith.constant 0 : index
    %72 = vector.load %arg11[%c0_75, %c0_76] : memref<1x8xf32, #tpu.memory_space<vmem>>, vector<1x8xf32>
    %73 = vector.broadcast %72 : vector<1x8xf32> to vector<64x8xf32>
    %74 = arith.mulf %71, %73 : vector<64x8xf32>
    %c0_77 = arith.constant 0 : index
    %c0_78 = arith.constant 0 : index
    %75 = vector.load %arg12[%c0_77, %c0_78] : memref<1x8xf32, #tpu.memory_space<vmem>>, vector<1x8xf32>
    %76 = vector.broadcast %75 : vector<1x8xf32> to vector<64x8xf32>
    %77 = arith.addf %74, %76 : vector<64x8xf32>
    %cst_79 = arith.constant 0.000000e+00 : f32
    %78 = vector.broadcast %cst_79 : f32 to vector<64x8xf32>
    %79 = arith.maximumf %77, %78 : vector<64x8xf32>
    %c0_80 = arith.constant 0 : index
    %c0_81 = arith.constant 0 : index
    %80 = vector.load %arg8[%c0_80, %c0_81] : memref<8x16xf32, #tpu.memory_space<vmem>>, vector<8x16xf32>
    %cst_82 = arith.constant dense<0.000000e+00> : vector<64x16xf32>
    %81 = tpu.matmul %79, %80, %cst_82 {dimension_numbers = #tpu.dot_dimension_numbers<[1], [0], [0], [1], [0, 0, 1, 1], [], []>} : vector<64x8xf32>, vector<8x16xf32>, vector<64x16xf32> -> vector<64x16xf32>
    %c0_83 = arith.constant 0 : index
    %c0_84 = arith.constant 0 : index
    %82 = vector.load %arg13[%c0_83, %c0_84] : memref<1x16xf32, #tpu.memory_space<vmem>>, vector<1x16xf32>
    %83 = vector.broadcast %82 : vector<1x16xf32> to vector<64x16xf32>
    %84 = arith.mulf %81, %83 : vector<64x16xf32>
    %c0_85 = arith.constant 0 : index
    %c0_86 = arith.constant 0 : index
    %85 = vector.load %arg14[%c0_85, %c0_86] : memref<1x16xf32, #tpu.memory_space<vmem>>, vector<1x16xf32>
    %86 = vector.broadcast %85 : vector<1x16xf32> to vector<64x16xf32>
    %87 = arith.addf %84, %86 : vector<64x16xf32>
    %cst_87 = arith.constant 0.000000e+00 : f32
    %88 = vector.broadcast %cst_87 : f32 to vector<64x16xf32>
    %89 = arith.maximumf %87, %88 : vector<64x16xf32>
    %90 = vector.shape_cast %89 : vector<64x16xf32> to vector<8x8x16xf32>
    %c0_88 = arith.constant 0 : index
    %c1_89 = arith.constant 1 : index
    %c0_90 = arith.constant 0 : index
    %c0_91 = arith.constant 0 : index
    %c0_92 = arith.constant 0 : index
    %91 = vector.load %arg5[%c0_88, %c1_89, %c0_90, %c0_91, %c0_92] : memref<1x4x8x8x16xf32, #tpu.memory_space<vmem>>, vector<1x1x8x8x16xf32>
    %92 = vector.shape_cast %91 : vector<1x1x8x8x16xf32> to vector<8x8x16xf32>
    %93 = arith.addf %90, %92 : vector<8x8x16xf32>
    %c0_93 = arith.constant 0 : index
    %c1_94 = arith.constant 1 : index
    %c0_95 = arith.constant 0 : index
    %c0_96 = arith.constant 0 : index
    %c0_97 = arith.constant 0 : index
    %94 = vector.load %arg15[%c0_93, %c1_94, %c0_95, %c0_96, %c0_97] : memref<1x4x8x8x16xf32, #tpu.memory_space<vmem>>, vector<1x1x8x8x16xf32>
    %95 = vector.shape_cast %94 : vector<1x1x8x8x16xf32> to vector<8x8x16xf32>
    %96 = vector.shape_cast %93 : vector<8x8x16xf32> to vector<1x1x8x8x16xf32>
    tpu.vector_store %arg15[%c0_93, %c1_94, %c0_95, %c0_96, %c0_97], %96 {strides = array<i32>} : memref<1x4x8x8x16xf32, #tpu.memory_space<vmem>>, vector<1x1x8x8x16xf32>,
    %c2_98 = arith.constant 2 : index
    %c1_99 = arith.constant 1 : index
    %c0_100 = arith.constant 0 : index
    %97 = vector.load %arg16[%c2_98, %c1_99, %c0_100] : memref<10x10x8xf32, #tpu.memory_space<vmem>>, vector<8x8x8xf32>
    %98 = vector.shape_cast %97 : vector<8x8x8xf32> to vector<64x8xf32>
    %c2_101 = arith.constant 2 : index
    %c0_102 = arith.constant 0 : index
    %c0_103 = arith.constant 0 : index
    %99 = vector.load %arg16[%c2_101, %c0_102, %c0_103] : memref<10x10x8xf32, #tpu.memory_space<vmem>>, vector<8x8x8xf32>
    %100 = vector.shape_cast %99 : vector<8x8x8xf32> to vector<64x8xf32>
    %c1_104 = arith.constant 1 : index
    %c1_105 = arith.constant 1 : index
    %c0_106 = arith.constant 0 : index
    %101 = vector.load %arg16[%c1_104, %c1_105, %c0_106] : memref<10x10x8xf32, #tpu.memory_space<vmem>>, vector<8x8x8xf32>
    %102 = vector.shape_cast %101 : vector<8x8x8xf32> to vector<64x8xf32>
    %c1_107 = arith.constant 1 : index
    %c0_108 = arith.constant 0 : index
    %c0_109 = arith.constant 0 : index
    %103 = vector.load %arg16[%c1_107, %c0_108, %c0_109] : memref<10x10x8xf32, #tpu.memory_space<vmem>>, vector<8x8x8xf32>
    %104 = vector.shape_cast %103 : vector<8x8x8xf32> to vector<64x8xf32>
    %105 = tpu.concatenate %98, %100, %102, %104 in 1 : vector<64x8xf32>, vector<64x8xf32>, vector<64x8xf32>, vector<64x8xf32> -> vector<64x32xf32>
    %c1_110 = arith.constant 1 : index
    %c0_111 = arith.constant 0 : index
    %c0_112 = arith.constant 0 : index
    %c0_113 = arith.constant 0 : index
    %106 = vector.load %arg7[%c1_110, %c0_111, %c0_112, %c0_113] : memref<2x2x32x8xf32, #tpu.memory_space<vmem>>, vector<1x1x32x8xf32>
    %107 = vector.shape_cast %106 : vector<1x1x32x8xf32> to vector<32x8xf32>
    %cst_114 = arith.constant dense<0.000000e+00> : vector<64x8xf32>
    %108 = tpu.matmul %105, %107, %cst_114 {dimension_numbers = #tpu.dot_dimension_numbers<[1], [0], [0], [1], [0, 0, 1, 1], [], []>} : vector<64x32xf32>, vector<32x8xf32>, vector<64x8xf32> -> vector<64x8xf32>
    %c0_115 = arith.constant 0 : index
    %c0_116 = arith.constant 0 : index
    %109 = vector.load %arg11[%c0_115, %c0_116] : memref<1x8xf32, #tpu.memory_space<vmem>>, vector<1x8xf32>
    %110 = vector.broadcast %109 : vector<1x8xf32> to vector<64x8xf32>
    %111 = arith.mulf %108, %110 : vector<64x8xf32>
    %c0_117 = arith.constant 0 : index
    %c0_118 = arith.constant 0 : index
    %112 = vector.load %arg12[%c0_117, %c0_118] : memref<1x8xf32, #tpu.memory_space<vmem>>, vector<1x8xf32>
    %113 = vector.broadcast %112 : vector<1x8xf32> to vector<64x8xf32>
    %114 = arith.addf %111, %113 : vector<64x8xf32>
    %cst_119 = arith.constant 0.000000e+00 : f32
    %115 = vector.broadcast %cst_119 : f32 to vector<64x8xf32>
    %116 = arith.maximumf %114, %115 : vector<64x8xf32>
    %c0_120 = arith.constant 0 : index
    %c0_121 = arith.constant 0 : index
    %117 = vector.load %arg8[%c0_120, %c0_121] : memref<8x16xf32, #tpu.memory_space<vmem>>, vector<8x16xf32>
    %cst_122 = arith.constant dense<0.000000e+00> : vector<64x16xf32>
    %118 = tpu.matmul %116, %117, %cst_122 {dimension_numbers = #tpu.dot_dimension_numbers<[1], [0], [0], [1], [0, 0, 1, 1], [], []>} : vector<64x8xf32>, vector<8x16xf32>, vector<64x16xf32> -> vector<64x16xf32>
    %c0_123 = arith.constant 0 : index
    %c0_124 = arith.constant 0 : index
    %119 = vector.load %arg13[%c0_123, %c0_124] : memref<1x16xf32, #tpu.memory_space<vmem>>, vector<1x16xf32>
    %120 = vector.broadcast %119 : vector<1x16xf32> to vector<64x16xf32>
    %121 = arith.mulf %118, %120 : vector<64x16xf32>
    %c0_125 = arith.constant 0 : index
    %c0_126 = arith.constant 0 : index
    %122 = vector.load %arg14[%c0_125, %c0_126] : memref<1x16xf32, #tpu.memory_space<vmem>>, vector<1x16xf32>
    %123 = vector.broadcast %122 : vector<1x16xf32> to vector<64x16xf32>
    %124 = arith.addf %121, %123 : vector<64x16xf32>
    %cst_127 = arith.constant 0.000000e+00 : f32
    %125 = vector.broadcast %cst_127 : f32 to vector<64x16xf32>
    %126 = arith.maximumf %124, %125 : vector<64x16xf32>
    %127 = vector.shape_cast %126 : vector<64x16xf32> to vector<8x8x16xf32>
    %c0_128 = arith.constant 0 : index
    %c2_129 = arith.constant 2 : index
    %c0_130 = arith.constant 0 : index
    %c0_131 = arith.constant 0 : index
    %c0_132 = arith.constant 0 : index
    %128 = vector.load %arg5[%c0_128, %c2_129, %c0_130, %c0_131, %c0_132] : memref<1x4x8x8x16xf32, #tpu.memory_space<vmem>>, vector<1x1x8x8x16xf32>
    %129 = vector.shape_cast %128 : vector<1x1x8x8x16xf32> to vector<8x8x16xf32>
    %130 = arith.addf %127, %129 : vector<8x8x16xf32>
    %c0_133 = arith.constant 0 : index
    %c2_134 = arith.constant 2 : index
    %c0_135 = arith.constant 0 : index
    %c0_136 = arith.constant 0 : index
    %c0_137 = arith.constant 0 : index
    %131 = vector.load %arg15[%c0_133, %c2_134, %c0_135, %c0_136, %c0_137] : memref<1x4x8x8x16xf32, #tpu.memory_space<vmem>>, vector<1x1x8x8x16xf32>
    %132 = vector.shape_cast %131 : vector<1x1x8x8x16xf32> to vector<8x8x16xf32>
    %133 = vector.shape_cast %130 : vector<8x8x16xf32> to vector<1x1x8x8x16xf32>
    tpu.vector_store %arg15[%c0_133, %c2_134, %c0_135, %c0_136, %c0_137], %133 {strides = array<i32>} : memref<1x4x8x8x16xf32, #tpu.memory_space<vmem>>, vector<1x1x8x8x16xf32>,
    %c2_138 = arith.constant 2 : index
    %c2_139 = arith.constant 2 : index
    %c0_140 = arith.constant 0 : index
    %134 = vector.load %arg16[%c2_138, %c2_139, %c0_140] : memref<10x10x8xf32, #tpu.memory_space<vmem>>, vector<8x8x8xf32>
    %135 = vector.shape_cast %134 : vector<8x8x8xf32> to vector<64x8xf32>
    %c2_141 = arith.constant 2 : index
    %c1_142 = arith.constant 1 : index
    %c0_143 = arith.constant 0 : index
    %136 = vector.load %arg16[%c2_141, %c1_142, %c0_143] : memref<10x10x8xf32, #tpu.memory_space<vmem>>, vector<8x8x8xf32>
    %137 = vector.shape_cast %136 : vector<8x8x8xf32> to vector<64x8xf32>
    %c1_144 = arith.constant 1 : index
    %c2_145 = arith.constant 2 : index
    %c0_146 = arith.constant 0 : index
    %138 = vector.load %arg16[%c1_144, %c2_145, %c0_146] : memref<10x10x8xf32, #tpu.memory_space<vmem>>, vector<8x8x8xf32>
    %139 = vector.shape_cast %138 : vector<8x8x8xf32> to vector<64x8xf32>
    %c1_147 = arith.constant 1 : index
    %c1_148 = arith.constant 1 : index
    %c0_149 = arith.constant 0 : index
    %140 = vector.load %arg16[%c1_147, %c1_148, %c0_149] : memref<10x10x8xf32, #tpu.memory_space<vmem>>, vector<8x8x8xf32>
    %141 = vector.shape_cast %140 : vector<8x8x8xf32> to vector<64x8xf32>
    %142 = tpu.concatenate %135, %137, %139, %141 in 1 : vector<64x8xf32>, vector<64x8xf32>, vector<64x8xf32>, vector<64x8xf32> -> vector<64x32xf32>
    %c1_150 = arith.constant 1 : index
    %c1_151 = arith.constant 1 : index
    %c0_152 = arith.constant 0 : index
    %c0_153 = arith.constant 0 : index
    %143 = vector.load %arg7[%c1_150, %c1_151, %c0_152, %c0_153] : memref<2x2x32x8xf32, #tpu.memory_space<vmem>>, vector<1x1x32x8xf32>
    %144 = vector.shape_cast %143 : vector<1x1x32x8xf32> to vector<32x8xf32>
    %cst_154 = arith.constant dense<0.000000e+00> : vector<64x8xf32>
    %145 = tpu.matmul %142, %144, %cst_154 {dimension_numbers = #tpu.dot_dimension_numbers<[1], [0], [0], [1], [0, 0, 1, 1], [], []>} : vector<64x32xf32>, vector<32x8xf32>, vector<64x8xf32> -> vector<64x8xf32>
    %c0_155 = arith.constant 0 : index
    %c0_156 = arith.constant 0 : index
    %146 = vector.load %arg11[%c0_155, %c0_156] : memref<1x8xf32, #tpu.memory_space<vmem>>, vector<1x8xf32>
    %147 = vector.broadcast %146 : vector<1x8xf32> to vector<64x8xf32>
    %148 = arith.mulf %145, %147 : vector<64x8xf32>
    %c0_157 = arith.constant 0 : index
    %c0_158 = arith.constant 0 : index
    %149 = vector.load %arg12[%c0_157, %c0_158] : memref<1x8xf32, #tpu.memory_space<vmem>>, vector<1x8xf32>
    %150 = vector.broadcast %149 : vector<1x8xf32> to vector<64x8xf32>
    %151 = arith.addf %148, %150 : vector<64x8xf32>
    %cst_159 = arith.constant 0.000000e+00 : f32
    %152 = vector.broadcast %cst_159 : f32 to vector<64x8xf32>
    %153 = arith.maximumf %151, %152 : vector<64x8xf32>
    %c0_160 = arith.constant 0 : index
    %c0_161 = arith.constant 0 : index
    %154 = vector.load %arg8[%c0_160, %c0_161] : memref<8x16xf32, #tpu.memory_space<vmem>>, vector<8x16xf32>
    %cst_162 = arith.constant dense<0.000000e+00> : vector<64x16xf32>
    %155 = tpu.matmul %153, %154, %cst_162 {dimension_numbers = #tpu.dot_dimension_numbers<[1], [0], [0], [1], [0, 0, 1, 1], [], []>} : vector<64x8xf32>, vector<8x16xf32>, vector<64x16xf32> -> vector<64x16xf32>
    %c0_163 = arith.constant 0 : index
    %c0_164 = arith.constant 0 : index
    %156 = vector.load %arg13[%c0_163, %c0_164] : memref<1x16xf32, #tpu.memory_space<vmem>>, vector<1x16xf32>
    %157 = vector.broadcast %156 : vector<1x16xf32> to vector<64x16xf32>
    %158 = arith.mulf %155, %157 : vector<64x16xf32>
    %c0_165 = arith.constant 0 : index
    %c0_166 = arith.constant 0 : index
    %159 = vector.load %arg14[%c0_165, %c0_166] : memref<1x16xf32, #tpu.memory_space<vmem>>, vector<1x16xf32>
    %160 = vector.broadcast %159 : vector<1x16xf32> to vector<64x16xf32>
    %161 = arith.addf %158, %160 : vector<64x16xf32>
    %cst_167 = arith.constant 0.000000e+00 : f32
    %162 = vector.broadcast %cst_167 : f32 to vector<64x16xf32>
    %163 = arith.maximumf %161, %162 : vector<64x16xf32>
    %164 = vector.shape_cast %163 : vector<64x16xf32> to vector<8x8x16xf32>
    %c0_168 = arith.constant 0 : index
    %c3 = arith.constant 3 : index
    %c0_169 = arith.constant 0 : index
    %c0_170 = arith.constant 0 : index
    %c0_171 = arith.constant 0 : index
    %165 = vector.load %arg5[%c0_168, %c3, %c0_169, %c0_170, %c0_171] : memref<1x4x8x8x16xf32, #tpu.memory_space<vmem>>, vector<1x1x8x8x16xf32>
    %166 = vector.shape_cast %165 : vector<1x1x8x8x16xf32> to vector<8x8x16xf32>
    %167 = arith.addf %164, %166 : vector<8x8x16xf32>
    %c0_172 = arith.constant 0 : index
    %c3_173 = arith.constant 3 : index
    %c0_174 = arith.constant 0 : index
    %c0_175 = arith.constant 0 : index
    %c0_176 = arith.constant 0 : index
    %168 = vector.load %arg15[%c0_172, %c3_173, %c0_174, %c0_175, %c0_176] : memref<1x4x8x8x16xf32, #tpu.memory_space<vmem>>, vector<1x1x8x8x16xf32>
    %169 = vector.shape_cast %168 : vector<1x1x8x8x16xf32> to vector<8x8x16xf32>
    %170 = vector.shape_cast %167 : vector<8x8x16xf32> to vector<1x1x8x8x16xf32>
    tpu.vector_store %arg15[%c0_172, %c3_173, %c0_174, %c0_175, %c0_176], %170 {strides = array<i32>} : memref<1x4x8x8x16xf32, #tpu.memory_space<vmem>>, vector<1x1x8x8x16xf32>,
    return
  }
  func.func @transform_0(%arg0: i32, %arg1: i32) -> (i32, i32, i32, i32) {
    %c0_i32 = arith.constant 0 : i32
    %c0_i32_0 = arith.constant 0 : i32
    %c0_i32_1 = arith.constant 0 : i32
    return %arg0, %arg1, %c0_i32, %c0_i32_0 : i32, i32, i32, i32
  }
  func.func @transform_1(%arg0: i32, %arg1: i32) -> (i32, i32, i32, i32) {
    %c8_i32 = arith.constant 8 : i32
    %0 = arith.muli %arg1, %c8_i32 : i32
    %c1_i32 = arith.constant 1 : i32
    %1 = arith.subi %0, %c1_i32 : i32
    %c0_i32 = arith.constant 0 : i32
    %2 = arith.maxsi %1, %c0_i32 : i32
    %c0_i32_0 = arith.constant 0 : i32
    %c0_i32_1 = arith.constant 0 : i32
    %c0_i32_2 = arith.constant 0 : i32
    return %arg0, %2, %c0_i32_0, %c0_i32_1 : i32, i32, i32, i32
  }
  func.func @transform_2(%arg0: i32, %arg1: i32) -> (i32, i32, i32, i32) {
    %c8_i32 = arith.constant 8 : i32
    %0 = arith.muli %arg1, %c8_i32 : i32
    %c8_i32_0 = arith.constant 8 : i32
    %1 = arith.addi %0, %c8_i32_0 : i32
    %c7_i32 = arith.constant 7 : i32
    %2 = arith.minsi %1, %c7_i32 : i32
    %c0_i32 = arith.constant 0 : i32
    %c0_i32_1 = arith.constant 0 : i32
    %c0_i32_2 = arith.constant 0 : i32
    return %arg0, %2, %c0_i32, %c0_i32_1 : i32, i32, i32, i32
  }
  func.func @transform_3(%arg0: i32, %arg1: i32) -> (i32, i32, i32, i32, i32) {
    %c0_i32 = arith.constant 0 : i32
    %c0_i32_0 = arith.constant 0 : i32
    %c0_i32_1 = arith.constant 0 : i32
    %c0_i32_2 = arith.constant 0 : i32
    return %arg0, %c0_i32, %arg1, %c0_i32_0, %c0_i32_1 : i32, i32, i32, i32, i32
  }
  func.func @transform_4(%arg0: i32, %arg1: i32) -> (i32, i32) {
    %c0_i32 = arith.constant 0 : i32
    %c0_i32_0 = arith.constant 0 : i32
    %c0_i32_1 = arith.constant 0 : i32
    return %c0_i32, %c0_i32_0 : i32, i32
  }
  func.func @transform_5(%arg0: i32, %arg1: i32) -> (i32, i32, i32, i32) {
    %c0_i32 = arith.constant 0 : i32
    %c0_i32_0 = arith.constant 0 : i32
    %c0_i32_1 = arith.constant 0 : i32
    %c0_i32_2 = arith.constant 0 : i32
    %c0_i32_3 = arith.constant 0 : i32
    return %c0_i32, %c0_i32_0, %c0_i32_1, %c0_i32_2 : i32, i32, i32, i32
  }
  func.func @transform_6(%arg0: i32, %arg1: i32) -> (i32, i32) {
    %c0_i32 = arith.constant 0 : i32
    %c0_i32_0 = arith.constant 0 : i32
    %c0_i32_1 = arith.constant 0 : i32
    return %c0_i32, %c0_i32_0 : i32, i32
  }
  func.func @transform_7(%arg0: i32, %arg1: i32) -> (i32, i32) {
    %c0_i32 = arith.constant 0 : i32
    %c0_i32_0 = arith.constant 0 : i32
    %c0_i32_1 = arith.constant 0 : i32
    return %c0_i32, %c0_i32_0 : i32, i32
  }
  func.func @transform_8(%arg0: i32, %arg1: i32) -> (i32, i32) {
    %c0_i32 = arith.constant 0 : i32
    %c0_i32_0 = arith.constant 0 : i32
    %c0_i32_1 = arith.constant 0 : i32
    return %c0_i32, %c0_i32_0 : i32, i32
  }
  func.func @transform_9(%arg0: i32, %arg1: i32) -> (i32, i32) {
    %c0_i32 = arith.constant 0 : i32
    %c0_i32_0 = arith.constant 0 : i32
    %c0_i32_1 = arith.constant 0 : i32
    return %c0_i32, %c0_i32_0 : i32, i32
  }
  func.func @transform_10(%arg0: i32, %arg1: i32) -> (i32, i32) {
    %c0_i32 = arith.constant 0 : i32
    %c0_i32_0 = arith.constant 0 : i32
    %c0_i32_1 = arith.constant 0 : i32
    return %c0_i32, %c0_i32_0 : i32, i32
  }
  func.func @transform_11(%arg0: i32, %arg1: i32) -> (i32, i32) {
    %c0_i32 = arith.constant 0 : i32
    %c0_i32_0 = arith.constant 0 : i32
    %c0_i32_1 = arith.constant 0 : i32
    return %c0_i32, %c0_i32_0 : i32, i32
  }
  func.func @transform_12(%arg0: i32, %arg1: i32) -> (i32, i32) {
    %c0_i32 = arith.constant 0 : i32
    %c0_i32_0 = arith.constant 0 : i32
    %c0_i32_1 = arith.constant 0 : i32
    return %c0_i32, %c0_i32_0 : i32, i32
  }
  func.func @transform_13(%arg0: i32, %arg1: i32) -> (i32, i32, i32, i32, i32) {
    %c0_i32 = arith.constant 0 : i32
    %c0_i32_0 = arith.constant 0 : i32
    %c0_i32_1 = arith.constant 0 : i32
    %c0_i32_2 = arith.constant 0 : i32
    return %arg0, %c0_i32, %arg1, %c0_i32_0, %c0_i32_1 : i32, i32, i32, i32, i32
  }
}

</mosaic_0001>

<llo_original>
// kernel: tpu_custom_call.1
$region0: #{tpu_custom_call.1}
  #allocation0 [shape = 'u32[]', space=smem, size = 0x4, offset = 0x4, fixed_abs, tag = 'smem constant byte address 0x4 - core index']
  #allocation1 [shape = 'u32[144,128]{1,0:T(1,128)}', space=vmem, size = 0x12000, scoped, tag = 'internal scratch']
  #allocation2 [shape = 'f32[10,10,8]{2,1,0:T(8,128)}', space=vmem, size = 0x14000, scoped, tag = 'scratch operand']
  %s0 = inlined_call_operand.vmem [shape: f32[2,8,8,32], index: 0, kind: input, shape index: {}]
  %s1 = inlined_call_operand.hbm [shape: f32[2,8,8,32], index: 1, kind: input, shape index: {}]
  %s2 = inlined_call_operand.hbm [shape: f32[2,8,8,32], index: 2, kind: input, shape index: {}]
  %s3 = inlined_call_operand.hbm [shape: f32[2,4,8,8,16], index: 3, kind: input, shape index: {}]
  %s4 = inlined_call_operand.vmem [shape: f32[32,8], index: 4, kind: input, shape index: {}]
  %s5 = inlined_call_operand.vmem [shape: f32[2,2,32,8], index: 5, kind: input, shape index: {}]
  %s6 = inlined_call_operand.vmem [shape: f32[8,16], index: 6, kind: input, shape index: {}]
  %s7 = inlined_call_operand.vmem [shape: f32[1,8], index: 7, kind: input, shape index: {}]
  %s8 = inlined_call_operand.vmem [shape: f32[1,8], index: 8, kind: input, shape index: {}]
  %s9 = inlined_call_operand.vmem [shape: f32[1,8], index: 9, kind: input, shape index: {}]
  %s10 = inlined_call_operand.vmem [shape: f32[1,8], index: 10, kind: input, shape index: {}]
  %s11 = inlined_call_operand.vmem [shape: f32[1,16], index: 11, kind: input, shape index: {}]
  %s12 = inlined_call_operand.vmem [shape: f32[1,16], index: 12, kind: input, shape index: {}]
  %s13 = inlined_call_operand.hbm [shape: f32[2,4,8,8,16], index: 13, kind: output, shape index: {}]
  %s14 = sld [smem:[#allocation0]]
  $region105: #{tpu_custom_call.1} parent=0
    _
  %s16 = ssub.s32 1, %s14
  %s17 = scalar_select 0, %s16, %s14
  $region1: #{tpu_custom_call.1} parent=0
    #allocation3 [shape = 'u8[8192]{0}', space=vmem, size = 0x2000, scoped, tag = 'input window, operand 1']
    #allocation4 [shape = 's32[2]{0}', space=sflag, size = 0x8, scoped, tag = 'scoped memory for tpu_custom_call.1']
    #allocation5 [shape = 's32[2]{0}', space=sflag, size = 0x8, scoped, tag = 'scoped memory for tpu_custom_call.1']
    #allocation6 [shape = 'u8[8192]{0}', space=vmem, size = 0x2000, scoped, tag = 'input window, operand 2']
    #allocation7 [shape = 's32[2]{0}', space=sflag, size = 0x8, scoped, tag = 'scoped memory for tpu_custom_call.1']
    #allocation8 [shape = 'u8[262144]{0}', space=vmem, size = 0x40000, scoped, tag = 'input window, operand 3']
    #allocation9 [shape = 'u8[262144]{0}', space=vmem, size = 0x40000, scoped, tag = 'output window, operand 0']
    %18 = vsyncpa [#allocation4], 0
    %s19 = scalar_lea.sflag [#allocation4], 1
    %20 = vsyncpa %s19, 0
    %21 = vsyncpa [#allocation7], 0
    %s22 = scalar_lea.sflag [#allocation7], 1
    %23 = vsyncpa %s22, 0
    %24 = vsyncpa [#allocation5], 0
    %s25 = scalar_lea.sflag [#allocation5], 1
    %26 = vsyncpa %s25, 0
    loop: start=0, step=1, limit=4
    $region2: #{tpu_custom_call.1} parent=1 // loop_pre_header
      _
    $region3: #{tpu_custom_call.1} parent=1 // loop_header
      %s28 = sphi 0, %s32
      %p29 = scmp.ge.s32.totalorder %s28, 4
      %s35 = sphi 0, %s47
      %s36 = sphi 0, %s43
      %s37 = sphi 0, %s35
      %s38 = sphi 0, %s36
      %s39 = sphi 0, %s37
      %s40 = sphi 0, %s38
      %s52 = sphi 0, %s54
      %s55 = sphi 0, %s52
      %s56 = sphi 0, %s55
      %s72 = sphi 0, %s56
      %s88 = sphi 0, %s90
      %s91 = sphi 0, %s88
      %s92 = sphi 0, %s91
      %s108 = sphi 0, %s92
      %s124 = sphi 0, %s126
      %s127 = sphi 0, %s124
      %s128 = sphi 0, %s127
      %s144 = sphi 0, %s128
      %s152 = sphi 0, %s154
      %s155 = sphi 0, %s152
      %s156 = sphi 0, %s155
      %s172 = sphi 0, %s156
      %s176 = sphi 0, %s176
      %s178 = sphi 0, %s176
      %s179 = sphi 0, %s178
      %s193 = sphi 0, %s179
      %s197 = sphi 0, %s197
      %s199 = sphi 0, %s197
      %s200 = sphi 0, %s199
      %s214 = sphi 0, %s200
      %s218 = sphi 0, %s218
      %s220 = sphi 0, %s218
      %s221 = sphi 0, %s220
      %s235 = sphi 0, %s221
      %s239 = sphi 0, %s239
      %s241 = sphi 0, %s239
      %s242 = sphi 0, %s241
      %s256 = sphi 0, %s242
      %s260 = sphi 0, %s260
      %s262 = sphi 0, %s260
      %s263 = sphi 0, %s262
      %s277 = sphi 0, %s263
      %s281 = sphi 0, %s281
      %s283 = sphi 0, %s281
      %s284 = sphi 0, %s283
      %s298 = sphi 0, %s284
      %s302 = sphi 0, %s302
      %s304 = sphi 0, %s302
      %s305 = sphi 0, %s304
      %s319 = sphi 0, %s305
      %s323 = sphi 0, %s323
      %s325 = sphi 0, %s323
      %s326 = sphi 0, %s325
      %s340 = sphi 0, %s326
      %s344 = sphi 0, %s344
      %s346 = sphi 0, %s344
      %s347 = sphi 0, %s346
      %s361 = sphi 0, %s347
      %s369 = sphi 0, %s371
      %s372 = sphi 0, %s369
      %s373 = sphi 0, %s372
      %s389 = sphi 0, %s373
    $region4: #{tpu_custom_call.1} parent=1 // loop_header_branch
      %31 = sbr.rel (%p29) target = $region8
    $region5: #{tpu_custom_call.1} parent=1 // loop_body
      %s33 = ssub.s32 %s28, 1
      %s34 = ssub.s32 %s28, 2
      %s41 = sadd.s32 1, %s36
      %p42 = scmp.ge.s32.totalorder %s41, 1
      %s43 = scalar_select %p42, 0, %s41
      %s44 = sadd.s32 1, %s35
      %s45 = scalar_select %p42, %s44, %s35
      %p46 = scmp.ge.s32.totalorder %s45, 2
      %s47 = scalar_select %p46, 0, %s45
      %s48 = ssub.s32 %s35, %s47
      %s49 = ssub.s32 %s36, %s43
      %s50 = sor.u32 %s48, %s49
      %p51 = scmp.eq.s32.totalorder %s50, 0
      %s53 = sadd.s32 %s52, 1
      %s54 = scalar_select %p51, %s52, %s53
      %p57 = pneg %p51
      %p58 = scmp.eq.s32.totalorder %s28, 1
      %p59 = por %p57, %p58
      %p60 = scmp.ne.s32.totalorder %s52, %s55
      %p61 = scmp.eq.s32.totalorder %s28, 0
      %p62 = por %p60, %p61
      %p63 = scmp.ne.s32.totalorder %s52, %s55
      %p64 = scmp.eq.s32.totalorder %s33, 1
      %p65 = por %p63, %p64
      %p66 = scmp.ne.s32.totalorder %s55, %s56
      %p67 = scmp.eq.s32.totalorder %s33, 0
      %p68 = por %p66, %p67
      %p69 = scmp.ne.s32.totalorder %s55, %s56
      %p70 = scmp.eq.s32.totalorder %s34, 1
      %p71 = por %p69, %p70
      %p73 = scmp.ne.s32.totalorder %s56, %s72
      %p74 = scmp.eq.s32.totalorder %s34, 0
      %p75 = por %p73, %p74
      %s76 = smul.u32 %s36, 8
      %s77 = ssub.s32 %s76, 1
      %p78 = scmp.gt.s32.totalorder %s77, 0
      %s79 = scalar_select %p78, %s77, 0
      %s80 = smul.u32 %s43, 8
      %s81 = ssub.s32 %s80, 1
      %p82 = scmp.gt.s32.totalorder %s81, 0
      %s83 = scalar_select %p82, %s81, 0
      %s84 = ssub.s32 %s35, %s47
      %s85 = ssub.s32 %s79, %s83
      %s86 = sor.u32 %s84, %s85
      %p87 = scmp.eq.s32.totalorder %s86, 0
      %s89 = sadd.s32 %s88, 1
      %s90 = scalar_select %p87, %s88, %s89
      %p93 = pneg %p87
      %p94 = scmp.eq.s32.totalorder %s28, 1
      %p95 = por %p93, %p94
      %p96 = scmp.ne.s32.totalorder %s88, %s91
      %p97 = scmp.eq.s32.totalorder %s28, 0
      %p98 = por %p96, %p97
      %p99 = scmp.ne.s32.totalorder %s88, %s91
      %p100 = scmp.eq.s32.totalorder %s33, 1
      %p101 = por %p99, %p100
      %p102 = scmp.ne.s32.totalorder %s91, %s92
      %p103 = scmp.eq.s32.totalorder %s33, 0
      %p104 = por %p102, %p103
      %p105 = scmp.ne.s32.totalorder %s91, %s92
      %p106 = scmp.eq.s32.totalorder %s34, 1
      %p107 = por %p105, %p106
      %p109 = scmp.ne.s32.totalorder %s92, %s108
      %p110 = scmp.eq.s32.totalorder %s34, 0
      %p111 = por %p109, %p110
      %s112 = smul.u32 %s36, 8
      %s113 = sadd.s32 %s112, 8
      %p114 = scmp.lt.s32.totalorder %s113, 7
      %s115 = scalar_select %p114, %s113, 7
      %s116 = smul.u32 %s43, 8
      %s117 = sadd.s32 %s116, 8
      %p118 = scmp.lt.s32.totalorder %s117, 7
      %s119 = scalar_select %p118, %s117, 7
      %s120 = ssub.s32 %s35, %s47
      %s121 = ssub.s32 %s115, %s119
      %s122 = sor.u32 %s120, %s121
      %p123 = scmp.eq.s32.totalorder %s122, 0
      %s125 = sadd.s32 %s124, 1
      %s126 = scalar_select %p123, %s124, %s125
      %p129 = pneg %p123
      %p130 = scmp.eq.s32.totalorder %s28, 1
      %p131 = por %p129, %p130
      %p132 = scmp.ne.s32.totalorder %s124, %s127
      %p133 = scmp.eq.s32.totalorder %s28, 0
      %p134 = por %p132, %p133
      %p135 = scmp.ne.s32.totalorder %s124, %s127
      %p136 = scmp.eq.s32.totalorder %s33, 1
      %p137 = por %p135, %p136
      %p138 = scmp.ne.s32.totalorder %s127, %s128
      %p139 = scmp.eq.s32.totalorder %s33, 0
      %p140 = por %p138, %p139
      %p141 = scmp.ne.s32.totalorder %s127, %s128
      %p142 = scmp.eq.s32.totalorder %s34, 1
      %p143 = por %p141, %p142
      %p145 = scmp.ne.s32.totalorder %s128, %s144
      %p146 = scmp.eq.s32.totalorder %s34, 0
      %p147 = por %p145, %p146
      %s148 = ssub.s32 %s35, %s47
      %s149 = ssub.s32 %s36, %s43
      %s150 = sor.u32 %s148, %s149
      %p151 = scmp.eq.s32.totalorder %s150, 0
      %s153 = sadd.s32 %s152, 1
      %s154 = scalar_select %p151, %s152, %s153
      %p157 = pneg %p151
      %p158 = scmp.eq.s32.totalorder %s28, 1
      %p159 = por %p157, %p158
      %p160 = scmp.ne.s32.totalorder %s152, %s155
      %p161 = scmp.eq.s32.totalorder %s28, 0
      %p162 = por %p160, %p161
      %p163 = scmp.ne.s32.totalorder %s152, %s155
      %p164 = scmp.eq.s32.totalorder %s33, 1
      %p165 = por %p163, %p164
      %p166 = scmp.ne.s32.totalorder %s155, %s156
      %p167 = scmp.eq.s32.totalorder %s33, 0
      %p168 = por %p166, %p167
      %p169 = scmp.ne.s32.totalorder %s155, %s156
      %p170 = scmp.eq.s32.totalorder %s34, 1
      %p171 = por %p169, %p170
      %p173 = scmp.ne.s32.totalorder %s156, %s172
      %p174 = scmp.eq.s32.totalorder %s34, 0
      %p175 = por %p173, %p174
      %s177 = sadd.s32 %s176, 1
      %p180 = scmp.eq.s32.totalorder %s28, 1
      %p181 = scmp.ne.s32.totalorder %s176, %s178
      %p182 = scmp.eq.s32.totalorder %s28, 0
      %p183 = por %p181, %p182
      %p184 = scmp.ne.s32.totalorder %s176, %s178
      %p185 = scmp.eq.s32.totalorder %s33, 1
      %p186 = por %p184, %p185
      %p187 = scmp.ne.s32.totalorder %s178, %s179
      %p188 = scmp.eq.s32.totalorder %s33, 0
      %p189 = por %p187, %p188
      %p190 = scmp.ne.s32.totalorder %s178, %s179
      %p191 = scmp.eq.s32.totalorder %s34, 1
      %p192 = por %p190, %p191
      %p194 = scmp.ne.s32.totalorder %s179, %s193
      %p195 = scmp.eq.s32.totalorder %s34, 0
      %p196 = por %p194, %p195
      %s198 = sadd.s32 %s197, 1
      %p201 = scmp.eq.s32.totalorder %s28, 1
      %p202 = scmp.ne.s32.totalorder %s197, %s199
      %p203 = scmp.eq.s32.totalorder %s28, 0
      %p204 = por %p202, %p203
      %p205 = scmp.ne.s32.totalorder %s197, %s199
      %p206 = scmp.eq.s32.totalorder %s33, 1
      %p207 = por %p205, %p206
      %p208 = scmp.ne.s32.totalorder %s199, %s200
      %p209 = scmp.eq.s32.totalorder %s33, 0
      %p210 = por %p208, %p209
      %p211 = scmp.ne.s32.totalorder %s199, %s200
      %p212 = scmp.eq.s32.totalorder %s34, 1
      %p213 = por %p211, %p212
      %p215 = scmp.ne.s32.totalorder %s200, %s214
      %p216 = scmp.eq.s32.totalorder %s34, 0
      %p217 = por %p215, %p216
      %s219 = sadd.s32 %s218, 1
      %p222 = scmp.eq.s32.totalorder %s28, 1
      %p223 = scmp.ne.s32.totalorder %s218, %s220
      %p224 = scmp.eq.s32.totalorder %s28, 0
      %p225 = por %p223, %p224
      %p226 = scmp.ne.s32.totalorder %s218, %s220
      %p227 = scmp.eq.s32.totalorder %s33, 1
      %p228 = por %p226, %p227
      %p229 = scmp.ne.s32.totalorder %s220, %s221
      %p230 = scmp.eq.s32.totalorder %s33, 0
      %p231 = por %p229, %p230
      %p232 = scmp.ne.s32.totalorder %s220, %s221
      %p233 = scmp.eq.s32.totalorder %s34, 1
      %p234 = por %p232, %p233
      %p236 = scmp.ne.s32.totalorder %s221, %s235
      %p237 = scmp.eq.s32.totalorder %s34, 0
      %p238 = por %p236, %p237
      %s240 = sadd.s32 %s239, 1
      %p243 = scmp.eq.s32.totalorder %s28, 1
      %p244 = scmp.ne.s32.totalorder %s239, %s241
      %p245 = scmp.eq.s32.totalorder %s28, 0
      %p246 = por %p244, %p245
      %p247 = scmp.ne.s32.totalorder %s239, %s241
      %p248 = scmp.eq.s32.totalorder %s33, 1
      %p249 = por %p247, %p248
      %p250 = scmp.ne.s32.totalorder %s241, %s242
      %p251 = scmp.eq.s32.totalorder %s33, 0
      %p252 = por %p250, %p251
      %p253 = scmp.ne.s32.totalorder %s241, %s242
      %p254 = scmp.eq.s32.totalorder %s34, 1
      %p255 = por %p253, %p254
      %p257 = scmp.ne.s32.totalorder %s242, %s256
      %p258 = scmp.eq.s32.totalorder %s34, 0
      %p259 = por %p257, %p258
      %s261 = sadd.s32 %s260, 1
      %p264 = scmp.eq.s32.totalorder %s28, 1
      %p265 = scmp.ne.s32.totalorder %s260, %s262
      %p266 = scmp.eq.s32.totalorder %s28, 0
      %p267 = por %p265, %p266
      %p268 = scmp.ne.s32.totalorder %s260, %s262
      %p269 = scmp.eq.s32.totalorder %s33, 1
      %p270 = por %p268, %p269
      %p271 = scmp.ne.s32.totalorder %s262, %s263
      %p272 = scmp.eq.s32.totalorder %s33, 0
      %p273 = por %p271, %p272
      %p274 = scmp.ne.s32.totalorder %s262, %s263
      %p275 = scmp.eq.s32.totalorder %s34, 1
      %p276 = por %p274, %p275
      %p278 = scmp.ne.s32.totalorder %s263, %s277
      %p279 = scmp.eq.s32.totalorder %s34, 0
      %p280 = por %p278, %p279
      %s282 = sadd.s32 %s281, 1
      %p285 = scmp.eq.s32.totalorder %s28, 1
      %p286 = scmp.ne.s32.totalorder %s281, %s283
      %p287 = scmp.eq.s32.totalorder %s28, 0
      %p288 = por %p286, %p287
      %p289 = scmp.ne.s32.totalorder %s281, %s283
      %p290 = scmp.eq.s32.totalorder %s33, 1
      %p291 = por %p289, %p290
      %p292 = scmp.ne.s32.totalorder %s283, %s284
      %p293 = scmp.eq.s32.totalorder %s33, 0
      %p294 = por %p292, %p293
      %p295 = scmp.ne.s32.totalorder %s283, %s284
      %p296 = scmp.eq.s32.totalorder %s34, 1
      %p297 = por %p295, %p296
      %p299 = scmp.ne.s32.totalorder %s284, %s298
      %p300 = scmp.eq.s32.totalorder %s34, 0
      %p301 = por %p299, %p300
      %s303 = sadd.s32 %s302, 1
      %p306 = scmp.eq.s32.totalorder %s28, 1
      %p307 = scmp.ne.s32.totalorder %s302, %s304
      %p308 = scmp.eq.s32.totalorder %s28, 0
      %p309 = por %p307, %p308
      %p310 = scmp.ne.s32.totalorder %s302, %s304
      %p311 = scmp.eq.s32.totalorder %s33, 1
      %p312 = por %p310, %p311
      %p313 = scmp.ne.s32.totalorder %s304, %s305
      %p314 = scmp.eq.s32.totalorder %s33, 0
      %p315 = por %p313, %p314
      %p316 = scmp.ne.s32.totalorder %s304, %s305
      %p317 = scmp.eq.s32.totalorder %s34, 1
      %p318 = por %p316, %p317
      %p320 = scmp.ne.s32.totalorder %s305, %s319
      %p321 = scmp.eq.s32.totalorder %s34, 0
      %p322 = por %p320, %p321
      %s324 = sadd.s32 %s323, 1
      %p327 = scmp.eq.s32.totalorder %s28, 1
      %p328 = scmp.ne.s32.totalorder %s323, %s325
      %p329 = scmp.eq.s32.totalorder %s28, 0
      %p330 = por %p328, %p329
      %p331 = scmp.ne.s32.totalorder %s323, %s325
      %p332 = scmp.eq.s32.totalorder %s33, 1
      %p333 = por %p331, %p332
      %p334 = scmp.ne.s32.totalorder %s325, %s326
      %p335 = scmp.eq.s32.totalorder %s33, 0
      %p336 = por %p334, %p335
      %p337 = scmp.ne.s32.totalorder %s325, %s326
      %p338 = scmp.eq.s32.totalorder %s34, 1
      %p339 = por %p337, %p338
      %p341 = scmp.ne.s32.totalorder %s326, %s340
      %p342 = scmp.eq.s32.totalorder %s34, 0
      %p343 = por %p341, %p342
      %s345 = sadd.s32 %s344, 1
      %p348 = scmp.eq.s32.totalorder %s28, 1
      %p349 = scmp.ne.s32.totalorder %s344, %s346
      %p350 = scmp.eq.s32.totalorder %s28, 0
      %p351 = por %p349, %p350
      %p352 = scmp.ne.s32.totalorder %s344, %s346
      %p353 = scmp.eq.s32.totalorder %s33, 1
      %p354 = por %p352, %p353
      %p355 = scmp.ne.s32.totalorder %s346, %s347
      %p356 = scmp.eq.s32.totalorder %s33, 0
      %p357 = por %p355, %p356
      %p358 = scmp.ne.s32.totalorder %s346, %s347
      %p359 = scmp.eq.s32.totalorder %s34, 1
      %p360 = por %p358, %p359
      %p362 = scmp.ne.s32.totalorder %s347, %s361
      %p363 = scmp.eq.s32.totalorder %s34, 0
      %p364 = por %p362, %p363
      %s365 = ssub.s32 %s35, %s47
      %s366 = ssub.s32 %s36, %s43
      %s367 = sor.u32 %s365, %s366
      %p368 = scmp.eq.s32.totalorder %s367, 0
      %s370 = sadd.s32 %s369, 1
      %s371 = scalar_select %p368, %s369, %s370
      %p374 = pneg %p368
      %p375 = scmp.eq.s32.totalorder %s28, 1
      %p376 = por %p374, %p375
      %p377 = scmp.ne.s32.totalorder %s369, %s372
      %p378 = scmp.eq.s32.totalorder %s28, 0
      %p379 = por %p377, %p378
      %p380 = scmp.ne.s32.totalorder %s369, %s372
      %p381 = scmp.eq.s32.totalorder %s33, 1
      %p382 = por %p380, %p381
      %p383 = scmp.ne.s32.totalorder %s372, %s373
      %p384 = scmp.eq.s32.totalorder %s33, 0
      %p385 = por %p383, %p384
      %p386 = scmp.ne.s32.totalorder %s372, %s373
      %p387 = scmp.eq.s32.totalorder %s34, 1
      %p388 = por %p386, %p387
      %p390 = scmp.ne.s32.totalorder %s373, %s389
      %p391 = scmp.eq.s32.totalorder %s34, 0
      %p392 = por %p390, %p391
      %p393 = scmp.le.s32.totalorder 1, %s28
      %p394 = scmp.lt.s32.totalorder %s28, 3
      %p395 = pnand %p393, %p394
      %p396 = pneg %p395
      // Predicated region
      $region9: #{tpu_custom_call.1} parent=5 // pred_check
        _
      $region10: #{tpu_custom_call.1} parent=5 // pred_check_branch
        %398 = sbr.rel (%p395) target = $region12
      $region11: #{tpu_custom_call.1} parent=5 // pred_region
        %s399 = ssub.s32 %s28, 1
        // Predicated region
        $region13: #{tpu_custom_call.1} parent=11 // pred_check
          %p400 = pneg %p189
        $region14: #{tpu_custom_call.1} parent=11 // pred_check_branch
          %402 = sbr.rel (%p400) target = $region16
        $region15: #{tpu_custom_call.1} parent=11 // pred_region
          _
        $region16: #{tpu_custom_call.1} parent=11 // pred_fallthru
          _
        // Predicated region
        $region17: #{tpu_custom_call.1} parent=11 // pred_check
          %p403 = pneg %p210
        $region18: #{tpu_custom_call.1} parent=11 // pred_check_branch
          %405 = sbr.rel (%p403) target = $region20
        $region19: #{tpu_custom_call.1} parent=11 // pred_region
          _
        $region20: #{tpu_custom_call.1} parent=11 // pred_fallthru
          _
        // Predicated region
        $region21: #{tpu_custom_call.1} parent=11 // pred_check
          %p406 = pneg %p231
        $region22: #{tpu_custom_call.1} parent=11 // pred_check_branch
          %408 = sbr.rel (%p406) target = $region24
        $region23: #{tpu_custom_call.1} parent=11 // pred_region
          _
        $region24: #{tpu_custom_call.1} parent=11 // pred_fallthru
          _
        // Predicated region
        $region25: #{tpu_custom_call.1} parent=11 // pred_check
          %p409 = pneg %p252
        $region26: #{tpu_custom_call.1} parent=11 // pred_check_branch
          %411 = sbr.rel (%p409) target = $region28
        $region27: #{tpu_custom_call.1} parent=11 // pred_region
          _
        $region28: #{tpu_custom_call.1} parent=11 // pred_fallthru
          _
        // Predicated region
        $region29: #{tpu_custom_call.1} parent=11 // pred_check
          %p412 = pneg %p273
        $region30: #{tpu_custom_call.1} parent=11 // pred_check_branch
          %414 = sbr.rel (%p412) target = $region32
        $region31: #{tpu_custom_call.1} parent=11 // pred_region
          _
        $region32: #{tpu_custom_call.1} parent=11 // pred_fallthru
          _
        // Predicated region
        $region33: #{tpu_custom_call.1} parent=11 // pred_check
          %p415 = pneg %p294
        $region34: #{tpu_custom_call.1} parent=11 // pred_check_branch
          %417 = sbr.rel (%p415) target = $region36
        $region35: #{tpu_custom_call.1} parent=11 // pred_region
          _
        $region36: #{tpu_custom_call.1} parent=11 // pred_fallthru
          _
        // Predicated region
        $region37: #{tpu_custom_call.1} parent=11 // pred_check
          %p418 = pneg %p315
        $region38: #{tpu_custom_call.1} parent=11 // pred_check_branch
          %420 = sbr.rel (%p418) target = $region40
        $region39: #{tpu_custom_call.1} parent=11 // pred_region
          _
        $region40: #{tpu_custom_call.1} parent=11 // pred_fallthru
          _
        // Predicated region
        $region41: #{tpu_custom_call.1} parent=11 // pred_check
          %p421 = pneg %p336
        $region42: #{tpu_custom_call.1} parent=11 // pred_check_branch
          %423 = sbr.rel (%p421) target = $region44
        $region43: #{tpu_custom_call.1} parent=11 // pred_region
          _
        $region44: #{tpu_custom_call.1} parent=11 // pred_fallthru
          _
        // Predicated region
        $region45: #{tpu_custom_call.1} parent=11 // pred_check
          %p424 = pneg %p357
        $region46: #{tpu_custom_call.1} parent=11 // pred_check_branch
          %426 = sbr.rel (%p424) target = $region48
        $region47: #{tpu_custom_call.1} parent=11 // pred_region
          _
        $region48: #{tpu_custom_call.1} parent=11 // pred_fallthru
          _
      $region12: #{tpu_custom_call.1} parent=5 // pred_fallthru
        _
      %p427 = scmp.lt.s32.totalorder %s28, 2
      // Predicated region
      $region49: #{tpu_custom_call.1} parent=5 // pred_check
        %p428 = pneg %p427
      $region50: #{tpu_custom_call.1} parent=5 // pred_check_branch
        %430 = sbr.rel (%p428) target = $region52
      $region51: #{tpu_custom_call.1} parent=5 // pred_region
        // Predicated region
        $region53: #{tpu_custom_call.1} parent=51 // pred_check
          %p431 = pneg %p62
        $region54: #{tpu_custom_call.1} parent=51 // pred_check_branch
          %433 = sbr.rel (%p431) target = $region56
        $region55: #{tpu_custom_call.1} parent=51 // pred_region
          %s434 = smul.u32 8, %s36
          %p435 = scmp.lt.s32.totalorder %s35, 1
          %s436 = scalar_select %p435, %s35, 1
          %p437 = scmp.lt.s32.totalorder %s434, 7
          %s438 = scalar_select %p437, %s434, 7
          %s439 = smul.addr %s436, 8
          %s440 = sadd.s32 %s438, %s439
          %s441 = smul.addr %s440, 8
          %s442 = scalar_lea.vmem %s0, %s441
          %s443 = smul.u32 8, %s36
        $region56: #{tpu_custom_call.1} parent=51 // pred_fallthru
          _
        // Predicated region
        $region57: #{tpu_custom_call.1} parent=51 // pred_check
          %p444 = pneg %p98
        $region58: #{tpu_custom_call.1} parent=51 // pred_check_branch
          %446 = sbr.rel (%p444) target = $region60
        $region59: #{tpu_custom_call.1} parent=51 // pred_region
          %s447 = sand.u32 %s88, 1
          %s448 = scalar_lea.sflag [#allocation4], %s447
          %s449 = sand.u32 %s88, 1
          %s450 = smul.addr %s449, 8
          %s451 = scalar_lea.vmem [#allocation3], %s450
          %s452 = smul.u32 %s36, 8
          %s453 = ssub.s32 %s452, 1
          %p454 = scmp.gt.s32.totalorder %s453, 0
          %s455 = scalar_select %p454, %s453, 0
          %s457 = ssub.s32 128, 128
          %458 = vsyncadd %s448, %s457
          %s459 = smul.addr %s35, 8
          %s460 = sadd.s32 %s455, %s459
          %s461 = smul.addr %s460, 128
          %s462 = scalar_lea.hbm %s1, %s461
          %s464 = sshll.u32 %s451, 4
          %s465 = int_to_ptr.vmem [resolvable:$true] %s464
          %467 = dma.hbm_to_vmem [thread:$0]  %s462, 128, %s465, %s448
        $region60: #{tpu_custom_call.1} parent=51 // pred_fallthru
          _
        // Predicated region
        $region61: #{tpu_custom_call.1} parent=51 // pred_check
          %p468 = pneg %p134
        $region62: #{tpu_custom_call.1} parent=51 // pred_check_branch
          %470 = sbr.rel (%p468) target = $region64
        $region63: #{tpu_custom_call.1} parent=51 // pred_region
          %s471 = sand.u32 %s28, 1
          %s472 = scalar_lea.sflag [#allocation7], %s471
          %s473 = sand.u32 %s124, 1
          %s474 = smul.addr %s473, 8
          %s475 = scalar_lea.vmem [#allocation6], %s474
          %s476 = smul.u32 %s36, 8
          %s477 = sadd.s32 %s476, 8
          %p478 = scmp.lt.s32.totalorder %s477, 7
          %s479 = scalar_select %p478, %s477, 7
          %s481 = ssub.s32 128, 128
          %482 = vsyncadd %s472, %s481
          %s483 = smul.addr %s35, 8
          %s484 = sadd.s32 %s479, %s483
          %s485 = smul.addr %s484, 128
          %s486 = scalar_lea.hbm %s2, %s485
          %s488 = sshll.u32 %s475, 4
          %s489 = int_to_ptr.vmem [resolvable:$true] %s488
          %491 = dma.hbm_to_vmem [thread:$0]  %s486, 128, %s489, %s472
        $region64: #{tpu_custom_call.1} parent=51 // pred_fallthru
          _
        // Predicated region
        $region65: #{tpu_custom_call.1} parent=51 // pred_check
          %p492 = pneg %p162
        $region66: #{tpu_custom_call.1} parent=51 // pred_check_branch
          %494 = sbr.rel (%p492) target = $region68
        $region67: #{tpu_custom_call.1} parent=51 // pred_region
          %s495 = sand.u32 %s28, 1
          %s496 = scalar_lea.sflag [#allocation7], %s495
          %s497 = sand.u32 %s152, 1
          %s498 = smul.addr %s497, 256
          %s499 = scalar_lea.vmem [#allocation8], %s498
          %s500 = smul.u32 8, %s36
          %s502 = ssub.s32 4096, 4096
          %503 = vsyncadd %s496, %s502
          %s504 = smul.addr %s35, 32
          %s505 = sadd.s32 %s500, %s504
          %s506 = smul.addr %s505, 128
          %s507 = scalar_lea.hbm %s3, %s506
          %s508 = sshll.u32 %s499, 4
          %s509 = int_to_ptr.vmem [resolvable:$true] %s508
          %514 = dma.hbm_to_vmem [thread:$0]  %s507, 4096, %s509, %s496, 128, 128, 8
        $region68: #{tpu_custom_call.1} parent=51 // pred_fallthru
          _
      $region52: #{tpu_custom_call.1} parent=5 // pred_fallthru
        _
      %p515 = scmp.le.s32.totalorder 1, %s28
      %p516 = scmp.lt.s32.totalorder %s28, 3
      %p517 = pnand %p515, %p516
      %p518 = pneg %p517
      // Predicated region
      $region69: #{tpu_custom_call.1} parent=5 // pred_check
        _
      $region70: #{tpu_custom_call.1} parent=5 // pred_check_branch
        %520 = sbr.rel (%p517) target = $region72
      $region71: #{tpu_custom_call.1} parent=5 // pred_region
        %s521 = ssub.s32 %s28, 1
        %s522 = sand.u32 %s91, 1
        %s523 = scalar_lea.sflag [#allocation4], %s522
        %s524 = sand.u32 %s91, 1
        %s525 = smul.addr %s524, 8
        %s526 = scalar_lea.vmem [#allocation3], %s525
        // Predicated region
        $region73: #{tpu_custom_call.1} parent=71 // pred_check
          %p527 = pneg %p104
        $region74: #{tpu_custom_call.1} parent=71 // pred_check_branch
          %529 = sbr.rel (%p527) target = $region76
        $region75: #{tpu_custom_call.1} parent=71 // pred_region
          %530 = dma.done %s523, 128
        $region76: #{tpu_custom_call.1} parent=71 // pred_fallthru
          _
        %s531 = sand.u32 %s33, 1
        %s532 = scalar_lea.sflag [#allocation7], %s531
        %s533 = sand.u32 %s127, 1
        %s534 = smul.addr %s533, 8
        %s535 = scalar_lea.vmem [#allocation6], %s534
        // Predicated region
        $region77: #{tpu_custom_call.1} parent=71 // pred_check
          %p536 = pneg %p140
        $region78: #{tpu_custom_call.1} parent=71 // pred_check_branch
          %538 = sbr.rel (%p536) target = $region80
        $region79: #{tpu_custom_call.1} parent=71 // pred_region
          %539 = dma.done %s532, 128
        $region80: #{tpu_custom_call.1} parent=71 // pred_fallthru
          _
        %s540 = sand.u32 %s33, 1
        %s541 = scalar_lea.sflag [#allocation7], %s540
        %s542 = sand.u32 %s155, 1
        %s543 = smul.addr %s542, 256
        %s544 = scalar_lea.vmem [#allocation8], %s543
        // Predicated region
        $region81: #{tpu_custom_call.1} parent=71 // pred_check
          %p545 = pneg %p168
        $region82: #{tpu_custom_call.1} parent=71 // pred_check_branch
          %547 = sbr.rel (%p545) target = $region84
        $region83: #{tpu_custom_call.1} parent=71 // pred_region
          %548 = dma.done %s541, 4096
        $region84: #{tpu_custom_call.1} parent=71 // pred_fallthru
          _
        %s549 = smul.u32 8, %s38
        %p550 = scmp.lt.s32.totalorder %s37, 1
        %s551 = scalar_select %p550, %s37, 1
        %p552 = scmp.lt.s32.totalorder %s549, 7
        %s553 = scalar_select %p552, %s549, 7
        %s554 = smul.addr %s551, 8
        %s555 = sadd.s32 %s553, %s554
        %s556 = smul.addr %s555, 8
        %s557 = scalar_lea.vmem %s0, %s556
        %p558 = pneg %p68
        %p559 = pneg %p65
        %s560 = sand.u32 %s91, 1
        %s561 = scalar_lea.sflag [#allocation4], %s560
        %s562 = sand.u32 %s91, 1
        %s563 = smul.addr %s562, 8
        %s564 = scalar_lea.vmem [#allocation3], %s563
        %p565 = pneg %p104
        %p566 = pneg %p101
        %s567 = sand.u32 %s33, 1
        %s568 = scalar_lea.sflag [#allocation7], %s567
        %s569 = sand.u32 %s127, 1
        %s570 = smul.addr %s569, 8
        %s571 = scalar_lea.vmem [#allocation6], %s570
        %p572 = pneg %p140
        %p573 = pneg %p137
        %s574 = sand.u32 %s33, 1
        %s575 = scalar_lea.sflag [#allocation7], %s574
        %s576 = sand.u32 %s155, 1
        %s577 = smul.addr %s576, 256
        %s578 = scalar_lea.vmem [#allocation8], %s577
        %p579 = pneg %p168
        %p580 = pneg %p165
        %p581 = pneg %p189
        %p582 = pneg %p186
        %p583 = pneg %p210
        %p584 = pneg %p207
        %p585 = pneg %p231
        %p586 = pneg %p228
        %p587 = pneg %p252
        %p588 = pneg %p249
        %p589 = pneg %p273
        %p590 = pneg %p270
        %p591 = pneg %p294
        %p592 = pneg %p291
        %p593 = pneg %p315
        %p594 = pneg %p312
        %p595 = pneg %p336
        %p596 = pneg %p333
        %p597 = pneg %p357
        %p598 = pneg %p354
        %p599 = pneg %p385
        %p600 = pneg %p382
        %s601 = sand.u32 %s372, 1
        %s602 = scalar_lea.sflag [#allocation5], %s601
        %s603 = sand.u32 %s372, 1
        %s604 = smul.addr %s603, 256
        %s605 = scalar_lea.vmem [#allocation9], %s604
        %s606 = smul.u32 8, %s38
        %p607 = scmp.lt.s32.totalorder %s37, 1
        %s608 = scalar_select %p607, %s37, 1
        %p609 = scmp.lt.s32.totalorder %s606, 7
        %s610 = scalar_select %p609, %s606, 7
        %s611 = smul.addr %s608, 8
        %s612 = sadd.s32 %s610, %s611
        %s613 = smul.addr %s612, 8
        %s614 = scalar_lea.vmem %s0, %s613
        %s615 = smul.u32 8, %s38
        %s616 = smul.u32 %s38, 8
        %s617 = ssub.s32 %s616, 1
        %p618 = scmp.gt.s32.totalorder %s617, 0
        %s619 = scalar_select %p618, %s617, 0
        %s620 = smul.u32 %s38, 8
        %s621 = sadd.s32 %s620, 8
        %p622 = scmp.lt.s32.totalorder %s621, 7
        %s623 = scalar_select %p622, %s621, 7
        %s624 = smul.u32 8, %s38
        %s625 = smul.u32 8, %s38
        %vm626 = vcmask 64512
        %627 = vst.msk [vmem:[#allocation2] sm:$0xff] %vm626, 0.0
        %vm628 = vcmask 58368
        %629 = vst.msk [vmem:[#allocation2 + $0x8] sm:$0x3] %vm628, 0.0
        %630 = vst.msk [vmem:[#allocation2 + $0x10] sm:$0xff] %vm626, 0.0
        %631 = vst.msk [vmem:[#allocation2 + $0x18] sm:$0x3] %vm628, 0.0
        %632 = vst.msk [vmem:[#allocation2 + $0x20] sm:$0xff] %vm626, 0.0
        %633 = vst.msk [vmem:[#allocation2 + $0x28] sm:$0x3] %vm628, 0.0
        %634 = vst.msk [vmem:[#allocation2 + $0x30] sm:$0xff] %vm626, 0.0
        %635 = vst.msk [vmem:[#allocation2 + $0x38] sm:$0x3] %vm628, 0.0
        %636 = vst.msk [vmem:[#allocation2 + $0x40] sm:$0xff] %vm626, 0.0
        %637 = vst.msk [vmem:[#allocation2 + $0x48] sm:$0x3] %vm628, 0.0
        %638 = vst.msk [vmem:[#allocation2 + $0x50] sm:$0xff] %vm626, 0.0
        %639 = vst.msk [vmem:[#allocation2 + $0x58] sm:$0x3] %vm628, 0.0
        %640 = vst.msk [vmem:[#allocation2 + $0x60] sm:$0xff] %vm626, 0.0
        %641 = vst.msk [vmem:[#allocation2 + $0x68] sm:$0x3] %vm628, 0.0
        %642 = vst.msk [vmem:[#allocation2 + $0x70] sm:$0xff] %vm626, 0.0
        %643 = vst.msk [vmem:[#allocation2 + $0x78] sm:$0x3] %vm628, 0.0
        %644 = vst.msk [vmem:[#allocation2 + $0x80] sm:$0xff] %vm626, 0.0
        %645 = vst.msk [vmem:[#allocation2 + $0x88] sm:$0x3] %vm628, 0.0
        %646 = vst.msk [vmem:[#allocation2 + $0x90] sm:$0xff] %vm626, 0.0
        %647 = vst.msk [vmem:[#allocation2 + $0x98] sm:$0x3] %vm628, 0.0
        %v648 = vld [vmem:[%s614] sm:$0xff]
        %v649 = vld [vmem:[%s614 + $0x8] sm:$0xff]
        %v650 = vld [vmem:[%s614 + $0x10] sm:$0xff]
        %v651 = vld [vmem:[%s614 + $0x18] sm:$0xff]
        %v652 = vld [vmem:[%s614 + $0x20] sm:$0xff]
        %v653 = vld [vmem:[%s614 + $0x28] sm:$0xff]
        %v654 = vld [vmem:[%s614 + $0x30] sm:$0xff]
        %v655 = vld [vmem:[%s614 + $0x38] sm:$0xff]
        %v656 = vld [vmem:[%s4] sm:$0xff]
        %v657 = vld [vmem:[%s4 + $0x8] sm:$0xff]
        %v658 = vld [vmem:[%s4 + $0x10] sm:$0xff]
        %v659 = vld [vmem:[%s4 + $0x18] sm:$0xff]
        %vm660 = vcmask 261120
        %v662 = vsel %vm660, %v648, 0
        %v665 = vsel %vm660, %v649, 0
        %v668 = vsel %vm660, %v650, 0
        %v671 = vsel %vm660, %v651, 0
        %v674 = vsel %vm660, %v652, 0
        %v677 = vsel %vm660, %v653, 0
        %v680 = vsel %vm660, %v654, 0
        %v683 = vsel %vm660, %v655, 0
        %685 = vmatprep.subr.mxu0 0.0
        %686 = vmatpush1.msra.mxu0 %v656
        %687 = vmatprep.subr.mxu0 0.0
        %688 = vmatpush1.msra.mxu0 %v657
        %689 = vmatprep.subr.mxu0 0.0
        %690 = vmatpush1.msra.mxu0 %v658
        %691 = vmatprep.subr.mxu0 0.0
        %692 = vmatpush1.msra.mxu0 %v659
        %693 = vmatprep.subr.mxu0 0.0
        %694 = vmatpush1.msra.mxu0 0.0
        %695 = vmatprep.subr.mxu0 0.0
        %696 = vmatpush1.msra.mxu0 0.0
        %697 = vmatprep.subr.mxu0 0.0
        %698 = vmatpush1.msra.mxu0 0.0
        %699 = vmatprep.subr.mxu0 0.0
        %700 = vmatpush1.msra.mxu0 0.0
        %701 = vmatprep.subr.mxu0 0.0
        %702 = vmatpush1.msra.mxu0 0.0
        %703 = vmatprep.subr.mxu0 0.0
        %704 = vmatpush1.msra.mxu0 0.0
        %705 = vmatprep.subr.mxu0 0.0
        %706 = vmatpush1.msra.mxu0 0.0
        %707 = vmatprep.subr.mxu0 0.0
        %708 = vmatpush1.msra.mxu0 0.0
        %709 = vmatprep.subr.mxu0 0.0
        %710 = vmatpush1.msra.mxu0 0.0
        %711 = vmatprep.subr.mxu0 0.0
        %712 = vmatpush1.msra.mxu0 0.0
        %713 = vmatprep.subr.mxu0 0.0
        %714 = vmatpush1.msra.mxu0 0.0
        %715 = vmatprep.subr.mxu0 0.0
        %716 = vmatpush1.msra.mxu0 0.0
        %717 = vmatprep.subr.mxu0 0.0
        %718 = vmatpush1.msra.mxu0 0.0
        %719 = vmatprep.subr.mxu0 0.0
        %720 = vmatpush1.msra.mxu0 0.0
        %721 = vmatprep.subr.mxu0 0.0
        %722 = vmatpush1.msra.mxu0 0.0
        %723 = vmatprep.subr.mxu0 0.0
        %724 = vmatpush1.msra.mxu0 0.0
        %725 = vmatprep.subr.mxu0 0.0
        %726 = vmatpush1.msra.mxu0 0.0
        %727 = vmatprep.subr.mxu0 0.0
        %728 = vmatpush1.msra.mxu0 0.0
        %729 = vmatprep.subr.mxu0 0.0
        %730 = vmatpush1.msra.mxu0 0.0
        %731 = vmatprep.subr.mxu0 0.0
        %732 = vmatpush1.msra.mxu0 0.0
        %733 = vmatprep.subr.mxu0 0.0
        %734 = vmatpush1.msra.mxu0 0.0
        %735 = vmatprep.subr.mxu0 0.0
        %736 = vmatpush1.msra.mxu0 0.0
        %737 = vmatprep.subr.mxu0 0.0
        %738 = vmatpush1.msra.mxu0 0.0
        %739 = vmatprep.subr.mxu0 0.0
        %740 = vmatpush1.msra.mxu0 0.0
        %741 = vmatprep.subr.mxu0 0.0
        %742 = vmatpush1.msra.mxu0 0.0
        %743 = vmatprep.subr.mxu0 0.0
        %744 = vmatpush1.msra.mxu0 0.0
        %745 = vmatprep.subr.mxu0 0.0
        %746 = vmatpush1.msra.mxu0 0.0
        %747 = vmatprep.subr.mxu0 0.0
        %748 = vmatpush1.msra.mxu0 0.0
        %749 = vmatprep.mubr.f32.mxu0 0.0
        %750 = vmatmul.mubr.f32.gmra.mrb[0].mxu0 %v662
        %v751 = vpop.f32.mrb[0].mxu0
        %v752 = vadd.f32 0.0, %v751
        %v753 = vpop.f32.mrb[0].mxu0
        %754 = vmatprep.mubr.f32.mxu0 0.0
        %755 = vmatmul.mubr.f32.gmra.mrb[0].mxu0 %v665
        %v756 = vpop.f32.mrb[0].mxu0
        %v757 = vadd.f32 0.0, %v756
        %v758 = vpop.f32.mrb[0].mxu0
        %759 = vmatprep.mubr.f32.mxu0 0.0
        %760 = vmatmul.mubr.f32.gmra.mrb[0].mxu0 %v668
        %v761 = vpop.f32.mrb[0].mxu0
        %v762 = vadd.f32 0.0, %v761
        %v763 = vpop.f32.mrb[0].mxu0
        %764 = vmatprep.mubr.f32.mxu0 0.0
        %765 = vmatmul.mubr.f32.gmra.mrb[0].mxu0 %v671
        %v766 = vpop.f32.mrb[0].mxu0
        %v767 = vadd.f32 0.0, %v766
        %v768 = vpop.f32.mrb[0].mxu0
        %769 = vmatprep.mubr.f32.mxu0 0.0
        %770 = vmatmul.mubr.f32.gmra.mrb[0].mxu0 %v674
        %v771 = vpop.f32.mrb[0].mxu0
        %v772 = vadd.f32 0.0, %v771
        %v773 = vpop.f32.mrb[0].mxu0
        %774 = vmatprep.mubr.f32.mxu0 0.0
        %775 = vmatmul.mubr.f32.gmra.mrb[0].mxu0 %v677
        %v776 = vpop.f32.mrb[0].mxu0
        %v777 = vadd.f32 0.0, %v776
        %v778 = vpop.f32.mrb[0].mxu0
        %779 = vmatprep.mubr.f32.mxu0 0.0
        %780 = vmatmul.mubr.f32.gmra.mrb[0].mxu0 %v680
        %v781 = vpop.f32.mrb[0].mxu0
        %v782 = vadd.f32 0.0, %v781
        %v783 = vpop.f32.mrb[0].mxu0
        %784 = vmatprep.mubr.f32.mxu0 0.0
        %785 = vmatmul.mubr.f32.gmra.mrb[0].mxu0 %v683
        %v786 = vpop.f32.mrb[0].mxu0
        %v787 = vadd.f32 0.0, %v786
        %v788 = vpop.f32.mrb[0].mxu0
        %789 = vdwg.mxu0
        %v790 = vld [vmem:[%s7] sm:$0x1]
        %v792 = vlaneseq
        %v793 = vshrl.u32 %v792, 7
        %v794 = vsub.s32 0, %v793
        %v795 = vrot.slane %v790, %v794
        %v797 = vmul.f32 %v752, %v795
        %v798 = vmul.f32 %v757, %v795
        %v799 = vmul.f32 %v762, %v795
        %v800 = vmul.f32 %v767, %v795
        %v801 = vmul.f32 %v772, %v795
        %v802 = vmul.f32 %v777, %v795
        %v803 = vmul.f32 %v782, %v795
        %v804 = vmul.f32 %v787, %v795
        %v805 = vld [vmem:[%s8] sm:$0x1]
        %v807 = vlaneseq
        %v808 = vshrl.u32 %v807, 7
        %v809 = vsub.s32 0, %v808
        %v810 = vrot.slane %v805, %v809
        %v812 = vadd.f32 %v797, %v810
        %v813 = vadd.f32 %v798, %v810
        %v814 = vadd.f32 %v799, %v810
        %v815 = vadd.f32 %v800, %v810
        %v816 = vadd.f32 %v801, %v810
        %v817 = vadd.f32 %v802, %v810
        %v818 = vadd.f32 %v803, %v810
        %v819 = vadd.f32 %v804, %v810
        %v820 = vmax.f32 %v812, 0.0
        %v821 = vmax.f32 %v813, 0.0
        %v822 = vmax.f32 %v814, 0.0
        %v823 = vmax.f32 %v815, 0.0
        %v824 = vmax.f32 %v816, 0.0
        %v825 = vmax.f32 %v817, 0.0
        %v826 = vmax.f32 %v818, 0.0
        %v827 = vmax.f32 %v819, 0.0
        %s828 = scalar_lea.vmem [#allocation2], 16
        %829 = vst.msk [vmem:[%s828 + $0x1] sm:$0xff] %vm626, %v820
        %830 = vst.msk [vmem:[%s828 + $0x11] sm:$0xff] %vm626, %v821
        %831 = vst.msk [vmem:[%s828 + $0x21] sm:$0xff] %vm626, %v822
        %832 = vst.msk [vmem:[%s828 + $0x31] sm:$0xff] %vm626, %v823
        %833 = vst.msk [vmem:[%s828 + $0x41] sm:$0xff] %vm626, %v824
        %834 = vst.msk [vmem:[%s828 + $0x51] sm:$0xff] %vm626, %v825
        %835 = vst.msk [vmem:[%s828 + $0x61] sm:$0xff] %vm626, %v826
        %836 = vst.msk [vmem:[%s828 + $0x71] sm:$0xff] %vm626, %v827
        %p837 = scmp.gt.s32.totalorder %s38, 0
        // Predicated region
        $region85: #{tpu_custom_call.1} parent=71 // pred_check
          %p838 = pneg %p837
        $region86: #{tpu_custom_call.1} parent=71 // pred_check_branch
          %840 = sbr.rel (%p838) target = $region88
        $region87: #{tpu_custom_call.1} parent=71 // pred_region
          %v841 = vld [vmem:[%s526] sm:$0xff]
          %v842 = vld [vmem:[%s4] sm:$0xff]
          %v843 = vld [vmem:[%s4 + $0x8] sm:$0xff]
          %v844 = vld [vmem:[%s4 + $0x10] sm:$0xff]
          %v845 = vld [vmem:[%s4 + $0x18] sm:$0xff]
          %v847 = vsel %vm660, %v841, 0
          %849 = vmatprep.subr.mxu0 0.0
          %850 = vmatpush1.msra.mxu0 %v842
          %851 = vmatprep.subr.mxu0 0.0
          %852 = vmatpush1.msra.mxu0 %v843
          %853 = vmatprep.subr.mxu0 0.0
          %854 = vmatpush1.msra.mxu0 %v844
          %855 = vmatprep.subr.mxu0 0.0
          %856 = vmatpush1.msra.mxu0 %v845
          %857 = vmatprep.subr.mxu0 0.0
          %858 = vmatpush1.msra.mxu0 0.0
          %859 = vmatprep.subr.mxu0 0.0
          %860 = vmatpush1.msra.mxu0 0.0
          %861 = vmatprep.subr.mxu0 0.0
          %862 = vmatpush1.msra.mxu0 0.0
          %863 = vmatprep.subr.mxu0 0.0
          %864 = vmatpush1.msra.mxu0 0.0
          %865 = vmatprep.subr.mxu0 0.0
          %866 = vmatpush1.msra.mxu0 0.0
          %867 = vmatprep.subr.mxu0 0.0
          %868 = vmatpush1.msra.mxu0 0.0
          %869 = vmatprep.subr.mxu0 0.0
          %870 = vmatpush1.msra.mxu0 0.0
          %871 = vmatprep.subr.mxu0 0.0
          %872 = vmatpush1.msra.mxu0 0.0
          %873 = vmatprep.subr.mxu0 0.0
          %874 = vmatpush1.msra.mxu0 0.0
          %875 = vmatprep.subr.mxu0 0.0
          %876 = vmatpush1.msra.mxu0 0.0
          %877 = vmatprep.subr.mxu0 0.0
          %878 = vmatpush1.msra.mxu0 0.0
          %879 = vmatprep.subr.mxu0 0.0
          %880 = vmatpush1.msra.mxu0 0.0
          %881 = vmatprep.subr.mxu0 0.0
          %882 = vmatpush1.msra.mxu0 0.0
          %883 = vmatprep.subr.mxu0 0.0
          %884 = vmatpush1.msra.mxu0 0.0
          %885 = vmatprep.subr.mxu0 0.0
          %886 = vmatpush1.msra.mxu0 0.0
          %887 = vmatprep.subr.mxu0 0.0
          %888 = vmatpush1.msra.mxu0 0.0
          %889 = vmatprep.subr.mxu0 0.0
          %890 = vmatpush1.msra.mxu0 0.0
          %891 = vmatprep.subr.mxu0 0.0
          %892 = vmatpush1.msra.mxu0 0.0
          %893 = vmatprep.subr.mxu0 0.0
          %894 = vmatpush1.msra.mxu0 0.0
          %895 = vmatprep.subr.mxu0 0.0
          %896 = vmatpush1.msra.mxu0 0.0
          %897 = vmatprep.subr.mxu0 0.0
          %898 = vmatpush1.msra.mxu0 0.0
          %899 = vmatprep.subr.mxu0 0.0
          %900 = vmatpush1.msra.mxu0 0.0
          %901 = vmatprep.subr.mxu0 0.0
          %902 = vmatpush1.msra.mxu0 0.0
          %903 = vmatprep.subr.mxu0 0.0
          %904 = vmatpush1.msra.mxu0 0.0
          %905 = vmatprep.subr.mxu0 0.0
          %906 = vmatpush1.msra.mxu0 0.0
          %907 = vmatprep.subr.mxu0 0.0
          %908 = vmatpush1.msra.mxu0 0.0
          %909 = vmatprep.subr.mxu0 0.0
          %910 = vmatpush1.msra.mxu0 0.0
          %911 = vmatprep.subr.mxu0 0.0
          %912 = vmatpush1.msra.mxu0 0.0
          %913 = vmatprep.mubr.f32.mxu0 0.0
          %914 = vmatmul.mubr.f32.gmra.mrb[0].mxu0 %v847
          %v915 = vpop.f32.mrb[0].mxu0
          %v916 = vadd.f32 0.0, %v915
          %v917 = vpop.f32.mrb[0].mxu0
          %918 = vdwg.mxu0
          %v919 = vld [vmem:[%s7] sm:$0x1]
          %v921 = vlaneseq
          %v922 = vshrl.u32 %v921, 7
          %v923 = vsub.s32 0, %v922
          %v924 = vrot.slane %v919, %v923
          %v926 = vmul.f32 %v916, %v924
          %v927 = vld [vmem:[%s8] sm:$0x1]
          %v929 = vlaneseq
          %v930 = vshrl.u32 %v929, 7
          %v931 = vsub.s32 0, %v930
          %v932 = vrot.slane %v927, %v931
          %v934 = vadd.f32 %v926, %v932
          %v935 = vmax.f32 %v934, 0.0
          %936 = vst.msk [vmem:[#allocation2 + $0x1] sm:$0xff] %vm626, %v935
        $region88: #{tpu_custom_call.1} parent=71 // pred_fallthru
          _
        %p937 = scmp.lt.s32.totalorder %s38, 0
        // Predicated region
        $region89: #{tpu_custom_call.1} parent=71 // pred_check
          %p938 = pneg %p937
        $region90: #{tpu_custom_call.1} parent=71 // pred_check_branch
          %940 = sbr.rel (%p938) target = $region92
        $region91: #{tpu_custom_call.1} parent=71 // pred_region
          %v941 = vld [vmem:[%s535] sm:$0xff]
          %v942 = vld [vmem:[%s4] sm:$0xff]
          %v943 = vld [vmem:[%s4 + $0x8] sm:$0xff]
          %v944 = vld [vmem:[%s4 + $0x10] sm:$0xff]
          %v945 = vld [vmem:[%s4 + $0x18] sm:$0xff]
          %v947 = vsel %vm660, %v941, 0
          %949 = vmatprep.subr.mxu0 0.0
          %950 = vmatpush1.msra.mxu0 %v942
          %951 = vmatprep.subr.mxu0 0.0
          %952 = vmatpush1.msra.mxu0 %v943
          %953 = vmatprep.subr.mxu0 0.0
          %954 = vmatpush1.msra.mxu0 %v944
          %955 = vmatprep.subr.mxu0 0.0
          %956 = vmatpush1.msra.mxu0 %v945
          %957 = vmatprep.subr.mxu0 0.0
          %958 = vmatpush1.msra.mxu0 0.0
          %959 = vmatprep.subr.mxu0 0.0
          %960 = vmatpush1.msra.mxu0 0.0
          %961 = vmatprep.subr.mxu0 0.0
          %962 = vmatpush1.msra.mxu0 0.0
          %963 = vmatprep.subr.mxu0 0.0
          %964 = vmatpush1.msra.mxu0 0.0
          %965 = vmatprep.subr.mxu0 0.0
          %966 = vmatpush1.msra.mxu0 0.0
          %967 = vmatprep.subr.mxu0 0.0
          %968 = vmatpush1.msra.mxu0 0.0
          %969 = vmatprep.subr.mxu0 0.0
          %970 = vmatpush1.msra.mxu0 0.0
          %971 = vmatprep.subr.mxu0 0.0
          %972 = vmatpush1.msra.mxu0 0.0
          %973 = vmatprep.subr.mxu0 0.0
          %974 = vmatpush1.msra.mxu0 0.0
          %975 = vmatprep.subr.mxu0 0.0
          %976 = vmatpush1.msra.mxu0 0.0
          %977 = vmatprep.subr.mxu0 0.0
          %978 = vmatpush1.msra.mxu0 0.0
          %979 = vmatprep.subr.mxu0 0.0
          %980 = vmatpush1.msra.mxu0 0.0
          %981 = vmatprep.subr.mxu0 0.0
          %982 = vmatpush1.msra.mxu0 0.0
          %983 = vmatprep.subr.mxu0 0.0
          %984 = vmatpush1.msra.mxu0 0.0
          %985 = vmatprep.subr.mxu0 0.0
          %986 = vmatpush1.msra.mxu0 0.0
          %987 = vmatprep.subr.mxu0 0.0
          %988 = vmatpush1.msra.mxu0 0.0
          %989 = vmatprep.subr.mxu0 0.0
          %990 = vmatpush1.msra.mxu0 0.0
          %991 = vmatprep.subr.mxu0 0.0
          %992 = vmatpush1.msra.mxu0 0.0
          %993 = vmatprep.subr.mxu0 0.0
          %994 = vmatpush1.msra.mxu0 0.0
          %995 = vmatprep.subr.mxu0 0.0
          %996 = vmatpush1.msra.mxu0 0.0
          %997 = vmatprep.subr.mxu0 0.0
          %998 = vmatpush1.msra.mxu0 0.0
          %999 = vmatprep.subr.mxu0 0.0
          %1000 = vmatpush1.msra.mxu0 0.0
          %1001 = vmatprep.subr.mxu0 0.0
          %1002 = vmatpush1.msra.mxu0 0.0
          %1003 = vmatprep.subr.mxu0 0.0
          %1004 = vmatpush1.msra.mxu0 0.0
          %1005 = vmatprep.subr.mxu0 0.0
          %1006 = vmatpush1.msra.mxu0 0.0
          %1007 = vmatprep.subr.mxu0 0.0
          %1008 = vmatpush1.msra.mxu0 0.0
          %1009 = vmatprep.subr.mxu0 0.0
          %1010 = vmatpush1.msra.mxu0 0.0
          %1011 = vmatprep.subr.mxu0 0.0
          %1012 = vmatpush1.msra.mxu0 0.0
          %1013 = vmatprep.mubr.f32.mxu0 0.0
          %1014 = vmatmul.mubr.f32.gmra.mrb[0].mxu0 %v947
          %v1015 = vpop.f32.mrb[0].mxu0
          %v1016 = vadd.f32 0.0, %v1015
          %v1017 = vpop.f32.mrb[0].mxu0
          %1018 = vdwg.mxu0
          %v1019 = vld [vmem:[%s7] sm:$0x1]
          %v1021 = vlaneseq
          %v1022 = vshrl.u32 %v1021, 7
          %v1023 = vsub.s32 0, %v1022
          %v1024 = vrot.slane %v1019, %v1023
          %v1026 = vmul.f32 %v1016, %v1024
          %v1027 = vld [vmem:[%s8] sm:$0x1]
          %v1029 = vlaneseq
          %v1030 = vshrl.u32 %v1029, 7
          %v1031 = vsub.s32 0, %v1030
          %v1032 = vrot.slane %v1027, %v1031
          %v1034 = vadd.f32 %v1026, %v1032
          %v1035 = vmax.f32 %v1034, 0.0
          %s1036 = scalar_lea.vmem [#allocation2], 144
          %1037 = vst.msk [vmem:[%s1036 + $0x1] sm:$0xff] %vm626, %v1035
        $region92: #{tpu_custom_call.1} parent=71 // pred_fallthru
          _
        %v1038 = vld [vmem:[%s828 + $0x1] sm:$0xff]
        %v1039 = vld [vmem:[%s828 + $0x11] sm:$0xff]
        %v1040 = vld [vmem:[%s828 + $0x21] sm:$0xff]
        %v1041 = vld [vmem:[%s828 + $0x31] sm:$0xff]
        %v1042 = vld [vmem:[%s828 + $0x41] sm:$0xff]
        %v1043 = vld [vmem:[%s828 + $0x51] sm:$0xff]
        %v1044 = vld [vmem:[%s828 + $0x61] sm:$0xff]
        %v1045 = vld [vmem:[%s828 + $0x71] sm:$0xff]
        %v1046 = vld [vmem:[%s828] sm:$0xff]
        %v1047 = vld [vmem:[%s828 + $0x10] sm:$0xff]
        %v1048 = vld [vmem:[%s828 + $0x20] sm:$0xff]
        %v1049 = vld [vmem:[%s828 + $0x30] sm:$0xff]
        %v1050 = vld [vmem:[%s828 + $0x40] sm:$0xff]
        %v1051 = vld [vmem:[%s828 + $0x50] sm:$0xff]
        %v1052 = vld [vmem:[%s828 + $0x60] sm:$0xff]
        %v1053 = vld [vmem:[%s828 + $0x70] sm:$0xff]
        %v1054 = vld [vmem:[#allocation2 + $0x1] sm:$0xff]
        %v1055 = vld [vmem:[#allocation2 + $0x11] sm:$0xff]
        %v1056 = vld [vmem:[#allocation2 + $0x21] sm:$0xff]
        %v1057 = vld [vmem:[#allocation2 + $0x31] sm:$0xff]
        %v1058 = vld [vmem:[#allocation2 + $0x41] sm:$0xff]
        %v1059 = vld [vmem:[#allocation2 + $0x51] sm:$0xff]
        %v1060 = vld [vmem:[#allocation2 + $0x61] sm:$0xff]
        %v1061 = vld [vmem:[#allocation2 + $0x71] sm:$0xff]
        %v1062 = vld [vmem:[#allocation2] sm:$0xff]
        %v1063 = vld [vmem:[#allocation2 + $0x10] sm:$0xff]
        %v1064 = vld [vmem:[#allocation2 + $0x20] sm:$0xff]
        %v1065 = vld [vmem:[#allocation2 + $0x30] sm:$0xff]
        %v1066 = vld [vmem:[#allocation2 + $0x40] sm:$0xff]
        %v1067 = vld [vmem:[#allocation2 + $0x50] sm:$0xff]
        %v1068 = vld [vmem:[#allocation2 + $0x60] sm:$0xff]
        %v1069 = vld [vmem:[#allocation2 + $0x70] sm:$0xff]
        %1078 = vrot.lane.b32.xlu0 %v1046, 8
        %v1079 = vpop.permute.xlu0 %1078
        %1080 = vrot.lane.b32.xlu0 %v1047, 8
        %v1081 = vpop.permute.xlu0 %1080
        %1082 = vrot.lane.b32.xlu0 %v1048, 8
        %v1083 = vpop.permute.xlu0 %1082
        %1084 = vrot.lane.b32.xlu0 %v1049, 8
        %v1085 = vpop.permute.xlu0 %1084
        %1086 = vrot.lane.b32.xlu0 %v1050, 8
        %v1087 = vpop.permute.xlu0 %1086
        %1088 = vrot.lane.b32.xlu0 %v1051, 8
        %v1089 = vpop.permute.xlu0 %1088
        %1090 = vrot.lane.b32.xlu0 %v1052, 8
        %v1091 = vpop.permute.xlu0 %1090
        %1092 = vrot.lane.b32.xlu0 %v1053, 8
        %v1093 = vpop.permute.xlu0 %1092
        %1110 = vrot.lane.b32.xlu0 %v1054, 16
        %v1111 = vpop.permute.xlu0 %1110
        %1112 = vrot.lane.b32.xlu0 %v1055, 16
        %v1113 = vpop.permute.xlu0 %1112
        %1114 = vrot.lane.b32.xlu0 %v1056, 16
        %v1115 = vpop.permute.xlu0 %1114
        %1116 = vrot.lane.b32.xlu0 %v1057, 16
        %v1117 = vpop.permute.xlu0 %1116
        %1118 = vrot.lane.b32.xlu0 %v1058, 16
        %v1119 = vpop.permute.xlu0 %1118
        %1120 = vrot.lane.b32.xlu0 %v1059, 16
        %v1121 = vpop.permute.xlu0 %1120
        %1122 = vrot.lane.b32.xlu0 %v1060, 16
        %v1123 = vpop.permute.xlu0 %1122
        %1124 = vrot.lane.b32.xlu0 %v1061, 16
        %v1125 = vpop.permute.xlu0 %1124
        %1142 = vrot.lane.b32.xlu0 %v1062, 24
        %v1143 = vpop.permute.xlu0 %1142
        %1144 = vrot.lane.b32.xlu0 %v1063, 24
        %v1145 = vpop.permute.xlu0 %1144
        %1146 = vrot.lane.b32.xlu0 %v1064, 24
        %v1147 = vpop.permute.xlu0 %1146
        %1148 = vrot.lane.b32.xlu0 %v1065, 24
        %v1149 = vpop.permute.xlu0 %1148
        %1150 = vrot.lane.b32.xlu0 %v1066, 24
        %v1151 = vpop.permute.xlu0 %1150
        %1152 = vrot.lane.b32.xlu0 %v1067, 24
        %v1153 = vpop.permute.xlu0 %1152
        %1154 = vrot.lane.b32.xlu0 %v1068, 24
        %v1155 = vpop.permute.xlu0 %1154
        %1156 = vrot.lane.b32.xlu0 %v1069, 24
        %v1157 = vpop.permute.xlu0 %1156
        %v1166 = vsel %vm626, %v1038, %v1079
        %v1167 = vsel %vm626, %v1039, %v1081
        %v1168 = vsel %vm626, %v1040, %v1083
        %v1169 = vsel %vm626, %v1041, %v1085
        %v1170 = vsel %vm626, %v1042, %v1087
        %v1171 = vsel %vm626, %v1043, %v1089
        %v1172 = vsel %vm626, %v1044, %v1091
        %v1173 = vsel %vm626, %v1045, %v1093
        %vm1174 = vcmask 130048
        %v1175 = vsel %vm1174, %v1166, %v1111
        %v1176 = vsel %vm1174, %v1167, %v1113
        %v1177 = vsel %vm1174, %v1168, %v1115
        %v1178 = vsel %vm1174, %v1169, %v1117
        %v1179 = vsel %vm1174, %v1170, %v1119
        %v1180 = vsel %vm1174, %v1171, %v1121
        %v1181 = vsel %vm1174, %v1172, %v1123
        %v1182 = vsel %vm1174, %v1173, %v1125
        %vm1183 = vcmask 195584
        %v1184 = vsel %vm1183, %v1175, %v1143
        %v1185 = vsel %vm1183, %v1176, %v1145
        %v1186 = vsel %vm1183, %v1177, %v1147
        %v1187 = vsel %vm1183, %v1178, %v1149
        %v1188 = vsel %vm1183, %v1179, %v1151
        %v1189 = vsel %vm1183, %v1180, %v1153
        %v1190 = vsel %vm1183, %v1181, %v1155
        %v1191 = vsel %vm1183, %v1182, %v1157
        %v1192 = vld [vmem:[%s5] sm:$0xff]
        %v1193 = vld [vmem:[%s5 + $0x8] sm:$0xff]
        %v1194 = vld [vmem:[%s5 + $0x10] sm:$0xff]
        %v1195 = vld [vmem:[%s5 + $0x18] sm:$0xff]
        %v1197 = vsel %vm660, %v1184, 0
        %v1200 = vsel %vm660, %v1185, 0
        %v1203 = vsel %vm660, %v1186, 0
        %v1206 = vsel %vm660, %v1187, 0
        %v1209 = vsel %vm660, %v1188, 0
        %v1212 = vsel %vm660, %v1189, 0
        %v1215 = vsel %vm660, %v1190, 0
        %v1218 = vsel %vm660, %v1191, 0
        %1220 = vmatprep.subr.mxu0 0.0
        %1221 = vmatpush1.msra.mxu0 %v1192
        %1222 = vmatprep.subr.mxu0 0.0
        %1223 = vmatpush1.msra.mxu0 %v1193
        %1224 = vmatprep.subr.mxu0 0.0
        %1225 = vmatpush1.msra.mxu0 %v1194
        %1226 = vmatprep.subr.mxu0 0.0
        %1227 = vmatpush1.msra.mxu0 %v1195
        %1228 = vmatprep.subr.mxu0 0.0
        %1229 = vmatpush1.msra.mxu0 0.0
        %1230 = vmatprep.subr.mxu0 0.0
        %1231 = vmatpush1.msra.mxu0 0.0
        %1232 = vmatprep.subr.mxu0 0.0
        %1233 = vmatpush1.msra.mxu0 0.0
        %1234 = vmatprep.subr.mxu0 0.0
        %1235 = vmatpush1.msra.mxu0 0.0
        %1236 = vmatprep.subr.mxu0 0.0
        %1237 = vmatpush1.msra.mxu0 0.0
        %1238 = vmatprep.subr.mxu0 0.0
        %1239 = vmatpush1.msra.mxu0 0.0
        %1240 = vmatprep.subr.mxu0 0.0
        %1241 = vmatpush1.msra.mxu0 0.0
        %1242 = vmatprep.subr.mxu0 0.0
        %1243 = vmatpush1.msra.mxu0 0.0
        %1244 = vmatprep.subr.mxu0 0.0
        %1245 = vmatpush1.msra.mxu0 0.0
        %1246 = vmatprep.subr.mxu0 0.0
        %1247 = vmatpush1.msra.mxu0 0.0
        %1248 = vmatprep.subr.mxu0 0.0
        %1249 = vmatpush1.msra.mxu0 0.0
        %1250 = vmatprep.subr.mxu0 0.0
        %1251 = vmatpush1.msra.mxu0 0.0
        %1252 = vmatprep.subr.mxu0 0.0
        %1253 = vmatpush1.msra.mxu0 0.0
        %1254 = vmatprep.subr.mxu0 0.0
        %1255 = vmatpush1.msra.mxu0 0.0
        %1256 = vmatprep.subr.mxu0 0.0
        %1257 = vmatpush1.msra.mxu0 0.0
        %1258 = vmatprep.subr.mxu0 0.0
        %1259 = vmatpush1.msra.mxu0 0.0
        %1260 = vmatprep.subr.mxu0 0.0
        %1261 = vmatpush1.msra.mxu0 0.0
        %1262 = vmatprep.subr.mxu0 0.0
        %1263 = vmatpush1.msra.mxu0 0.0
        %1264 = vmatprep.subr.mxu0 0.0
        %1265 = vmatpush1.msra.mxu0 0.0
        %1266 = vmatprep.subr.mxu0 0.0
        %1267 = vmatpush1.msra.mxu0 0.0
        %1268 = vmatprep.subr.mxu0 0.0
        %1269 = vmatpush1.msra.mxu0 0.0
        %1270 = vmatprep.subr.mxu0 0.0
        %1271 = vmatpush1.msra.mxu0 0.0
        %1272 = vmatprep.subr.mxu0 0.0
        %1273 = vmatpush1.msra.mxu0 0.0
        %1274 = vmatprep.subr.mxu0 0.0
        %1275 = vmatpush1.msra.mxu0 0.0
        %1276 = vmatprep.subr.mxu0 0.0
        %1277 = vmatpush1.msra.mxu0 0.0
        %1278 = vmatprep.subr.mxu0 0.0
        %1279 = vmatpush1.msra.mxu0 0.0
        %1280 = vmatprep.subr.mxu0 0.0
        %1281 = vmatpush1.msra.mxu0 0.0
        %1282 = vmatprep.subr.mxu0 0.0
        %1283 = vmatpush1.msra.mxu0 0.0
        %1284 = vmatprep.mubr.f32.mxu0 0.0
        %1285 = vmatmul.mubr.f32.gmra.mrb[0].mxu0 %v1197
        %v1286 = vpop.f32.mrb[0].mxu0
        %v1287 = vadd.f32 0.0, %v1286
        %v1288 = vpop.f32.mrb[0].mxu0
        %1289 = vmatprep.mubr.f32.mxu0 0.0
        %1290 = vmatmul.mubr.f32.gmra.mrb[0].mxu0 %v1200
        %v1291 = vpop.f32.mrb[0].mxu0
        %v1292 = vadd.f32 0.0, %v1291
        %v1293 = vpop.f32.mrb[0].mxu0
        %1294 = vmatprep.mubr.f32.mxu0 0.0
        %1295 = vmatmul.mubr.f32.gmra.mrb[0].mxu0 %v1203
        %v1296 = vpop.f32.mrb[0].mxu0
        %v1297 = vadd.f32 0.0, %v1296
        %v1298 = vpop.f32.mrb[0].mxu0
        %1299 = vmatprep.mubr.f32.mxu0 0.0
        %1300 = vmatmul.mubr.f32.gmra.mrb[0].mxu0 %v1206
        %v1301 = vpop.f32.mrb[0].mxu0
        %v1302 = vadd.f32 0.0, %v1301
        %v1303 = vpop.f32.mrb[0].mxu0
        %1304 = vmatprep.mubr.f32.mxu0 0.0
        %1305 = vmatmul.mubr.f32.gmra.mrb[0].mxu0 %v1209
        %v1306 = vpop.f32.mrb[0].mxu0
        %v1307 = vadd.f32 0.0, %v1306
        %v1308 = vpop.f32.mrb[0].mxu0
        %1309 = vmatprep.mubr.f32.mxu0 0.0
        %1310 = vmatmul.mubr.f32.gmra.mrb[0].mxu0 %v1212
        %v1311 = vpop.f32.mrb[0].mxu0
        %v1312 = vadd.f32 0.0, %v1311
        %v1313 = vpop.f32.mrb[0].mxu0
        %1314 = vmatprep.mubr.f32.mxu0 0.0
        %1315 = vmatmul.mubr.f32.gmra.mrb[0].mxu0 %v1215
        %v1316 = vpop.f32.mrb[0].mxu0
        %v1317 = vadd.f32 0.0, %v1316
        %v1318 = vpop.f32.mrb[0].mxu0
        %1319 = vmatprep.mubr.f32.mxu0 0.0
        %1320 = vmatmul.mubr.f32.gmra.mrb[0].mxu0 %v1218
        %v1321 = vpop.f32.mrb[0].mxu0
        %v1322 = vadd.f32 0.0, %v1321
        %v1323 = vpop.f32.mrb[0].mxu0
        %1324 = vdwg.mxu0
        %v1325 = vld [vmem:[%s9] sm:$0x1]
        %v1327 = vlaneseq
        %v1328 = vshrl.u32 %v1327, 7
        %v1329 = vsub.s32 0, %v1328
        %v1330 = vrot.slane %v1325, %v1329
        %v1332 = vmul.f32 %v1287, %v1330
        %v1333 = vmul.f32 %v1292, %v1330
        %v1334 = vmul.f32 %v1297, %v1330
        %v1335 = vmul.f32 %v1302, %v1330
        %v1336 = vmul.f32 %v1307, %v1330
        %v1337 = vmul.f32 %v1312, %v1330
        %v1338 = vmul.f32 %v1317, %v1330
        %v1339 = vmul.f32 %v1322, %v1330
        %v1340 = vld [vmem:[%s10] sm:$0x1]
        %v1342 = vlaneseq
        %v1343 = vshrl.u32 %v1342, 7
        %v1344 = vsub.s32 0, %v1343
        %v1345 = vrot.slane %v1340, %v1344
        %v1347 = vadd.f32 %v1332, %v1345
        %v1348 = vadd.f32 %v1333, %v1345
        %v1349 = vadd.f32 %v1334, %v1345
        %v1350 = vadd.f32 %v1335, %v1345
        %v1351 = vadd.f32 %v1336, %v1345
        %v1352 = vadd.f32 %v1337, %v1345
        %v1353 = vadd.f32 %v1338, %v1345
        %v1354 = vadd.f32 %v1339, %v1345
        %v1355 = vmax.f32 %v1347, 0.0
        %v1356 = vmax.f32 %v1348, 0.0
        %v1357 = vmax.f32 %v1349, 0.0
        %v1358 = vmax.f32 %v1350, 0.0
        %v1359 = vmax.f32 %v1351, 0.0
        %v1360 = vmax.f32 %v1352, 0.0
        %v1361 = vmax.f32 %v1353, 0.0
        %v1362 = vmax.f32 %v1354, 0.0
        %v1363 = vld [vmem:[%s6] sm:$0xff]
        %v1365 = vsel %vm626, %v1355, 0
        %v1368 = vsel %vm626, %v1356, 0
        %v1371 = vsel %vm626, %v1357, 0
        %v1374 = vsel %vm626, %v1358, 0
        %v1377 = vsel %vm626, %v1359, 0
        %v1380 = vsel %vm626, %v1360, 0
        %v1383 = vsel %vm626, %v1361, 0
        %v1386 = vsel %vm626, %v1362, 0
        %1388 = vmatprep.subr.mxu0 0.0
        %1389 = vmatpush1.msra.mxu0 %v1363
        %1390 = vmatprep.subr.mxu0 0.0
        %1391 = vmatpush1.msra.mxu0 0.0
        %1392 = vmatprep.subr.mxu0 0.0
        %1393 = vmatpush1.msra.mxu0 0.0
        %1394 = vmatprep.subr.mxu0 0.0
        %1395 = vmatpush1.msra.mxu0 0.0
        %1396 = vmatprep.subr.mxu0 0.0
        %1397 = vmatpush1.msra.mxu0 0.0
        %1398 = vmatprep.subr.mxu0 0.0
        %1399 = vmatpush1.msra.mxu0 0.0
        %1400 = vmatprep.subr.mxu0 0.0
        %1401 = vmatpush1.msra.mxu0 0.0
        %1402 = vmatprep.subr.mxu0 0.0
        %1403 = vmatpush1.msra.mxu0 0.0
        %1404 = vmatprep.subr.mxu0 0.0
        %1405 = vmatpush1.msra.mxu0 0.0
        %1406 = vmatprep.subr.mxu0 0.0
        %1407 = vmatpush1.msra.mxu0 0.0
        %1408 = vmatprep.subr.mxu0 0.0
        %1409 = vmatpush1.msra.mxu0 0.0
        %1410 = vmatprep.subr.mxu0 0.0
        %1411 = vmatpush1.msra.mxu0 0.0
        %1412 = vmatprep.subr.mxu0 0.0
        %1413 = vmatpush1.msra.mxu0 0.0
        %1414 = vmatprep.subr.mxu0 0.0
        %1415 = vmatpush1.msra.mxu0 0.0
        %1416 = vmatprep.subr.mxu0 0.0
        %1417 = vmatpush1.msra.mxu0 0.0
        %1418 = vmatprep.subr.mxu0 0.0
        %1419 = vmatpush1.msra.mxu0 0.0
        %1420 = vmatprep.subr.mxu0 0.0
        %1421 = vmatpush1.msra.mxu0 0.0
        %1422 = vmatprep.subr.mxu0 0.0
        %1423 = vmatpush1.msra.mxu0 0.0
        %1424 = vmatprep.subr.mxu0 0.0
        %1425 = vmatpush1.msra.mxu0 0.0
        %1426 = vmatprep.subr.mxu0 0.0
        %1427 = vmatpush1.msra.mxu0 0.0
        %1428 = vmatprep.subr.mxu0 0.0
        %1429 = vmatpush1.msra.mxu0 0.0
        %1430 = vmatprep.subr.mxu0 0.0
        %1431 = vmatpush1.msra.mxu0 0.0
        %1432 = vmatprep.subr.mxu0 0.0
        %1433 = vmatpush1.msra.mxu0 0.0
        %1434 = vmatprep.subr.mxu0 0.0
        %1435 = vmatpush1.msra.mxu0 0.0
        %1436 = vmatprep.subr.mxu0 0.0
        %1437 = vmatpush1.msra.mxu0 0.0
        %1438 = vmatprep.subr.mxu0 0.0
        %1439 = vmatpush1.msra.mxu0 0.0
        %1440 = vmatprep.subr.mxu0 0.0
        %1441 = vmatpush1.msra.mxu0 0.0
        %1442 = vmatprep.subr.mxu0 0.0
        %1443 = vmatpush1.msra.mxu0 0.0
        %1444 = vmatprep.subr.mxu0 0.0
        %1445 = vmatpush1.msra.mxu0 0.0
        %1446 = vmatprep.subr.mxu0 0.0
        %1447 = vmatpush1.msra.mxu0 0.0
        %1448 = vmatprep.subr.mxu0 0.0
        %1449 = vmatpush1.msra.mxu0 0.0
        %1450 = vmatprep.subr.mxu0 0.0
        %1451 = vmatpush1.msra.mxu0 0.0
        %1452 = vmatprep.mubr.f32.mxu0 0.0
        %1453 = vmatmul.mubr.f32.gmra.mrb[0].mxu0 %v1365
        %v1454 = vpop.f32.mrb[0].mxu0
        %v1455 = vadd.f32 0.0, %v1454
        %v1456 = vpop.f32.mrb[0].mxu0
        %1457 = vmatprep.mubr.f32.mxu0 0.0
        %1458 = vmatmul.mubr.f32.gmra.mrb[0].mxu0 %v1368
        %v1459 = vpop.f32.mrb[0].mxu0
        %v1460 = vadd.f32 0.0, %v1459
        %v1461 = vpop.f32.mrb[0].mxu0
        %1462 = vmatprep.mubr.f32.mxu0 0.0
        %1463 = vmatmul.mubr.f32.gmra.mrb[0].mxu0 %v1371
        %v1464 = vpop.f32.mrb[0].mxu0
        %v1465 = vadd.f32 0.0, %v1464
        %v1466 = vpop.f32.mrb[0].mxu0
        %1467 = vmatprep.mubr.f32.mxu0 0.0
        %1468 = vmatmul.mubr.f32.gmra.mrb[0].mxu0 %v1374
        %v1469 = vpop.f32.mrb[0].mxu0
        %v1470 = vadd.f32 0.0, %v1469
        %v1471 = vpop.f32.mrb[0].mxu0
        %1472 = vmatprep.mubr.f32.mxu0 0.0
        %1473 = vmatmul.mubr.f32.gmra.mrb[0].mxu0 %v1377
        %v1474 = vpop.f32.mrb[0].mxu0
        %v1475 = vadd.f32 0.0, %v1474
        %v1476 = vpop.f32.mrb[0].mxu0
        %1477 = vmatprep.mubr.f32.mxu0 0.0
        %1478 = vmatmul.mubr.f32.gmra.mrb[0].mxu0 %v1380
        %v1479 = vpop.f32.mrb[0].mxu0
        %v1480 = vadd.f32 0.0, %v1479
        %v1481 = vpop.f32.mrb[0].mxu0
        %1482 = vmatprep.mubr.f32.mxu0 0.0
        %1483 = vmatmul.mubr.f32.gmra.mrb[0].mxu0 %v1383
        %v1484 = vpop.f32.mrb[0].mxu0
        %v1485 = vadd.f32 0.0, %v1484
        %v1486 = vpop.f32.mrb[0].mxu0
        %1487 = vmatprep.mubr.f32.mxu0 0.0
        %1488 = vmatmul.mubr.f32.gmra.mrb[0].mxu0 %v1386
        %v1489 = vpop.f32.mrb[0].mxu0
        %v1490 = vadd.f32 0.0, %v1489
        %v1491 = vpop.f32.mrb[0].mxu0
        %1492 = vdwg.mxu0
        %v1493 = vld [vmem:[%s11] sm:$0x1]
        %v1495 = vlaneseq
        %v1496 = vshrl.u32 %v1495, 7
        %v1497 = vsub.s32 0, %v1496
        %v1498 = vrot.slane %v1493, %v1497
        %v1500 = vmul.f32 %v1455, %v1498
        %v1501 = vmul.f32 %v1460, %v1498
        %v1502 = vmul.f32 %v1465, %v1498
        %v1503 = vmul.f32 %v1470, %v1498
        %v1504 = vmul.f32 %v1475, %v1498
        %v1505 = vmul.f32 %v1480, %v1498
        %v1506 = vmul.f32 %v1485, %v1498
        %v1507 = vmul.f32 %v1490, %v1498
        %v1508 = vld [vmem:[%s12] sm:$0x1]
        %v1510 = vlaneseq
        %v1511 = vshrl.u32 %v1510, 7
        %v1512 = vsub.s32 0, %v1511
        %v1513 = vrot.slane %v1508, %v1512
        %v1515 = vadd.f32 %v1500, %v1513
        %v1516 = vadd.f32 %v1501, %v1513
        %v1517 = vadd.f32 %v1502, %v1513
        %v1518 = vadd.f32 %v1503, %v1513
        %v1519 = vadd.f32 %v1504, %v1513
        %v1520 = vadd.f32 %v1505, %v1513
        %v1521 = vadd.f32 %v1506, %v1513
        %v1522 = vadd.f32 %v1507, %v1513
        %v1523 = vmax.f32 %v1515, 0.0
        %v1524 = vmax.f32 %v1516, 0.0
        %v1525 = vmax.f32 %v1517, 0.0
        %v1526 = vmax.f32 %v1518, 0.0
        %v1527 = vmax.f32 %v1519, 0.0
        %v1528 = vmax.f32 %v1520, 0.0
        %v1529 = vmax.f32 %v1521, 0.0
        %v1530 = vmax.f32 %v1522, 0.0
        %v1531 = vld [vmem:[%s544] sm:$0xff]
        %v1532 = vld [vmem:[%s544 + $0x8] sm:$0xff]
        %v1533 = vld [vmem:[%s544 + $0x10] sm:$0xff]
        %v1534 = vld [vmem:[%s544 + $0x18] sm:$0xff]
        %v1535 = vld [vmem:[%s544 + $0x20] sm:$0xff]
        %v1536 = vld [vmem:[%s544 + $0x28] sm:$0xff]
        %v1537 = vld [vmem:[%s544 + $0x30] sm:$0xff]
        %v1538 = vld [vmem:[%s544 + $0x38] sm:$0xff]
        %v1539 = vadd.f32 %v1523, %v1531
        %v1540 = vadd.f32 %v1524, %v1532
        %v1541 = vadd.f32 %v1525, %v1533
        %v1542 = vadd.f32 %v1526, %v1534
        %v1543 = vadd.f32 %v1527, %v1535
        %v1544 = vadd.f32 %v1528, %v1536
        %v1545 = vadd.f32 %v1529, %v1537
        %v1546 = vadd.f32 %v1530, %v1538
        %1547 = vst.msk [vmem:[%s605] sm:$0xff] %vm1174, %v1539
        %1548 = vst.msk [vmem:[%s605 + $0x8] sm:$0xff] %vm1174, %v1540
        %1549 = vst.msk [vmem:[%s605 + $0x10] sm:$0xff] %vm1174, %v1541
        %1550 = vst.msk [vmem:[%s605 + $0x18] sm:$0xff] %vm1174, %v1542
        %1551 = vst.msk [vmem:[%s605 + $0x20] sm:$0xff] %vm1174, %v1543
        %1552 = vst.msk [vmem:[%s605 + $0x28] sm:$0xff] %vm1174, %v1544
        %1553 = vst.msk [vmem:[%s605 + $0x30] sm:$0xff] %vm1174, %v1545
        %1554 = vst.msk [vmem:[%s605 + $0x38] sm:$0xff] %vm1174, %v1546
        %v1555 = vld [vmem:[%s828 + $0x2] sm:$0xff]
        %v1556 = vld [vmem:[%s828 + $0x12] sm:$0xff]
        %v1557 = vld [vmem:[%s828 + $0x22] sm:$0xff]
        %v1558 = vld [vmem:[%s828 + $0x32] sm:$0xff]
        %v1559 = vld [vmem:[%s828 + $0x42] sm:$0xff]
        %v1560 = vld [vmem:[%s828 + $0x52] sm:$0xff]
        %v1561 = vld [vmem:[%s828 + $0x62] sm:$0xff]
        %v1562 = vld [vmem:[%s828 + $0x72] sm:$0xff]
        %v1563 = vld [vmem:[%s828 + $0x1] sm:$0xff]
        %v1564 = vld [vmem:[%s828 + $0x11] sm:$0xff]
        %v1565 = vld [vmem:[%s828 + $0x21] sm:$0xff]
        %v1566 = vld [vmem:[%s828 + $0x31] sm:$0xff]
        %v1567 = vld [vmem:[%s828 + $0x41] sm:$0xff]
        %v1568 = vld [vmem:[%s828 + $0x51] sm:$0xff]
        %v1569 = vld [vmem:[%s828 + $0x61] sm:$0xff]
        %v1570 = vld [vmem:[%s828 + $0x71] sm:$0xff]
        %v1571 = vld [vmem:[#allocation2 + $0x2] sm:$0xff]
        %v1572 = vld [vmem:[#allocation2 + $0x12] sm:$0xff]
        %v1573 = vld [vmem:[#allocation2 + $0x22] sm:$0xff]
        %v1574 = vld [vmem:[#allocation2 + $0x32] sm:$0xff]
        %v1575 = vld [vmem:[#allocation2 + $0x42] sm:$0xff]
        %v1576 = vld [vmem:[#allocation2 + $0x52] sm:$0xff]
        %v1577 = vld [vmem:[#allocation2 + $0x62] sm:$0xff]
        %v1578 = vld [vmem:[#allocation2 + $0x72] sm:$0xff]
        %v1579 = vld [vmem:[#allocation2 + $0x1] sm:$0xff]
        %v1580 = vld [vmem:[#allocation2 + $0x11] sm:$0xff]
        %v1581 = vld [vmem:[#allocation2 + $0x21] sm:$0xff]
        %v1582 = vld [vmem:[#allocation2 + $0x31] sm:$0xff]
        %v1583 = vld [vmem:[#allocation2 + $0x41] sm:$0xff]
        %v1584 = vld [vmem:[#allocation2 + $0x51] sm:$0xff]
        %v1585 = vld [vmem:[#allocation2 + $0x61] sm:$0xff]
        %v1586 = vld [vmem:[#allocation2 + $0x71] sm:$0xff]
        %1595 = vrot.lane.b32.xlu0 %v1563, 8
        %v1596 = vpop.permute.xlu0 %1595
        %1597 = vrot.lane.b32.xlu0 %v1564, 8
        %v1598 = vpop.permute.xlu0 %1597
        %1599 = vrot.lane.b32.xlu0 %v1565, 8
        %v1600 = vpop.permute.xlu0 %1599
        %1601 = vrot.lane.b32.xlu0 %v1566, 8
        %v1602 = vpop.permute.xlu0 %1601
        %1603 = vrot.lane.b32.xlu0 %v1567, 8
        %v1604 = vpop.permute.xlu0 %1603
        %1605 = vrot.lane.b32.xlu0 %v1568, 8
        %v1606 = vpop.permute.xlu0 %1605
        %1607 = vrot.lane.b32.xlu0 %v1569, 8
        %v1608 = vpop.permute.xlu0 %1607
        %1609 = vrot.lane.b32.xlu0 %v1570, 8
        %v1610 = vpop.permute.xlu0 %1609
        %1627 = vrot.lane.b32.xlu0 %v1571, 16
        %v1628 = vpop.permute.xlu0 %1627
        %1629 = vrot.lane.b32.xlu0 %v1572, 16
        %v1630 = vpop.permute.xlu0 %1629
        %1631 = vrot.lane.b32.xlu0 %v1573, 16
        %v1632 = vpop.permute.xlu0 %1631
        %1633 = vrot.lane.b32.xlu0 %v1574, 16
        %v1634 = vpop.permute.xlu0 %1633
        %1635 = vrot.lane.b32.xlu0 %v1575, 16
        %v1636 = vpop.permute.xlu0 %1635
        %1637 = vrot.lane.b32.xlu0 %v1576, 16
        %v1638 = vpop.permute.xlu0 %1637
        %1639 = vrot.lane.b32.xlu0 %v1577, 16
        %v1640 = vpop.permute.xlu0 %1639
        %1641 = vrot.lane.b32.xlu0 %v1578, 16
        %v1642 = vpop.permute.xlu0 %1641
        %1659 = vrot.lane.b32.xlu0 %v1579, 24
        %v1660 = vpop.permute.xlu0 %1659
        %1661 = vrot.lane.b32.xlu0 %v1580, 24
        %v1662 = vpop.permute.xlu0 %1661
        %1663 = vrot.lane.b32.xlu0 %v1581, 24
        %v1664 = vpop.permute.xlu0 %1663
        %1665 = vrot.lane.b32.xlu0 %v1582, 24
        %v1666 = vpop.permute.xlu0 %1665
        %1667 = vrot.lane.b32.xlu0 %v1583, 24
        %v1668 = vpop.permute.xlu0 %1667
        %1669 = vrot.lane.b32.xlu0 %v1584, 24
        %v1670 = vpop.permute.xlu0 %1669
        %1671 = vrot.lane.b32.xlu0 %v1585, 24
        %v1672 = vpop.permute.xlu0 %1671
        %1673 = vrot.lane.b32.xlu0 %v1586, 24
        %v1674 = vpop.permute.xlu0 %1673
        %v1683 = vsel %vm626, %v1555, %v1596
        %v1684 = vsel %vm626, %v1556, %v1598
        %v1685 = vsel %vm626, %v1557, %v1600
        %v1686 = vsel %vm626, %v1558, %v1602
        %v1687 = vsel %vm626, %v1559, %v1604
        %v1688 = vsel %vm626, %v1560, %v1606
        %v1689 = vsel %vm626, %v1561, %v1608
        %v1690 = vsel %vm626, %v1562, %v1610
        %v1691 = vsel %vm1174, %v1683, %v1628
        %v1692 = vsel %vm1174, %v1684, %v1630
        %v1693 = vsel %vm1174, %v1685, %v1632
        %v1694 = vsel %vm1174, %v1686, %v1634
        %v1695 = vsel %vm1174, %v1687, %v1636
        %v1696 = vsel %vm1174, %v1688, %v1638
        %v1697 = vsel %vm1174, %v1689, %v1640
        %v1698 = vsel %vm1174, %v1690, %v1642
        %v1699 = vsel %vm1183, %v1691, %v1660
        %v1700 = vsel %vm1183, %v1692, %v1662
        %v1701 = vsel %vm1183, %v1693, %v1664
        %v1702 = vsel %vm1183, %v1694, %v1666
        %v1703 = vsel %vm1183, %v1695, %v1668
        %v1704 = vsel %vm1183, %v1696, %v1670
        %v1705 = vsel %vm1183, %v1697, %v1672
        %v1706 = vsel %vm1183, %v1698, %v1674
        %s1707 = scalar_lea.vmem %s5, 32
        %v1708 = vld [vmem:[%s1707] sm:$0xff]
        %v1709 = vld [vmem:[%s1707 + $0x8] sm:$0xff]
        %v1710 = vld [vmem:[%s1707 + $0x10] sm:$0xff]
        %v1711 = vld [vmem:[%s1707 + $0x18] sm:$0xff]
        %v1713 = vsel %vm660, %v1699, 0
        %v1716 = vsel %vm660, %v1700, 0
        %v1719 = vsel %vm660, %v1701, 0
        %v1722 = vsel %vm660, %v1702, 0
        %v1725 = vsel %vm660, %v1703, 0
        %v1728 = vsel %vm660, %v1704, 0
        %v1731 = vsel %vm660, %v1705, 0
        %v1734 = vsel %vm660, %v1706, 0
        %1736 = vmatprep.subr.mxu0 0.0
        %1737 = vmatpush1.msra.mxu0 %v1708
        %1738 = vmatprep.subr.mxu0 0.0
        %1739 = vmatpush1.msra.mxu0 %v1709
        %1740 = vmatprep.subr.mxu0 0.0
        %1741 = vmatpush1.msra.mxu0 %v1710
        %1742 = vmatprep.subr.mxu0 0.0
        %1743 = vmatpush1.msra.mxu0 %v1711
        %1744 = vmatprep.subr.mxu0 0.0
        %1745 = vmatpush1.msra.mxu0 0.0
        %1746 = vmatprep.subr.mxu0 0.0
        %1747 = vmatpush1.msra.mxu0 0.0
        %1748 = vmatprep.subr.mxu0 0.0
        %1749 = vmatpush1.msra.mxu0 0.0
        %1750 = vmatprep.subr.mxu0 0.0
        %1751 = vmatpush1.msra.mxu0 0.0
        %1752 = vmatprep.subr.mxu0 0.0
        %1753 = vmatpush1.msra.mxu0 0.0
        %1754 = vmatprep.subr.mxu0 0.0
        %1755 = vmatpush1.msra.mxu0 0.0
        %1756 = vmatprep.subr.mxu0 0.0
        %1757 = vmatpush1.msra.mxu0 0.0
        %1758 = vmatprep.subr.mxu0 0.0
        %1759 = vmatpush1.msra.mxu0 0.0
        %1760 = vmatprep.subr.mxu0 0.0
        %1761 = vmatpush1.msra.mxu0 0.0
        %1762 = vmatprep.subr.mxu0 0.0
        %1763 = vmatpush1.msra.mxu0 0.0
        %1764 = vmatprep.subr.mxu0 0.0
        %1765 = vmatpush1.msra.mxu0 0.0
        %1766 = vmatprep.subr.mxu0 0.0
        %1767 = vmatpush1.msra.mxu0 0.0
        %1768 = vmatprep.subr.mxu0 0.0
        %1769 = vmatpush1.msra.mxu0 0.0
        %1770 = vmatprep.subr.mxu0 0.0
        %1771 = vmatpush1.msra.mxu0 0.0
        %1772 = vmatprep.subr.mxu0 0.0
        %1773 = vmatpush1.msra.mxu0 0.0
        %1774 = vmatprep.subr.mxu0 0.0
        %1775 = vmatpush1.msra.mxu0 0.0
        %1776 = vmatprep.subr.mxu0 0.0
        %1777 = vmatpush1.msra.mxu0 0.0
        %1778 = vmatprep.subr.mxu0 0.0
        %1779 = vmatpush1.msra.mxu0 0.0
        %1780 = vmatprep.subr.mxu0 0.0
        %1781 = vmatpush1.msra.mxu0 0.0
        %1782 = vmatprep.subr.mxu0 0.0
        %1783 = vmatpush1.msra.mxu0 0.0
        %1784 = vmatprep.subr.mxu0 0.0
        %1785 = vmatpush1.msra.mxu0 0.0
        %1786 = vmatprep.subr.mxu0 0.0
        %1787 = vmatpush1.msra.mxu0 0.0
        %1788 = vmatprep.subr.mxu0 0.0
        %1789 = vmatpush1.msra.mxu0 0.0
        %1790 = vmatprep.subr.mxu0 0.0
        %1791 = vmatpush1.msra.mxu0 0.0
        %1792 = vmatprep.subr.mxu0 0.0
        %1793 = vmatpush1.msra.mxu0 0.0
        %1794 = vmatprep.subr.mxu0 0.0
        %1795 = vmatpush1.msra.mxu0 0.0
        %1796 = vmatprep.subr.mxu0 0.0
        %1797 = vmatpush1.msra.mxu0 0.0
        %1798 = vmatprep.subr.mxu0 0.0
        %1799 = vmatpush1.msra.mxu0 0.0
        %1800 = vmatprep.mubr.f32.mxu0 0.0
        %1801 = vmatmul.mubr.f32.gmra.mrb[0].mxu0 %v1713
        %v1802 = vpop.f32.mrb[0].mxu0
        %v1803 = vadd.f32 0.0, %v1802
        %v1804 = vpop.f32.mrb[0].mxu0
        %1805 = vmatprep.mubr.f32.mxu0 0.0
        %1806 = vmatmul.mubr.f32.gmra.mrb[0].mxu0 %v1716
        %v1807 = vpop.f32.mrb[0].mxu0
        %v1808 = vadd.f32 0.0, %v1807
        %v1809 = vpop.f32.mrb[0].mxu0
        %1810 = vmatprep.mubr.f32.mxu0 0.0
        %1811 = vmatmul.mubr.f32.gmra.mrb[0].mxu0 %v1719
        %v1812 = vpop.f32.mrb[0].mxu0
        %v1813 = vadd.f32 0.0, %v1812
        %v1814 = vpop.f32.mrb[0].mxu0
        %1815 = vmatprep.mubr.f32.mxu0 0.0
        %1816 = vmatmul.mubr.f32.gmra.mrb[0].mxu0 %v1722
        %v1817 = vpop.f32.mrb[0].mxu0
        %v1818 = vadd.f32 0.0, %v1817
        %v1819 = vpop.f32.mrb[0].mxu0
        %1820 = vmatprep.mubr.f32.mxu0 0.0
        %1821 = vmatmul.mubr.f32.gmra.mrb[0].mxu0 %v1725
        %v1822 = vpop.f32.mrb[0].mxu0
        %v1823 = vadd.f32 0.0, %v1822
        %v1824 = vpop.f32.mrb[0].mxu0
        %1825 = vmatprep.mubr.f32.mxu0 0.0
        %1826 = vmatmul.mubr.f32.gmra.mrb[0].mxu0 %v1728
        %v1827 = vpop.f32.mrb[0].mxu0
        %v1828 = vadd.f32 0.0, %v1827
        %v1829 = vpop.f32.mrb[0].mxu0
        %1830 = vmatprep.mubr.f32.mxu0 0.0
        %1831 = vmatmul.mubr.f32.gmra.mrb[0].mxu0 %v1731
        %v1832 = vpop.f32.mrb[0].mxu0
        %v1833 = vadd.f32 0.0, %v1832
        %v1834 = vpop.f32.mrb[0].mxu0
        %1835 = vmatprep.mubr.f32.mxu0 0.0
        %1836 = vmatmul.mubr.f32.gmra.mrb[0].mxu0 %v1734
        %v1837 = vpop.f32.mrb[0].mxu0
        %v1838 = vadd.f32 0.0, %v1837
        %v1839 = vpop.f32.mrb[0].mxu0
        %1840 = vdwg.mxu0
        %v1841 = vld [vmem:[%s9] sm:$0x1]
        %v1843 = vlaneseq
        %v1844 = vshrl.u32 %v1843, 7
        %v1845 = vsub.s32 0, %v1844
        %v1846 = vrot.slane %v1841, %v1845
        %v1848 = vmul.f32 %v1803, %v1846
        %v1849 = vmul.f32 %v1808, %v1846
        %v1850 = vmul.f32 %v1813, %v1846
        %v1851 = vmul.f32 %v1818, %v1846
        %v1852 = vmul.f32 %v1823, %v1846
        %v1853 = vmul.f32 %v1828, %v1846
        %v1854 = vmul.f32 %v1833, %v1846
        %v1855 = vmul.f32 %v1838, %v1846
        %v1856 = vld [vmem:[%s10] sm:$0x1]
        %v1858 = vlaneseq
        %v1859 = vshrl.u32 %v1858, 7
        %v1860 = vsub.s32 0, %v1859
        %v1861 = vrot.slane %v1856, %v1860
        %v1863 = vadd.f32 %v1848, %v1861
        %v1864 = vadd.f32 %v1849, %v1861
        %v1865 = vadd.f32 %v1850, %v1861
        %v1866 = vadd.f32 %v1851, %v1861
        %v1867 = vadd.f32 %v1852, %v1861
        %v1868 = vadd.f32 %v1853, %v1861
        %v1869 = vadd.f32 %v1854, %v1861
        %v1870 = vadd.f32 %v1855, %v1861
        %v1871 = vmax.f32 %v1863, 0.0
        %v1872 = vmax.f32 %v1864, 0.0
        %v1873 = vmax.f32 %v1865, 0.0
        %v1874 = vmax.f32 %v1866, 0.0
        %v1875 = vmax.f32 %v1867, 0.0
        %v1876 = vmax.f32 %v1868, 0.0
        %v1877 = vmax.f32 %v1869, 0.0
        %v1878 = vmax.f32 %v1870, 0.0
        %v1879 = vld [vmem:[%s6] sm:$0xff]
        %v1881 = vsel %vm626, %v1871, 0
        %v1884 = vsel %vm626, %v1872, 0
        %v1887 = vsel %vm626, %v1873, 0
        %v1890 = vsel %vm626, %v1874, 0
        %v1893 = vsel %vm626, %v1875, 0
        %v1896 = vsel %vm626, %v1876, 0
        %v1899 = vsel %vm626, %v1877, 0
        %v1902 = vsel %vm626, %v1878, 0
        %1904 = vmatprep.subr.mxu0 0.0
        %1905 = vmatpush1.msra.mxu0 %v1879
        %1906 = vmatprep.subr.mxu0 0.0
        %1907 = vmatpush1.msra.mxu0 0.0
        %1908 = vmatprep.subr.mxu0 0.0
        %1909 = vmatpush1.msra.mxu0 0.0
        %1910 = vmatprep.subr.mxu0 0.0
        %1911 = vmatpush1.msra.mxu0 0.0
        %1912 = vmatprep.subr.mxu0 0.0
        %1913 = vmatpush1.msra.mxu0 0.0
        %1914 = vmatprep.subr.mxu0 0.0
        %1915 = vmatpush1.msra.mxu0 0.0
        %1916 = vmatprep.subr.mxu0 0.0
        %1917 = vmatpush1.msra.mxu0 0.0
        %1918 = vmatprep.subr.mxu0 0.0
        %1919 = vmatpush1.msra.mxu0 0.0
        %1920 = vmatprep.subr.mxu0 0.0
        %1921 = vmatpush1.msra.mxu0 0.0
        %1922 = vmatprep.subr.mxu0 0.0
        %1923 = vmatpush1.msra.mxu0 0.0
        %1924 = vmatprep.subr.mxu0 0.0
        %1925 = vmatpush1.msra.mxu0 0.0
        %1926 = vmatprep.subr.mxu0 0.0
        %1927 = vmatpush1.msra.mxu0 0.0
        %1928 = vmatprep.subr.mxu0 0.0
        %1929 = vmatpush1.msra.mxu0 0.0
        %1930 = vmatprep.subr.mxu0 0.0
        %1931 = vmatpush1.msra.mxu0 0.0
        %1932 = vmatprep.subr.mxu0 0.0
        %1933 = vmatpush1.msra.mxu0 0.0
        %1934 = vmatprep.subr.mxu0 0.0
        %1935 = vmatpush1.msra.mxu0 0.0
        %1936 = vmatprep.subr.mxu0 0.0
        %1937 = vmatpush1.msra.mxu0 0.0
        %1938 = vmatprep.subr.mxu0 0.0
        %1939 = vmatpush1.msra.mxu0 0.0
        %1940 = vmatprep.subr.mxu0 0.0
        %1941 = vmatpush1.msra.mxu0 0.0
        %1942 = vmatprep.subr.mxu0 0.0
        %1943 = vmatpush1.msra.mxu0 0.0
        %1944 = vmatprep.subr.mxu0 0.0
        %1945 = vmatpush1.msra.mxu0 0.0
        %1946 = vmatprep.subr.mxu0 0.0
        %1947 = vmatpush1.msra.mxu0 0.0
        %1948 = vmatprep.subr.mxu0 0.0
        %1949 = vmatpush1.msra.mxu0 0.0
        %1950 = vmatprep.subr.mxu0 0.0
        %1951 = vmatpush1.msra.mxu0 0.0
        %1952 = vmatprep.subr.mxu0 0.0
        %1953 = vmatpush1.msra.mxu0 0.0
        %1954 = vmatprep.subr.mxu0 0.0
        %1955 = vmatpush1.msra.mxu0 0.0
        %1956 = vmatprep.subr.mxu0 0.0
        %1957 = vmatpush1.msra.mxu0 0.0
        %1958 = vmatprep.subr.mxu0 0.0
        %1959 = vmatpush1.msra.mxu0 0.0
        %1960 = vmatprep.subr.mxu0 0.0
        %1961 = vmatpush1.msra.mxu0 0.0
        %1962 = vmatprep.subr.mxu0 0.0
        %1963 = vmatpush1.msra.mxu0 0.0
        %1964 = vmatprep.subr.mxu0 0.0
        %1965 = vmatpush1.msra.mxu0 0.0
        %1966 = vmatprep.subr.mxu0 0.0
        %1967 = vmatpush1.msra.mxu0 0.0
        %1968 = vmatprep.mubr.f32.mxu0 0.0
        %1969 = vmatmul.mubr.f32.gmra.mrb[0].mxu0 %v1881
        %v1970 = vpop.f32.mrb[0].mxu0
        %v1971 = vadd.f32 0.0, %v1970
        %v1972 = vpop.f32.mrb[0].mxu0
        %1973 = vmatprep.mubr.f32.mxu0 0.0
        %1974 = vmatmul.mubr.f32.gmra.mrb[0].mxu0 %v1884
        %v1975 = vpop.f32.mrb[0].mxu0
        %v1976 = vadd.f32 0.0, %v1975
        %v1977 = vpop.f32.mrb[0].mxu0
        %1978 = vmatprep.mubr.f32.mxu0 0.0
        %1979 = vmatmul.mubr.f32.gmra.mrb[0].mxu0 %v1887
        %v1980 = vpop.f32.mrb[0].mxu0
        %v1981 = vadd.f32 0.0, %v1980
        %v1982 = vpop.f32.mrb[0].mxu0
        %1983 = vmatprep.mubr.f32.mxu0 0.0
        %1984 = vmatmul.mubr.f32.gmra.mrb[0].mxu0 %v1890
        %v1985 = vpop.f32.mrb[0].mxu0
        %v1986 = vadd.f32 0.0, %v1985
        %v1987 = vpop.f32.mrb[0].mxu0
        %1988 = vmatprep.mubr.f32.mxu0 0.0
        %1989 = vmatmul.mubr.f32.gmra.mrb[0].mxu0 %v1893
        %v1990 = vpop.f32.mrb[0].mxu0
        %v1991 = vadd.f32 0.0, %v1990
        %v1992 = vpop.f32.mrb[0].mxu0
        %1993 = vmatprep.mubr.f32.mxu0 0.0
        %1994 = vmatmul.mubr.f32.gmra.mrb[0].mxu0 %v1896
        %v1995 = vpop.f32.mrb[0].mxu0
        %v1996 = vadd.f32 0.0, %v1995
        %v1997 = vpop.f32.mrb[0].mxu0
        %1998 = vmatprep.mubr.f32.mxu0 0.0
        %1999 = vmatmul.mubr.f32.gmra.mrb[0].mxu0 %v1899
        %v2000 = vpop.f32.mrb[0].mxu0
        %v2001 = vadd.f32 0.0, %v2000
        %v2002 = vpop.f32.mrb[0].mxu0
        %2003 = vmatprep.mubr.f32.mxu0 0.0
        %2004 = vmatmul.mubr.f32.gmra.mrb[0].mxu0 %v1902
        %v2005 = vpop.f32.mrb[0].mxu0
        %v2006 = vadd.f32 0.0, %v2005
        %v2007 = vpop.f32.mrb[0].mxu0
        %2008 = vdwg.mxu0
        %v2009 = vld [vmem:[%s11] sm:$0x1]
        %v2011 = vlaneseq
        %v2012 = vshrl.u32 %v2011, 7
        %v2013 = vsub.s32 0, %v2012
        %v2014 = vrot.slane %v2009, %v2013
        %v2016 = vmul.f32 %v1971, %v2014
        %v2017 = vmul.f32 %v1976, %v2014
        %v2018 = vmul.f32 %v1981, %v2014
        %v2019 = vmul.f32 %v1986, %v2014
        %v2020 = vmul.f32 %v1991, %v2014
        %v2021 = vmul.f32 %v1996, %v2014
        %v2022 = vmul.f32 %v2001, %v2014
        %v2023 = vmul.f32 %v2006, %v2014
        %v2024 = vld [vmem:[%s12] sm:$0x1]
        %v2026 = vlaneseq
        %v2027 = vshrl.u32 %v2026, 7
        %v2028 = vsub.s32 0, %v2027
        %v2029 = vrot.slane %v2024, %v2028
        %v2031 = vadd.f32 %v2016, %v2029
        %v2032 = vadd.f32 %v2017, %v2029
        %v2033 = vadd.f32 %v2018, %v2029
        %v2034 = vadd.f32 %v2019, %v2029
        %v2035 = vadd.f32 %v2020, %v2029
        %v2036 = vadd.f32 %v2021, %v2029
        %v2037 = vadd.f32 %v2022, %v2029
        %v2038 = vadd.f32 %v2023, %v2029
        %v2039 = vmax.f32 %v2031, 0.0
        %v2040 = vmax.f32 %v2032, 0.0
        %v2041 = vmax.f32 %v2033, 0.0
        %v2042 = vmax.f32 %v2034, 0.0
        %v2043 = vmax.f32 %v2035, 0.0
        %v2044 = vmax.f32 %v2036, 0.0
        %v2045 = vmax.f32 %v2037, 0.0
        %v2046 = vmax.f32 %v2038, 0.0
        %s2047 = scalar_lea.vmem %s544, 64 [#allocation8]
        %v2048 = vld [vmem:[%s2047] sm:$0xff]
        %v2049 = vld [vmem:[%s2047 + $0x8] sm:$0xff]
        %v2050 = vld [vmem:[%s2047 + $0x10] sm:$0xff]
        %v2051 = vld [vmem:[%s2047 + $0x18] sm:$0xff]
        %v2052 = vld [vmem:[%s2047 + $0x20] sm:$0xff]
        %v2053 = vld [vmem:[%s2047 + $0x28] sm:$0xff]
        %v2054 = vld [vmem:[%s2047 + $0x30] sm:$0xff]
        %v2055 = vld [vmem:[%s2047 + $0x38] sm:$0xff]
        %v2056 = vadd.f32 %v2039, %v2048
        %v2057 = vadd.f32 %v2040, %v2049
        %v2058 = vadd.f32 %v2041, %v2050
        %v2059 = vadd.f32 %v2042, %v2051
        %v2060 = vadd.f32 %v2043, %v2052
        %v2061 = vadd.f32 %v2044, %v2053
        %v2062 = vadd.f32 %v2045, %v2054
        %v2063 = vadd.f32 %v2046, %v2055
        %s2064 = scalar_lea.vmem %s605, 64 [#allocation9]
        %2065 = vst.msk [vmem:[%s2064] sm:$0xff] %vm1174, %v2056
        %2066 = vst.msk [vmem:[%s2064 + $0x8] sm:$0xff] %vm1174, %v2057
        %2067 = vst.msk [vmem:[%s2064 + $0x10] sm:$0xff] %vm1174, %v2058
        %2068 = vst.msk [vmem:[%s2064 + $0x18] sm:$0xff] %vm1174, %v2059
        %2069 = vst.msk [vmem:[%s2064 + $0x20] sm:$0xff] %vm1174, %v2060
        %2070 = vst.msk [vmem:[%s2064 + $0x28] sm:$0xff] %vm1174, %v2061
        %2071 = vst.msk [vmem:[%s2064 + $0x30] sm:$0xff] %vm1174, %v2062
        %2072 = vst.msk [vmem:[%s2064 + $0x38] sm:$0xff] %vm1174, %v2063
        %s2073 = scalar_lea.vmem [#allocation2], 32
        %v2074 = vld [vmem:[%s2073 + $0x1] sm:$0xff]
        %v2075 = vld [vmem:[%s2073 + $0x11] sm:$0xff]
        %v2076 = vld [vmem:[%s2073 + $0x21] sm:$0xff]
        %v2077 = vld [vmem:[%s2073 + $0x31] sm:$0xff]
        %v2078 = vld [vmem:[%s2073 + $0x41] sm:$0xff]
        %v2079 = vld [vmem:[%s2073 + $0x51] sm:$0xff]
        %v2080 = vld [vmem:[%s2073 + $0x61] sm:$0xff]
        %v2081 = vld [vmem:[%s2073 + $0x71] sm:$0xff]
        %v2082 = vld [vmem:[%s2073] sm:$0xff]
        %v2083 = vld [vmem:[%s2073 + $0x10] sm:$0xff]
        %v2084 = vld [vmem:[%s2073 + $0x20] sm:$0xff]
        %v2085 = vld [vmem:[%s2073 + $0x30] sm:$0xff]
        %v2086 = vld [vmem:[%s2073 + $0x40] sm:$0xff]
        %v2087 = vld [vmem:[%s2073 + $0x50] sm:$0xff]
        %v2088 = vld [vmem:[%s2073 + $0x60] sm:$0xff]
        %v2089 = vld [vmem:[%s2073 + $0x70] sm:$0xff]
        %v2090 = vld [vmem:[%s828 + $0x1] sm:$0xff]
        %v2091 = vld [vmem:[%s828 + $0x11] sm:$0xff]
        %v2092 = vld [vmem:[%s828 + $0x21] sm:$0xff]
        %v2093 = vld [vmem:[%s828 + $0x31] sm:$0xff]
        %v2094 = vld [vmem:[%s828 + $0x41] sm:$0xff]
        %v2095 = vld [vmem:[%s828 + $0x51] sm:$0xff]
        %v2096 = vld [vmem:[%s828 + $0x61] sm:$0xff]
        %v2097 = vld [vmem:[%s828 + $0x71] sm:$0xff]
        %v2098 = vld [vmem:[%s828] sm:$0xff]
        %v2099 = vld [vmem:[%s828 + $0x10] sm:$0xff]
        %v2100 = vld [vmem:[%s828 + $0x20] sm:$0xff]
        %v2101 = vld [vmem:[%s828 + $0x30] sm:$0xff]
        %v2102 = vld [vmem:[%s828 + $0x40] sm:$0xff]
        %v2103 = vld [vmem:[%s828 + $0x50] sm:$0xff]
        %v2104 = vld [vmem:[%s828 + $0x60] sm:$0xff]
        %v2105 = vld [vmem:[%s828 + $0x70] sm:$0xff]
        %2114 = vrot.lane.b32.xlu0 %v2082, 8
        %v2115 = vpop.permute.xlu0 %2114
        %2116 = vrot.lane.b32.xlu0 %v2083, 8
        %v2117 = vpop.permute.xlu0 %2116
        %2118 = vrot.lane.b32.xlu0 %v2084, 8
        %v2119 = vpop.permute.xlu0 %2118
        %2120 = vrot.lane.b32.xlu0 %v2085, 8
        %v2121 = vpop.permute.xlu0 %2120
        %2122 = vrot.lane.b32.xlu0 %v2086, 8
        %v2123 = vpop.permute.xlu0 %2122
        %2124 = vrot.lane.b32.xlu0 %v2087, 8
        %v2125 = vpop.permute.xlu0 %2124
        %2126 = vrot.lane.b32.xlu0 %v2088, 8
        %v2127 = vpop.permute.xlu0 %2126
        %2128 = vrot.lane.b32.xlu0 %v2089, 8
        %v2129 = vpop.permute.xlu0 %2128
        %2146 = vrot.lane.b32.xlu0 %v2090, 16
        %v2147 = vpop.permute.xlu0 %2146
        %2148 = vrot.lane.b32.xlu0 %v2091, 16
        %v2149 = vpop.permute.xlu0 %2148
        %2150 = vrot.lane.b32.xlu0 %v2092, 16
        %v2151 = vpop.permute.xlu0 %2150
        %2152 = vrot.lane.b32.xlu0 %v2093, 16
        %v2153 = vpop.permute.xlu0 %2152
        %2154 = vrot.lane.b32.xlu0 %v2094, 16
        %v2155 = vpop.permute.xlu0 %2154
        %2156 = vrot.lane.b32.xlu0 %v2095, 16
        %v2157 = vpop.permute.xlu0 %2156
        %2158 = vrot.lane.b32.xlu0 %v2096, 16
        %v2159 = vpop.permute.xlu0 %2158
        %2160 = vrot.lane.b32.xlu0 %v2097, 16
        %v2161 = vpop.permute.xlu0 %2160
        %2178 = vrot.lane.b32.xlu0 %v2098, 24
        %v2179 = vpop.permute.xlu0 %2178
        %2180 = vrot.lane.b32.xlu0 %v2099, 24
        %v2181 = vpop.permute.xlu0 %2180
        %2182 = vrot.lane.b32.xlu0 %v2100, 24
        %v2183 = vpop.permute.xlu0 %2182
        %2184 = vrot.lane.b32.xlu0 %v2101, 24
        %v2185 = vpop.permute.xlu0 %2184
        %2186 = vrot.lane.b32.xlu0 %v2102, 24
        %v2187 = vpop.permute.xlu0 %2186
        %2188 = vrot.lane.b32.xlu0 %v2103, 24
        %v2189 = vpop.permute.xlu0 %2188
        %2190 = vrot.lane.b32.xlu0 %v2104, 24
        %v2191 = vpop.permute.xlu0 %2190
        %2192 = vrot.lane.b32.xlu0 %v2105, 24
        %v2193 = vpop.permute.xlu0 %2192
        %v2202 = vsel %vm626, %v2074, %v2115
        %v2203 = vsel %vm626, %v2075, %v2117
        %v2204 = vsel %vm626, %v2076, %v2119
        %v2205 = vsel %vm626, %v2077, %v2121
        %v2206 = vsel %vm626, %v2078, %v2123
        %v2207 = vsel %vm626, %v2079, %v2125
        %v2208 = vsel %vm626, %v2080, %v2127
        %v2209 = vsel %vm626, %v2081, %v2129
        %v2210 = vsel %vm1174, %v2202, %v2147
        %v2211 = vsel %vm1174, %v2203, %v2149
        %v2212 = vsel %vm1174, %v2204, %v2151
        %v2213 = vsel %vm1174, %v2205, %v2153
        %v2214 = vsel %vm1174, %v2206, %v2155
        %v2215 = vsel %vm1174, %v2207, %v2157
        %v2216 = vsel %vm1174, %v2208, %v2159
        %v2217 = vsel %vm1174, %v2209, %v2161
        %v2218 = vsel %vm1183, %v2210, %v2179
        %v2219 = vsel %vm1183, %v2211, %v2181
        %v2220 = vsel %vm1183, %v2212, %v2183
        %v2221 = vsel %vm1183, %v2213, %v2185
        %v2222 = vsel %vm1183, %v2214, %v2187
        %v2223 = vsel %vm1183, %v2215, %v2189
        %v2224 = vsel %vm1183, %v2216, %v2191
        %v2225 = vsel %vm1183, %v2217, %v2193
        %s2226 = scalar_lea.vmem %s5, 64
        %v2227 = vld [vmem:[%s2226] sm:$0xff]
        %v2228 = vld [vmem:[%s2226 + $0x8] sm:$0xff]
        %v2229 = vld [vmem:[%s2226 + $0x10] sm:$0xff]
        %v2230 = vld [vmem:[%s2226 + $0x18] sm:$0xff]
        %v2232 = vsel %vm660, %v2218, 0
        %v2235 = vsel %vm660, %v2219, 0
        %v2238 = vsel %vm660, %v2220, 0
        %v2241 = vsel %vm660, %v2221, 0
        %v2244 = vsel %vm660, %v2222, 0
        %v2247 = vsel %vm660, %v2223, 0
        %v2250 = vsel %vm660, %v2224, 0
        %v2253 = vsel %vm660, %v2225, 0
        %2255 = vmatprep.subr.mxu0 0.0
        %2256 = vmatpush1.msra.mxu0 %v2227
        %2257 = vmatprep.subr.mxu0 0.0
        %2258 = vmatpush1.msra.mxu0 %v2228
        %2259 = vmatprep.subr.mxu0 0.0
        %2260 = vmatpush1.msra.mxu0 %v2229
        %2261 = vmatprep.subr.mxu0 0.0
        %2262 = vmatpush1.msra.mxu0 %v2230
        %2263 = vmatprep.subr.mxu0 0.0
        %2264 = vmatpush1.msra.mxu0 0.0
        %2265 = vmatprep.subr.mxu0 0.0
        %2266 = vmatpush1.msra.mxu0 0.0
        %2267 = vmatprep.subr.mxu0 0.0
        %2268 = vmatpush1.msra.mxu0 0.0
        %2269 = vmatprep.subr.mxu0 0.0
        %2270 = vmatpush1.msra.mxu0 0.0
        %2271 = vmatprep.subr.mxu0 0.0
        %2272 = vmatpush1.msra.mxu0 0.0
        %2273 = vmatprep.subr.mxu0 0.0
        %2274 = vmatpush1.msra.mxu0 0.0
        %2275 = vmatprep.subr.mxu0 0.0
        %2276 = vmatpush1.msra.mxu0 0.0
        %2277 = vmatprep.subr.mxu0 0.0
        %2278 = vmatpush1.msra.mxu0 0.0
        %2279 = vmatprep.subr.mxu0 0.0
        %2280 = vmatpush1.msra.mxu0 0.0
        %2281 = vmatprep.subr.mxu0 0.0
        %2282 = vmatpush1.msra.mxu0 0.0
        %2283 = vmatprep.subr.mxu0 0.0
        %2284 = vmatpush1.msra.mxu0 0.0
        %2285 = vmatprep.subr.mxu0 0.0
        %2286 = vmatpush1.msra.mxu0 0.0
        %2287 = vmatprep.subr.mxu0 0.0
        %2288 = vmatpush1.msra.mxu0 0.0
        %2289 = vmatprep.subr.mxu0 0.0
        %2290 = vmatpush1.msra.mxu0 0.0
        %2291 = vmatprep.subr.mxu0 0.0
        %2292 = vmatpush1.msra.mxu0 0.0
        %2293 = vmatprep.subr.mxu0 0.0
        %2294 = vmatpush1.msra.mxu0 0.0
        %2295 = vmatprep.subr.mxu0 0.0
        %2296 = vmatpush1.msra.mxu0 0.0
        %2297 = vmatprep.subr.mxu0 0.0
        %2298 = vmatpush1.msra.mxu0 0.0
        %2299 = vmatprep.subr.mxu0 0.0
        %2300 = vmatpush1.msra.mxu0 0.0
        %2301 = vmatprep.subr.mxu0 0.0
        %2302 = vmatpush1.msra.mxu0 0.0
        %2303 = vmatprep.subr.mxu0 0.0
        %2304 = vmatpush1.msra.mxu0 0.0
        %2305 = vmatprep.subr.mxu0 0.0
        %2306 = vmatpush1.msra.mxu0 0.0
        %2307 = vmatprep.subr.mxu0 0.0
        %2308 = vmatpush1.msra.mxu0 0.0
        %2309 = vmatprep.subr.mxu0 0.0
        %2310 = vmatpush1.msra.mxu0 0.0
        %2311 = vmatprep.subr.mxu0 0.0
        %2312 = vmatpush1.msra.mxu0 0.0
        %2313 = vmatprep.subr.mxu0 0.0
        %2314 = vmatpush1.msra.mxu0 0.0
        %2315 = vmatprep.subr.mxu0 0.0
        %2316 = vmatpush1.msra.mxu0 0.0
        %2317 = vmatprep.subr.mxu0 0.0
        %2318 = vmatpush1.msra.mxu0 0.0
        %2319 = vmatprep.mubr.f32.mxu0 0.0
        %2320 = vmatmul.mubr.f32.gmra.mrb[0].mxu0 %v2232
        %v2321 = vpop.f32.mrb[0].mxu0
        %v2322 = vadd.f32 0.0, %v2321
        %v2323 = vpop.f32.mrb[0].mxu0
        %2324 = vmatprep.mubr.f32.mxu0 0.0
        %2325 = vmatmul.mubr.f32.gmra.mrb[0].mxu0 %v2235
        %v2326 = vpop.f32.mrb[0].mxu0
        %v2327 = vadd.f32 0.0, %v2326
        %v2328 = vpop.f32.mrb[0].mxu0
        %2329 = vmatprep.mubr.f32.mxu0 0.0
        %2330 = vmatmul.mubr.f32.gmra.mrb[0].mxu0 %v2238
        %v2331 = vpop.f32.mrb[0].mxu0
        %v2332 = vadd.f32 0.0, %v2331
        %v2333 = vpop.f32.mrb[0].mxu0
        %2334 = vmatprep.mubr.f32.mxu0 0.0
        %2335 = vmatmul.mubr.f32.gmra.mrb[0].mxu0 %v2241
        %v2336 = vpop.f32.mrb[0].mxu0
        %v2337 = vadd.f32 0.0, %v2336
        %v2338 = vpop.f32.mrb[0].mxu0
        %2339 = vmatprep.mubr.f32.mxu0 0.0
        %2340 = vmatmul.mubr.f32.gmra.mrb[0].mxu0 %v2244
        %v2341 = vpop.f32.mrb[0].mxu0
        %v2342 = vadd.f32 0.0, %v2341
        %v2343 = vpop.f32.mrb[0].mxu0
        %2344 = vmatprep.mubr.f32.mxu0 0.0
        %2345 = vmatmul.mubr.f32.gmra.mrb[0].mxu0 %v2247
        %v2346 = vpop.f32.mrb[0].mxu0
        %v2347 = vadd.f32 0.0, %v2346
        %v2348 = vpop.f32.mrb[0].mxu0
        %2349 = vmatprep.mubr.f32.mxu0 0.0
        %2350 = vmatmul.mubr.f32.gmra.mrb[0].mxu0 %v2250
        %v2351 = vpop.f32.mrb[0].mxu0
        %v2352 = vadd.f32 0.0, %v2351
        %v2353 = vpop.f32.mrb[0].mxu0
        %2354 = vmatprep.mubr.f32.mxu0 0.0
        %2355 = vmatmul.mubr.f32.gmra.mrb[0].mxu0 %v2253
        %v2356 = vpop.f32.mrb[0].mxu0
        %v2357 = vadd.f32 0.0, %v2356
        %v2358 = vpop.f32.mrb[0].mxu0
        %2359 = vdwg.mxu0
        %v2360 = vld [vmem:[%s9] sm:$0x1]
        %v2362 = vlaneseq
        %v2363 = vshrl.u32 %v2362, 7
        %v2364 = vsub.s32 0, %v2363
        %v2365 = vrot.slane %v2360, %v2364
        %v2367 = vmul.f32 %v2322, %v2365
        %v2368 = vmul.f32 %v2327, %v2365
        %v2369 = vmul.f32 %v2332, %v2365
        %v2370 = vmul.f32 %v2337, %v2365
        %v2371 = vmul.f32 %v2342, %v2365
        %v2372 = vmul.f32 %v2347, %v2365
        %v2373 = vmul.f32 %v2352, %v2365
        %v2374 = vmul.f32 %v2357, %v2365
        %v2375 = vld [vmem:[%s10] sm:$0x1]
        %v2377 = vlaneseq
        %v2378 = vshrl.u32 %v2377, 7
        %v2379 = vsub.s32 0, %v2378
        %v2380 = vrot.slane %v2375, %v2379
        %v2382 = vadd.f32 %v2367, %v2380
        %v2383 = vadd.f32 %v2368, %v2380
        %v2384 = vadd.f32 %v2369, %v2380
        %v2385 = vadd.f32 %v2370, %v2380
        %v2386 = vadd.f32 %v2371, %v2380
        %v2387 = vadd.f32 %v2372, %v2380
        %v2388 = vadd.f32 %v2373, %v2380
        %v2389 = vadd.f32 %v2374, %v2380
        %v2390 = vmax.f32 %v2382, 0.0
        %v2391 = vmax.f32 %v2383, 0.0
        %v2392 = vmax.f32 %v2384, 0.0
        %v2393 = vmax.f32 %v2385, 0.0
        %v2394 = vmax.f32 %v2386, 0.0
        %v2395 = vmax.f32 %v2387, 0.0
        %v2396 = vmax.f32 %v2388, 0.0
        %v2397 = vmax.f32 %v2389, 0.0
        %v2398 = vld [vmem:[%s6] sm:$0xff]
        %v2400 = vsel %vm626, %v2390, 0
        %v2403 = vsel %vm626, %v2391, 0
        %v2406 = vsel %vm626, %v2392, 0
        %v2409 = vsel %vm626, %v2393, 0
        %v2412 = vsel %vm626, %v2394, 0
        %v2415 = vsel %vm626, %v2395, 0
        %v2418 = vsel %vm626, %v2396, 0
        %v2421 = vsel %vm626, %v2397, 0
        %2423 = vmatprep.subr.mxu0 0.0
        %2424 = vmatpush1.msra.mxu0 %v2398
        %2425 = vmatprep.subr.mxu0 0.0
        %2426 = vmatpush1.msra.mxu0 0.0
        %2427 = vmatprep.subr.mxu0 0.0
        %2428 = vmatpush1.msra.mxu0 0.0
        %2429 = vmatprep.subr.mxu0 0.0
        %2430 = vmatpush1.msra.mxu0 0.0
        %2431 = vmatprep.subr.mxu0 0.0
        %2432 = vmatpush1.msra.mxu0 0.0
        %2433 = vmatprep.subr.mxu0 0.0
        %2434 = vmatpush1.msra.mxu0 0.0
        %2435 = vmatprep.subr.mxu0 0.0
        %2436 = vmatpush1.msra.mxu0 0.0
        %2437 = vmatprep.subr.mxu0 0.0
        %2438 = vmatpush1.msra.mxu0 0.0
        %2439 = vmatprep.subr.mxu0 0.0
        %2440 = vmatpush1.msra.mxu0 0.0
        %2441 = vmatprep.subr.mxu0 0.0
        %2442 = vmatpush1.msra.mxu0 0.0
        %2443 = vmatprep.subr.mxu0 0.0
        %2444 = vmatpush1.msra.mxu0 0.0
        %2445 = vmatprep.subr.mxu0 0.0
        %2446 = vmatpush1.msra.mxu0 0.0
        %2447 = vmatprep.subr.mxu0 0.0
        %2448 = vmatpush1.msra.mxu0 0.0
        %2449 = vmatprep.subr.mxu0 0.0
        %2450 = vmatpush1.msra.mxu0 0.0
        %2451 = vmatprep.subr.mxu0 0.0
        %2452 = vmatpush1.msra.mxu0 0.0
        %2453 = vmatprep.subr.mxu0 0.0
        %2454 = vmatpush1.msra.mxu0 0.0
        %2455 = vmatprep.subr.mxu0 0.0
        %2456 = vmatpush1.msra.mxu0 0.0
        %2457 = vmatprep.subr.mxu0 0.0
        %2458 = vmatpush1.msra.mxu0 0.0
        %2459 = vmatprep.subr.mxu0 0.0
        %2460 = vmatpush1.msra.mxu0 0.0
        %2461 = vmatprep.subr.mxu0 0.0
        %2462 = vmatpush1.msra.mxu0 0.0
        %2463 = vmatprep.subr.mxu0 0.0
        %2464 = vmatpush1.msra.mxu0 0.0
        %2465 = vmatprep.subr.mxu0 0.0
        %2466 = vmatpush1.msra.mxu0 0.0
        %2467 = vmatprep.subr.mxu0 0.0
        %2468 = vmatpush1.msra.mxu0 0.0
        %2469 = vmatprep.subr.mxu0 0.0
        %2470 = vmatpush1.msra.mxu0 0.0
        %2471 = vmatprep.subr.mxu0 0.0
        %2472 = vmatpush1.msra.mxu0 0.0
        %2473 = vmatprep.subr.mxu0 0.0
        %2474 = vmatpush1.msra.mxu0 0.0
        %2475 = vmatprep.subr.mxu0 0.0
        %2476 = vmatpush1.msra.mxu0 0.0
        %2477 = vmatprep.subr.mxu0 0.0
        %2478 = vmatpush1.msra.mxu0 0.0
        %2479 = vmatprep.subr.mxu0 0.0
        %2480 = vmatpush1.msra.mxu0 0.0
        %2481 = vmatprep.subr.mxu0 0.0
        %2482 = vmatpush1.msra.mxu0 0.0
        %2483 = vmatprep.subr.mxu0 0.0
        %2484 = vmatpush1.msra.mxu0 0.0
        %2485 = vmatprep.subr.mxu0 0.0
        %2486 = vmatpush1.msra.mxu0 0.0
        %2487 = vmatprep.mubr.f32.mxu0 0.0
        %2488 = vmatmul.mubr.f32.gmra.mrb[0].mxu0 %v2400
        %v2489 = vpop.f32.mrb[0].mxu0
        %v2490 = vadd.f32 0.0, %v2489
        %v2491 = vpop.f32.mrb[0].mxu0
        %2492 = vmatprep.mubr.f32.mxu0 0.0
        %2493 = vmatmul.mubr.f32.gmra.mrb[0].mxu0 %v2403
        %v2494 = vpop.f32.mrb[0].mxu0
        %v2495 = vadd.f32 0.0, %v2494
        %v2496 = vpop.f32.mrb[0].mxu0
        %2497 = vmatprep.mubr.f32.mxu0 0.0
        %2498 = vmatmul.mubr.f32.gmra.mrb[0].mxu0 %v2406
        %v2499 = vpop.f32.mrb[0].mxu0
        %v2500 = vadd.f32 0.0, %v2499
        %v2501 = vpop.f32.mrb[0].mxu0
        %2502 = vmatprep.mubr.f32.mxu0 0.0
        %2503 = vmatmul.mubr.f32.gmra.mrb[0].mxu0 %v2409
        %v2504 = vpop.f32.mrb[0].mxu0
        %v2505 = vadd.f32 0.0, %v2504
        %v2506 = vpop.f32.mrb[0].mxu0
        %2507 = vmatprep.mubr.f32.mxu0 0.0
        %2508 = vmatmul.mubr.f32.gmra.mrb[0].mxu0 %v2412
        %v2509 = vpop.f32.mrb[0].mxu0
        %v2510 = vadd.f32 0.0, %v2509
        %v2511 = vpop.f32.mrb[0].mxu0
        %2512 = vmatprep.mubr.f32.mxu0 0.0
        %2513 = vmatmul.mubr.f32.gmra.mrb[0].mxu0 %v2415
        %v2514 = vpop.f32.mrb[0].mxu0
        %v2515 = vadd.f32 0.0, %v2514
        %v2516 = vpop.f32.mrb[0].mxu0
        %2517 = vmatprep.mubr.f32.mxu0 0.0
        %2518 = vmatmul.mubr.f32.gmra.mrb[0].mxu0 %v2418
        %v2519 = vpop.f32.mrb[0].mxu0
        %v2520 = vadd.f32 0.0, %v2519
        %v2521 = vpop.f32.mrb[0].mxu0
        %2522 = vmatprep.mubr.f32.mxu0 0.0
        %2523 = vmatmul.mubr.f32.gmra.mrb[0].mxu0 %v2421
        %v2524 = vpop.f32.mrb[0].mxu0
        %v2525 = vadd.f32 0.0, %v2524
        %v2526 = vpop.f32.mrb[0].mxu0
        %2527 = vdwg.mxu0
        %v2528 = vld [vmem:[%s11] sm:$0x1]
        %v2530 = vlaneseq
        %v2531 = vshrl.u32 %v2530, 7
        %v2532 = vsub.s32 0, %v2531
        %v2533 = vrot.slane %v2528, %v2532
        %v2535 = vmul.f32 %v2490, %v2533
        %v2536 = vmul.f32 %v2495, %v2533
        %v2537 = vmul.f32 %v2500, %v2533
        %v2538 = vmul.f32 %v2505, %v2533
        %v2539 = vmul.f32 %v2510, %v2533
        %v2540 = vmul.f32 %v2515, %v2533
        %v2541 = vmul.f32 %v2520, %v2533
        %v2542 = vmul.f32 %v2525, %v2533
        %v2543 = vld [vmem:[%s12] sm:$0x1]
        %v2545 = vlaneseq
        %v2546 = vshrl.u32 %v2545, 7
        %v2547 = vsub.s32 0, %v2546
        %v2548 = vrot.slane %v2543, %v2547
        %v2550 = vadd.f32 %v2535, %v2548
        %v2551 = vadd.f32 %v2536, %v2548
        %v2552 = vadd.f32 %v2537, %v2548
        %v2553 = vadd.f32 %v2538, %v2548
        %v2554 = vadd.f32 %v2539, %v2548
        %v2555 = vadd.f32 %v2540, %v2548
        %v2556 = vadd.f32 %v2541, %v2548
        %v2557 = vadd.f32 %v2542, %v2548
        %v2558 = vmax.f32 %v2550, 0.0
        %v2559 = vmax.f32 %v2551, 0.0
        %v2560 = vmax.f32 %v2552, 0.0
        %v2561 = vmax.f32 %v2553, 0.0
        %v2562 = vmax.f32 %v2554, 0.0
        %v2563 = vmax.f32 %v2555, 0.0
        %v2564 = vmax.f32 %v2556, 0.0
        %v2565 = vmax.f32 %v2557, 0.0
        %s2566 = scalar_lea.vmem %s544, 128 [#allocation8]
        %v2567 = vld [vmem:[%s2566] sm:$0xff]
        %v2568 = vld [vmem:[%s2566 + $0x8] sm:$0xff]
        %v2569 = vld [vmem:[%s2566 + $0x10] sm:$0xff]
        %v2570 = vld [vmem:[%s2566 + $0x18] sm:$0xff]
        %v2571 = vld [vmem:[%s2566 + $0x20] sm:$0xff]
        %v2572 = vld [vmem:[%s2566 + $0x28] sm:$0xff]
        %v2573 = vld [vmem:[%s2566 + $0x30] sm:$0xff]
        %v2574 = vld [vmem:[%s2566 + $0x38] sm:$0xff]
        %v2575 = vadd.f32 %v2558, %v2567
        %v2576 = vadd.f32 %v2559, %v2568
        %v2577 = vadd.f32 %v2560, %v2569
        %v2578 = vadd.f32 %v2561, %v2570
        %v2579 = vadd.f32 %v2562, %v2571
        %v2580 = vadd.f32 %v2563, %v2572
        %v2581 = vadd.f32 %v2564, %v2573
        %v2582 = vadd.f32 %v2565, %v2574
        %s2583 = scalar_lea.vmem %s605, 128 [#allocation9]
        %2584 = vst.msk [vmem:[%s2583] sm:$0xff] %vm1174, %v2575
        %2585 = vst.msk [vmem:[%s2583 + $0x8] sm:$0xff] %vm1174, %v2576
        %2586 = vst.msk [vmem:[%s2583 + $0x10] sm:$0xff] %vm1174, %v2577
        %2587 = vst.msk [vmem:[%s2583 + $0x18] sm:$0xff] %vm1174, %v2578
        %2588 = vst.msk [vmem:[%s2583 + $0x20] sm:$0xff] %vm1174, %v2579
        %2589 = vst.msk [vmem:[%s2583 + $0x28] sm:$0xff] %vm1174, %v2580
        %2590 = vst.msk [vmem:[%s2583 + $0x30] sm:$0xff] %vm1174, %v2581
        %2591 = vst.msk [vmem:[%s2583 + $0x38] sm:$0xff] %vm1174, %v2582
        %v2592 = vld [vmem:[%s2073 + $0x2] sm:$0xff]
        %v2593 = vld [vmem:[%s2073 + $0x12] sm:$0xff]
        %v2594 = vld [vmem:[%s2073 + $0x22] sm:$0xff]
        %v2595 = vld [vmem:[%s2073 + $0x32] sm:$0xff]
        %v2596 = vld [vmem:[%s2073 + $0x42] sm:$0xff]
        %v2597 = vld [vmem:[%s2073 + $0x52] sm:$0xff]
        %v2598 = vld [vmem:[%s2073 + $0x62] sm:$0xff]
        %v2599 = vld [vmem:[%s2073 + $0x72] sm:$0xff]
        %v2600 = vld [vmem:[%s2073 + $0x1] sm:$0xff]
        %v2601 = vld [vmem:[%s2073 + $0x11] sm:$0xff]
        %v2602 = vld [vmem:[%s2073 + $0x21] sm:$0xff]
        %v2603 = vld [vmem:[%s2073 + $0x31] sm:$0xff]
        %v2604 = vld [vmem:[%s2073 + $0x41] sm:$0xff]
        %v2605 = vld [vmem:[%s2073 + $0x51] sm:$0xff]
        %v2606 = vld [vmem:[%s2073 + $0x61] sm:$0xff]
        %v2607 = vld [vmem:[%s2073 + $0x71] sm:$0xff]
        %v2608 = vld [vmem:[%s828 + $0x2] sm:$0xff]
        %v2609 = vld [vmem:[%s828 + $0x12] sm:$0xff]
        %v2610 = vld [vmem:[%s828 + $0x22] sm:$0xff]
        %v2611 = vld [vmem:[%s828 + $0x32] sm:$0xff]
        %v2612 = vld [vmem:[%s828 + $0x42] sm:$0xff]
        %v2613 = vld [vmem:[%s828 + $0x52] sm:$0xff]
        %v2614 = vld [vmem:[%s828 + $0x62] sm:$0xff]
        %v2615 = vld [vmem:[%s828 + $0x72] sm:$0xff]
        %v2616 = vld [vmem:[%s828 + $0x1] sm:$0xff]
        %v2617 = vld [vmem:[%s828 + $0x11] sm:$0xff]
        %v2618 = vld [vmem:[%s828 + $0x21] sm:$0xff]
        %v2619 = vld [vmem:[%s828 + $0x31] sm:$0xff]
        %v2620 = vld [vmem:[%s828 + $0x41] sm:$0xff]
        %v2621 = vld [vmem:[%s828 + $0x51] sm:$0xff]
        %v2622 = vld [vmem:[%s828 + $0x61] sm:$0xff]
        %v2623 = vld [vmem:[%s828 + $0x71] sm:$0xff]
        %2632 = vrot.lane.b32.xlu0 %v2600, 8
        %v2633 = vpop.permute.xlu0 %2632
        %2634 = vrot.lane.b32.xlu0 %v2601, 8
        %v2635 = vpop.permute.xlu0 %2634
        %2636 = vrot.lane.b32.xlu0 %v2602, 8
        %v2637 = vpop.permute.xlu0 %2636
        %2638 = vrot.lane.b32.xlu0 %v2603, 8
        %v2639 = vpop.permute.xlu0 %2638
        %2640 = vrot.lane.b32.xlu0 %v2604, 8
        %v2641 = vpop.permute.xlu0 %2640
        %2642 = vrot.lane.b32.xlu0 %v2605, 8
        %v2643 = vpop.permute.xlu0 %2642
        %2644 = vrot.lane.b32.xlu0 %v2606, 8
        %v2645 = vpop.permute.xlu0 %2644
        %2646 = vrot.lane.b32.xlu0 %v2607, 8
        %v2647 = vpop.permute.xlu0 %2646
        %2664 = vrot.lane.b32.xlu0 %v2608, 16
        %v2665 = vpop.permute.xlu0 %2664
        %2666 = vrot.lane.b32.xlu0 %v2609, 16
        %v2667 = vpop.permute.xlu0 %2666
        %2668 = vrot.lane.b32.xlu0 %v2610, 16
        %v2669 = vpop.permute.xlu0 %2668
        %2670 = vrot.lane.b32.xlu0 %v2611, 16
        %v2671 = vpop.permute.xlu0 %2670
        %2672 = vrot.lane.b32.xlu0 %v2612, 16
        %v2673 = vpop.permute.xlu0 %2672
        %2674 = vrot.lane.b32.xlu0 %v2613, 16
        %v2675 = vpop.permute.xlu0 %2674
        %2676 = vrot.lane.b32.xlu0 %v2614, 16
        %v2677 = vpop.permute.xlu0 %2676
        %2678 = vrot.lane.b32.xlu0 %v2615, 16
        %v2679 = vpop.permute.xlu0 %2678
        %2696 = vrot.lane.b32.xlu0 %v2616, 24
        %v2697 = vpop.permute.xlu0 %2696
        %2698 = vrot.lane.b32.xlu0 %v2617, 24
        %v2699 = vpop.permute.xlu0 %2698
        %2700 = vrot.lane.b32.xlu0 %v2618, 24
        %v2701 = vpop.permute.xlu0 %2700
        %2702 = vrot.lane.b32.xlu0 %v2619, 24
        %v2703 = vpop.permute.xlu0 %2702
        %2704 = vrot.lane.b32.xlu0 %v2620, 24
        %v2705 = vpop.permute.xlu0 %2704
        %2706 = vrot.lane.b32.xlu0 %v2621, 24
        %v2707 = vpop.permute.xlu0 %2706
        %2708 = vrot.lane.b32.xlu0 %v2622, 24
        %v2709 = vpop.permute.xlu0 %2708
        %2710 = vrot.lane.b32.xlu0 %v2623, 24
        %v2711 = vpop.permute.xlu0 %2710
        %v2720 = vsel %vm626, %v2592, %v2633
        %v2721 = vsel %vm626, %v2593, %v2635
        %v2722 = vsel %vm626, %v2594, %v2637
        %v2723 = vsel %vm626, %v2595, %v2639
        %v2724 = vsel %vm626, %v2596, %v2641
        %v2725 = vsel %vm626, %v2597, %v2643
        %v2726 = vsel %vm626, %v2598, %v2645
        %v2727 = vsel %vm626, %v2599, %v2647
        %v2728 = vsel %vm1174, %v2720, %v2665
        %v2729 = vsel %vm1174, %v2721, %v2667
        %v2730 = vsel %vm1174, %v2722, %v2669
        %v2731 = vsel %vm1174, %v2723, %v2671
        %v2732 = vsel %vm1174, %v2724, %v2673
        %v2733 = vsel %vm1174, %v2725, %v2675
        %v2734 = vsel %vm1174, %v2726, %v2677
        %v2735 = vsel %vm1174, %v2727, %v2679
        %v2736 = vsel %vm1183, %v2728, %v2697
        %v2737 = vsel %vm1183, %v2729, %v2699
        %v2738 = vsel %vm1183, %v2730, %v2701
        %v2739 = vsel %vm1183, %v2731, %v2703
        %v2740 = vsel %vm1183, %v2732, %v2705
        %v2741 = vsel %vm1183, %v2733, %v2707
        %v2742 = vsel %vm1183, %v2734, %v2709
        %v2743 = vsel %vm1183, %v2735, %v2711
        %s2744 = scalar_lea.vmem %s5, 96
        %v2745 = vld [vmem:[%s2744] sm:$0xff]
        %v2746 = vld [vmem:[%s2744 + $0x8] sm:$0xff]
        %v2747 = vld [vmem:[%s2744 + $0x10] sm:$0xff]
        %v2748 = vld [vmem:[%s2744 + $0x18] sm:$0xff]
        %v2750 = vsel %vm660, %v2736, 0
        %v2753 = vsel %vm660, %v2737, 0
        %v2756 = vsel %vm660, %v2738, 0
        %v2759 = vsel %vm660, %v2739, 0
        %v2762 = vsel %vm660, %v2740, 0
        %v2765 = vsel %vm660, %v2741, 0
        %v2768 = vsel %vm660, %v2742, 0
        %v2771 = vsel %vm660, %v2743, 0
        %2773 = vmatprep.subr.mxu0 0.0
        %2774 = vmatpush1.msra.mxu0 %v2745
        %2775 = vmatprep.subr.mxu0 0.0
        %2776 = vmatpush1.msra.mxu0 %v2746
        %2777 = vmatprep.subr.mxu0 0.0
        %2778 = vmatpush1.msra.mxu0 %v2747
        %2779 = vmatprep.subr.mxu0 0.0
        %2780 = vmatpush1.msra.mxu0 %v2748
        %2781 = vmatprep.subr.mxu0 0.0
        %2782 = vmatpush1.msra.mxu0 0.0
        %2783 = vmatprep.subr.mxu0 0.0
        %2784 = vmatpush1.msra.mxu0 0.0
        %2785 = vmatprep.subr.mxu0 0.0
        %2786 = vmatpush1.msra.mxu0 0.0
        %2787 = vmatprep.subr.mxu0 0.0
        %2788 = vmatpush1.msra.mxu0 0.0
        %2789 = vmatprep.subr.mxu0 0.0
        %2790 = vmatpush1.msra.mxu0 0.0
        %2791 = vmatprep.subr.mxu0 0.0
        %2792 = vmatpush1.msra.mxu0 0.0
        %2793 = vmatprep.subr.mxu0 0.0
        %2794 = vmatpush1.msra.mxu0 0.0
        %2795 = vmatprep.subr.mxu0 0.0
        %2796 = vmatpush1.msra.mxu0 0.0
        %2797 = vmatprep.subr.mxu0 0.0
        %2798 = vmatpush1.msra.mxu0 0.0
        %2799 = vmatprep.subr.mxu0 0.0
        %2800 = vmatpush1.msra.mxu0 0.0
        %2801 = vmatprep.subr.mxu0 0.0
        %2802 = vmatpush1.msra.mxu0 0.0
        %2803 = vmatprep.subr.mxu0 0.0
        %2804 = vmatpush1.msra.mxu0 0.0
        %2805 = vmatprep.subr.mxu0 0.0
        %2806 = vmatpush1.msra.mxu0 0.0
        %2807 = vmatprep.subr.mxu0 0.0
        %2808 = vmatpush1.msra.mxu0 0.0
        %2809 = vmatprep.subr.mxu0 0.0
        %2810 = vmatpush1.msra.mxu0 0.0
        %2811 = vmatprep.subr.mxu0 0.0
        %2812 = vmatpush1.msra.mxu0 0.0
        %2813 = vmatprep.subr.mxu0 0.0
        %2814 = vmatpush1.msra.mxu0 0.0
        %2815 = vmatprep.subr.mxu0 0.0
        %2816 = vmatpush1.msra.mxu0 0.0
        %2817 = vmatprep.subr.mxu0 0.0
        %2818 = vmatpush1.msra.mxu0 0.0
        %2819 = vmatprep.subr.mxu0 0.0
        %2820 = vmatpush1.msra.mxu0 0.0
        %2821 = vmatprep.subr.mxu0 0.0
        %2822 = vmatpush1.msra.mxu0 0.0
        %2823 = vmatprep.subr.mxu0 0.0
        %2824 = vmatpush1.msra.mxu0 0.0
        %2825 = vmatprep.subr.mxu0 0.0
        %2826 = vmatpush1.msra.mxu0 0.0
        %2827 = vmatprep.subr.mxu0 0.0
        %2828 = vmatpush1.msra.mxu0 0.0
        %2829 = vmatprep.subr.mxu0 0.0
        %2830 = vmatpush1.msra.mxu0 0.0
        %2831 = vmatprep.subr.mxu0 0.0
        %2832 = vmatpush1.msra.mxu0 0.0
        %2833 = vmatprep.subr.mxu0 0.0
        %2834 = vmatpush1.msra.mxu0 0.0
        %2835 = vmatprep.subr.mxu0 0.0
        %2836 = vmatpush1.msra.mxu0 0.0
        %2837 = vmatprep.mubr.f32.mxu0 0.0
        %2838 = vmatmul.mubr.f32.gmra.mrb[0].mxu0 %v2750
        %v2839 = vpop.f32.mrb[0].mxu0
        %v2840 = vadd.f32 0.0, %v2839
        %v2841 = vpop.f32.mrb[0].mxu0
        %2842 = vmatprep.mubr.f32.mxu0 0.0
        %2843 = vmatmul.mubr.f32.gmra.mrb[0].mxu0 %v2753
        %v2844 = vpop.f32.mrb[0].mxu0
        %v2845 = vadd.f32 0.0, %v2844
        %v2846 = vpop.f32.mrb[0].mxu0
        %2847 = vmatprep.mubr.f32.mxu0 0.0
        %2848 = vmatmul.mubr.f32.gmra.mrb[0].mxu0 %v2756
        %v2849 = vpop.f32.mrb[0].mxu0
        %v2850 = vadd.f32 0.0, %v2849
        %v2851 = vpop.f32.mrb[0].mxu0
        %2852 = vmatprep.mubr.f32.mxu0 0.0
        %2853 = vmatmul.mubr.f32.gmra.mrb[0].mxu0 %v2759
        %v2854 = vpop.f32.mrb[0].mxu0
        %v2855 = vadd.f32 0.0, %v2854
        %v2856 = vpop.f32.mrb[0].mxu0
        %2857 = vmatprep.mubr.f32.mxu0 0.0
        %2858 = vmatmul.mubr.f32.gmra.mrb[0].mxu0 %v2762
        %v2859 = vpop.f32.mrb[0].mxu0
        %v2860 = vadd.f32 0.0, %v2859
        %v2861 = vpop.f32.mrb[0].mxu0
        %2862 = vmatprep.mubr.f32.mxu0 0.0
        %2863 = vmatmul.mubr.f32.gmra.mrb[0].mxu0 %v2765
        %v2864 = vpop.f32.mrb[0].mxu0
        %v2865 = vadd.f32 0.0, %v2864
        %v2866 = vpop.f32.mrb[0].mxu0
        %2867 = vmatprep.mubr.f32.mxu0 0.0
        %2868 = vmatmul.mubr.f32.gmra.mrb[0].mxu0 %v2768
        %v2869 = vpop.f32.mrb[0].mxu0
        %v2870 = vadd.f32 0.0, %v2869
        %v2871 = vpop.f32.mrb[0].mxu0
        %2872 = vmatprep.mubr.f32.mxu0 0.0
        %2873 = vmatmul.mubr.f32.gmra.mrb[0].mxu0 %v2771
        %v2874 = vpop.f32.mrb[0].mxu0
        %v2875 = vadd.f32 0.0, %v2874
        %v2876 = vpop.f32.mrb[0].mxu0
        %2877 = vdwg.mxu0
        %v2878 = vld [vmem:[%s9] sm:$0x1]
        %v2880 = vlaneseq
        %v2881 = vshrl.u32 %v2880, 7
        %v2882 = vsub.s32 0, %v2881
        %v2883 = vrot.slane %v2878, %v2882
        %v2885 = vmul.f32 %v2840, %v2883
        %v2886 = vmul.f32 %v2845, %v2883
        %v2887 = vmul.f32 %v2850, %v2883
        %v2888 = vmul.f32 %v2855, %v2883
        %v2889 = vmul.f32 %v2860, %v2883
        %v2890 = vmul.f32 %v2865, %v2883
        %v2891 = vmul.f32 %v2870, %v2883
        %v2892 = vmul.f32 %v2875, %v2883
        %v2893 = vld [vmem:[%s10] sm:$0x1]
        %v2895 = vlaneseq
        %v2896 = vshrl.u32 %v2895, 7
        %v2897 = vsub.s32 0, %v2896
        %v2898 = vrot.slane %v2893, %v2897
        %v2900 = vadd.f32 %v2885, %v2898
        %v2901 = vadd.f32 %v2886, %v2898
        %v2902 = vadd.f32 %v2887, %v2898
        %v2903 = vadd.f32 %v2888, %v2898
        %v2904 = vadd.f32 %v2889, %v2898
        %v2905 = vadd.f32 %v2890, %v2898
        %v2906 = vadd.f32 %v2891, %v2898
        %v2907 = vadd.f32 %v2892, %v2898
        %v2908 = vmax.f32 %v2900, 0.0
        %v2909 = vmax.f32 %v2901, 0.0
        %v2910 = vmax.f32 %v2902, 0.0
        %v2911 = vmax.f32 %v2903, 0.0
        %v2912 = vmax.f32 %v2904, 0.0
        %v2913 = vmax.f32 %v2905, 0.0
        %v2914 = vmax.f32 %v2906, 0.0
        %v2915 = vmax.f32 %v2907, 0.0
        %v2916 = vld [vmem:[%s6] sm:$0xff]
        %v2918 = vsel %vm626, %v2908, 0
        %v2921 = vsel %vm626, %v2909, 0
        %v2924 = vsel %vm626, %v2910, 0
        %v2927 = vsel %vm626, %v2911, 0
        %v2930 = vsel %vm626, %v2912, 0
        %v2933 = vsel %vm626, %v2913, 0
        %v2936 = vsel %vm626, %v2914, 0
        %v2939 = vsel %vm626, %v2915, 0
        %2941 = vmatprep.subr.mxu0 0.0
        %2942 = vmatpush1.msra.mxu0 %v2916
        %2943 = vmatprep.subr.mxu0 0.0
        %2944 = vmatpush1.msra.mxu0 0.0
        %2945 = vmatprep.subr.mxu0 0.0
        %2946 = vmatpush1.msra.mxu0 0.0
        %2947 = vmatprep.subr.mxu0 0.0
        %2948 = vmatpush1.msra.mxu0 0.0
        %2949 = vmatprep.subr.mxu0 0.0
        %2950 = vmatpush1.msra.mxu0 0.0
        %2951 = vmatprep.subr.mxu0 0.0
        %2952 = vmatpush1.msra.mxu0 0.0
        %2953 = vmatprep.subr.mxu0 0.0
        %2954 = vmatpush1.msra.mxu0 0.0
        %2955 = vmatprep.subr.mxu0 0.0
        %2956 = vmatpush1.msra.mxu0 0.0
        %2957 = vmatprep.subr.mxu0 0.0
        %2958 = vmatpush1.msra.mxu0 0.0
        %2959 = vmatprep.subr.mxu0 0.0
        %2960 = vmatpush1.msra.mxu0 0.0
        %2961 = vmatprep.subr.mxu0 0.0
        %2962 = vmatpush1.msra.mxu0 0.0
        %2963 = vmatprep.subr.mxu0 0.0
        %2964 = vmatpush1.msra.mxu0 0.0
        %2965 = vmatprep.subr.mxu0 0.0
        %2966 = vmatpush1.msra.mxu0 0.0
        %2967 = vmatprep.subr.mxu0 0.0
        %2968 = vmatpush1.msra.mxu0 0.0
        %2969 = vmatprep.subr.mxu0 0.0
        %2970 = vmatpush1.msra.mxu0 0.0
        %2971 = vmatprep.subr.mxu0 0.0
        %2972 = vmatpush1.msra.mxu0 0.0
        %2973 = vmatprep.subr.mxu0 0.0
        %2974 = vmatpush1.msra.mxu0 0.0
        %2975 = vmatprep.subr.mxu0 0.0
        %2976 = vmatpush1.msra.mxu0 0.0
        %2977 = vmatprep.subr.mxu0 0.0
        %2978 = vmatpush1.msra.mxu0 0.0
        %2979 = vmatprep.subr.mxu0 0.0
        %2980 = vmatpush1.msra.mxu0 0.0
        %2981 = vmatprep.subr.mxu0 0.0
        %2982 = vmatpush1.msra.mxu0 0.0
        %2983 = vmatprep.subr.mxu0 0.0
        %2984 = vmatpush1.msra.mxu0 0.0
        %2985 = vmatprep.subr.mxu0 0.0
        %2986 = vmatpush1.msra.mxu0 0.0
        %2987 = vmatprep.subr.mxu0 0.0
        %2988 = vmatpush1.msra.mxu0 0.0
        %2989 = vmatprep.subr.mxu0 0.0
        %2990 = vmatpush1.msra.mxu0 0.0
        %2991 = vmatprep.subr.mxu0 0.0
        %2992 = vmatpush1.msra.mxu0 0.0
        %2993 = vmatprep.subr.mxu0 0.0
        %2994 = vmatpush1.msra.mxu0 0.0
        %2995 = vmatprep.subr.mxu0 0.0
        %2996 = vmatpush1.msra.mxu0 0.0
        %2997 = vmatprep.subr.mxu0 0.0
        %2998 = vmatpush1.msra.mxu0 0.0
        %2999 = vmatprep.subr.mxu0 0.0
        %3000 = vmatpush1.msra.mxu0 0.0
        %3001 = vmatprep.subr.mxu0 0.0
        %3002 = vmatpush1.msra.mxu0 0.0
        %3003 = vmatprep.subr.mxu0 0.0
        %3004 = vmatpush1.msra.mxu0 0.0
        %3005 = vmatprep.mubr.f32.mxu0 0.0
        %3006 = vmatmul.mubr.f32.gmra.mrb[0].mxu0 %v2918
        %v3007 = vpop.f32.mrb[0].mxu0
        %v3008 = vadd.f32 0.0, %v3007
        %v3009 = vpop.f32.mrb[0].mxu0
        %3010 = vmatprep.mubr.f32.mxu0 0.0
        %3011 = vmatmul.mubr.f32.gmra.mrb[0].mxu0 %v2921
        %v3012 = vpop.f32.mrb[0].mxu0
        %v3013 = vadd.f32 0.0, %v3012
        %v3014 = vpop.f32.mrb[0].mxu0
        %3015 = vmatprep.mubr.f32.mxu0 0.0
        %3016 = vmatmul.mubr.f32.gmra.mrb[0].mxu0 %v2924
        %v3017 = vpop.f32.mrb[0].mxu0
        %v3018 = vadd.f32 0.0, %v3017
        %v3019 = vpop.f32.mrb[0].mxu0
        %3020 = vmatprep.mubr.f32.mxu0 0.0
        %3021 = vmatmul.mubr.f32.gmra.mrb[0].mxu0 %v2927
        %v3022 = vpop.f32.mrb[0].mxu0
        %v3023 = vadd.f32 0.0, %v3022
        %v3024 = vpop.f32.mrb[0].mxu0
        %3025 = vmatprep.mubr.f32.mxu0 0.0
        %3026 = vmatmul.mubr.f32.gmra.mrb[0].mxu0 %v2930
        %v3027 = vpop.f32.mrb[0].mxu0
        %v3028 = vadd.f32 0.0, %v3027
        %v3029 = vpop.f32.mrb[0].mxu0
        %3030 = vmatprep.mubr.f32.mxu0 0.0
        %3031 = vmatmul.mubr.f32.gmra.mrb[0].mxu0 %v2933
        %v3032 = vpop.f32.mrb[0].mxu0
        %v3033 = vadd.f32 0.0, %v3032
        %v3034 = vpop.f32.mrb[0].mxu0
        %3035 = vmatprep.mubr.f32.mxu0 0.0
        %3036 = vmatmul.mubr.f32.gmra.mrb[0].mxu0 %v2936
        %v3037 = vpop.f32.mrb[0].mxu0
        %v3038 = vadd.f32 0.0, %v3037
        %v3039 = vpop.f32.mrb[0].mxu0
        %3040 = vmatprep.mubr.f32.mxu0 0.0
        %3041 = vmatmul.mubr.f32.gmra.mrb[0].mxu0 %v2939
        %v3042 = vpop.f32.mrb[0].mxu0
        %v3043 = vadd.f32 0.0, %v3042
        %v3044 = vpop.f32.mrb[0].mxu0
        %3045 = vdwg.mxu0
        %v3046 = vld [vmem:[%s11] sm:$0x1]
        %v3048 = vlaneseq
        %v3049 = vshrl.u32 %v3048, 7
        %v3050 = vsub.s32 0, %v3049
        %v3051 = vrot.slane %v3046, %v3050
        %v3053 = vmul.f32 %v3008, %v3051
        %v3054 = vmul.f32 %v3013, %v3051
        %v3055 = vmul.f32 %v3018, %v3051
        %v3056 = vmul.f32 %v3023, %v3051
        %v3057 = vmul.f32 %v3028, %v3051
        %v3058 = vmul.f32 %v3033, %v3051
        %v3059 = vmul.f32 %v3038, %v3051
        %v3060 = vmul.f32 %v3043, %v3051
        %v3061 = vld [vmem:[%s12] sm:$0x1]
        %v3063 = vlaneseq
        %v3064 = vshrl.u32 %v3063, 7
        %v3065 = vsub.s32 0, %v3064
        %v3066 = vrot.slane %v3061, %v3065
        %v3068 = vadd.f32 %v3053, %v3066
        %v3069 = vadd.f32 %v3054, %v3066
        %v3070 = vadd.f32 %v3055, %v3066
        %v3071 = vadd.f32 %v3056, %v3066
        %v3072 = vadd.f32 %v3057, %v3066
        %v3073 = vadd.f32 %v3058, %v3066
        %v3074 = vadd.f32 %v3059, %v3066
        %v3075 = vadd.f32 %v3060, %v3066
        %v3076 = vmax.f32 %v3068, 0.0
        %v3077 = vmax.f32 %v3069, 0.0
        %v3078 = vmax.f32 %v3070, 0.0
        %v3079 = vmax.f32 %v3071, 0.0
        %v3080 = vmax.f32 %v3072, 0.0
        %v3081 = vmax.f32 %v3073, 0.0
        %v3082 = vmax.f32 %v3074, 0.0
        %v3083 = vmax.f32 %v3075, 0.0
        %s3084 = scalar_lea.vmem %s544, 192 [#allocation8]
        %v3085 = vld [vmem:[%s3084] sm:$0xff]
        %v3086 = vld [vmem:[%s3084 + $0x8] sm:$0xff]
        %v3087 = vld [vmem:[%s3084 + $0x10] sm:$0xff]
        %v3088 = vld [vmem:[%s3084 + $0x18] sm:$0xff]
        %v3089 = vld [vmem:[%s3084 + $0x20] sm:$0xff]
        %v3090 = vld [vmem:[%s3084 + $0x28] sm:$0xff]
        %v3091 = vld [vmem:[%s3084 + $0x30] sm:$0xff]
        %v3092 = vld [vmem:[%s3084 + $0x38] sm:$0xff]
        %v3093 = vadd.f32 %v3076, %v3085
        %v3094 = vadd.f32 %v3077, %v3086
        %v3095 = vadd.f32 %v3078, %v3087
        %v3096 = vadd.f32 %v3079, %v3088
        %v3097 = vadd.f32 %v3080, %v3089
        %v3098 = vadd.f32 %v3081, %v3090
        %v3099 = vadd.f32 %v3082, %v3091
        %v3100 = vadd.f32 %v3083, %v3092
        %s3101 = scalar_lea.vmem %s605, 192 [#allocation9]
        %3102 = vst.msk [vmem:[%s3101] sm:$0xff] %vm1174, %v3093
        %3103 = vst.msk [vmem:[%s3101 + $0x8] sm:$0xff] %vm1174, %v3094
        %3104 = vst.msk [vmem:[%s3101 + $0x10] sm:$0xff] %vm1174, %v3095
        %3105 = vst.msk [vmem:[%s3101 + $0x18] sm:$0xff] %vm1174, %v3096
        %3106 = vst.msk [vmem:[%s3101 + $0x20] sm:$0xff] %vm1174, %v3097
        %3107 = vst.msk [vmem:[%s3101 + $0x28] sm:$0xff] %vm1174, %v3098
        %3108 = vst.msk [vmem:[%s3101 + $0x30] sm:$0xff] %vm1174, %v3099
        %3109 = vst.msk [vmem:[%s3101 + $0x38] sm:$0xff] %vm1174, %v3100
        %s3110 = sand.u32 %s372, 1
        %s3111 = scalar_lea.sflag [#allocation5], %s3110
        %s3112 = sand.u32 %s372, 1
        %s3113 = smul.addr %s3112, 256
        %s3114 = scalar_lea.vmem [#allocation9], %s3113
        // Predicated region
        $region93: #{tpu_custom_call.1} parent=71 // pred_check
          %p3115 = pneg %p382
        $region94: #{tpu_custom_call.1} parent=71 // pred_check_branch
          %3117 = sbr.rel (%p3115) target = $region96
        $region95: #{tpu_custom_call.1} parent=71 // pred_region
          %s3118 = smul.u32 8, %s38
          %s3120 = ssub.s32 4096, 4096
          %3121 = vsyncadd %s3111, %s3120
          %s3122 = smul.addr %s37, 32
          %s3123 = sadd.s32 %s3118, %s3122
          %s3124 = smul.addr %s3123, 128
          %s3125 = scalar_lea.hbm %s13, %s3124
          %s3126 = sshll.u32 %s3114, 4
          %s3127 = int_to_ptr.vmem [resolvable:$true] %s3126
          %3132 = dma.vmem_to_hbm [thread:$0]  %s3127, 4096, %s3125, %s3111, 128, 128, 8
        $region96: #{tpu_custom_call.1} parent=71 // pred_fallthru
          _
      $region72: #{tpu_custom_call.1} parent=5 // pred_fallthru
        _
      %p3133 = scmp.le.s32.totalorder 2, %s28
      // Predicated region
      $region97: #{tpu_custom_call.1} parent=5 // pred_check
        %p3134 = pneg %p3133
      $region98: #{tpu_custom_call.1} parent=5 // pred_check_branch
        %3136 = sbr.rel (%p3134) target = $region100
      $region99: #{tpu_custom_call.1} parent=5 // pred_region
        %s3137 = ssub.s32 %s28, 2
        // Predicated region
        $region101: #{tpu_custom_call.1} parent=99 // pred_check
          %p3138 = pneg %p388
        $region102: #{tpu_custom_call.1} parent=99 // pred_check_branch
          %3140 = sbr.rel (%p3138) target = $region104
        $region103: #{tpu_custom_call.1} parent=99 // pred_region
          %s3141 = sand.u32 %s373, 1
          %s3142 = scalar_lea.sflag [#allocation5], %s3141
          %s3143 = sand.u32 %s373, 1
          %s3144 = smul.addr %s3143, 256
          %s3145 = scalar_lea.vmem [#allocation9], %s3144
          %3146 = dma.done %s3142, 4096
        $region104: #{tpu_custom_call.1} parent=99 // pred_fallthru
          _
      $region100: #{tpu_custom_call.1} parent=5 // pred_fallthru
        _
    $region6: #{tpu_custom_call.1} parent=1 // loop_footer
      %s32 = sadd.s32 1, %s28
    $region7: #{tpu_custom_call.1} parent=1 // loop_footer_branch
      %27 = sbr.rel target = $region3
    $region8: #{tpu_custom_call.1} parent=1 // loop_exit
      _
    %3147 = vsyncpa [#allocation4], 1
    %s3148 = scalar_lea.sflag [#allocation4], 1
    %3149 = vsyncpa %s3148, 1
    %3150 = vsyncpa [#allocation7], 1
    %s3151 = scalar_lea.sflag [#allocation7], 1
    %3152 = vsyncpa %s3151, 1
    %3153 = vsyncpa [#allocation5], 1
    %s3154 = scalar_lea.sflag [#allocation5], 1
    %3155 = vsyncpa %s3154, 1

</llo_original>
